<compile_context>
chip_gen: v7x
topology: tpu7x:2x2x1
jax: 0.10.0
libtpu: 0.0.40
codegen_flags: <defaults>
</compile_context>

<pallas_src>
import functools

import jax
import jax.numpy as jnp
from jax.experimental import pallas as pl
from jax.experimental.pallas import tpu as pltpu


def _conv_block_kernel(x_ref, w0_ref, b0_ref, w1_ref, b1_ref, o_ref, *,
                       n_batch, height, width, c_in, c_out):
    """Fused ConvBlock forward on the whole (small) batch.

    x_ref : (N, C_in, H*W)        NCHW with spatial flattened (free reshape)
    w0_ref: (3, 3, C_out, C_in)   per-tap weights, already (C_out, C_in)
    b0_ref: (C_out, 1)
    w1_ref: (3, 3, C_out, C_out)
    b1_ref: (C_out, 1)
    o_ref : (N, C_out, (H-4)*W)   channels-on-sublanes, flat-spatial on lanes
    """
    N, H, W = n_batch, height, width
    P = H * W                         # flat length of one image (W-wide layout)
    Ho1, Wo1 = H - 2, W - 2           # conv0 valid output extent
    Ho2, Wo2 = H - 4, W - 4           # conv1 valid output extent
    # Number of flat columns that contain every valid output position.
    L0 = (N - 1) * P + (Ho1 - 1) * W + Wo1
    L1 = (N - 1) * P + (Ho2 - 1) * W + Wo2
    valid1 = (Ho2 - 1) * W + Wo2      # per-image columns the wrapper consumes

    # Fold the batch into the lane dim: (C_in, N*H*W).  Each piece is a whole
    # number of vregs wide (H*W multiple of 128 here), so the concat is cheap.
    x_all = jnp.concatenate([x_ref[n] for n in range(N)], axis=-1)

    # ---- conv0 + ReLU: 9 accumulated whole-slab MXU matmuls ---------------
    acc0 = jnp.zeros((c_out, L0), jnp.float32)
    for kh in range(3):
        for kw in range(3):
            s = kh * W + kw                                # static tap shift
            acc0 = acc0 + jnp.dot(w0_ref[kh, kw], x_all[:, s:s + L0],
                                  preferred_element_type=jnp.float32)
    y0 = jnp.maximum(acc0 + b0_ref[...], 0.0)              # (C_out, L0)

    # ---- conv1 + ReLU on the W-wide intermediate (never leaves VMEM) ------
    acc1 = jnp.zeros((c_out, L1), jnp.float32)
    for kh in range(3):
        for kw in range(3):
            s = kh * W + kw
            acc1 = acc1 + jnp.dot(w1_ref[kh, kw], y0[:, s:s + L1],
                                  preferred_element_type=jnp.float32)
    y1 = jnp.maximum(acc1 + b1_ref[...], 0.0)              # (C_out, L1)

    # ---- lane-dense store, already NCHW-ordered ---------------------------
    # Zero-fill once so the few trailing pad columns are deterministic.
    o_ref[...] = jnp.zeros(o_ref.shape, o_ref.dtype)
    for n in range(N):
        o_ref[n, :, 0:valid1] = (
            y1[:, n * P:n * P + valid1].astype(o_ref.dtype))


def conv_block_forward_pallas(x_nchw, w0, b0, w1, b1):
    """ConvBlock.forward: relu(conv1(relu(conv0(x)))). NCHW in, NCHW out."""
    N, C_in, H, W = x_nchw.shape
    C_out = w0.shape[-1]
    assert H >= 5 and W >= 5, "need two valid 3x3 convs"
    Ho2, Wo2 = H - 4, W - 4
    out_w = Ho2 * W

    x_flat = x_nchw.reshape(N, C_in, H * W)          # free reshape (NCHW order)
    w0_t = jnp.transpose(w0, (0, 1, 3, 2))           # (3,3,C_out,C_in), tiny
    w1_t = jnp.transpose(w1, (0, 1, 3, 2))           # (3,3,C_out,C_out), tiny
    b0_c = b0.reshape(C_out, 1)
    b1_c = b1.reshape(C_out, 1)

    kernel = functools.partial(
        _conv_block_kernel, n_batch=N, height=H, width=W,
        c_in=C_in, c_out=C_out)

    out_wide = pl.pallas_call(
        kernel,
        out_shape=jax.ShapeDtypeStruct((N, C_out, out_w), x_nchw.dtype),
        grid=(1,),  # whole (tiny) batch in one step; all blocks VMEM-resident
        in_specs=[
            pl.BlockSpec((N, C_in, H * W), lambda i: (0, 0, 0)),
            pl.BlockSpec((3, 3, C_out, C_in), lambda i: (0, 0, 0, 0)),
            pl.BlockSpec((C_out, 1), lambda i: (0, 0)),
            pl.BlockSpec((3, 3, C_out, C_out), lambda i: (0, 0, 0, 0)),
            pl.BlockSpec((C_out, 1), lambda i: (0, 0)),
        ],
        out_specs=pl.BlockSpec((N, C_out, out_w), lambda i: (0, 0, 0)),
        compiler_params=pltpu.CompilerParams(
            dimension_semantics=("arbitrary",)),
    )(x_flat, w0_t, b0_c, w1_t, b1_c)

    # (N, C_out, Ho2, W): drop the W-4..W-1 "wrap" columns -> NCHW output.
    return out_wide.reshape(N, C_out, Ho2, W)[:, :, :, :Wo2]


def init_conv_block_params(key, in_channels, out_channels):
    """Deterministic PyTorch-style (kaiming-uniform-ish) init."""
    k0, k1, k2, k3 = jax.random.split(key, 4)

    def conv_init(kw_key, kb_key, cin, cout):
        fan_in = cin * 3 * 3
        bound = 1.0 / jnp.sqrt(fan_in)
        # weight stored as (KH, KW, Cin, Cout)
        w = jax.random.uniform(
            kw_key, (3, 3, cin, cout), jnp.float32, -bound, bound)
        b = jax.random.uniform(kb_key, (cout,), jnp.float32, -bound, bound)
        return w, b

    w0, b0 = conv_init(k0, k1, in_channels, out_channels)
    w1, b1 = conv_init(k2, k3, out_channels, out_channels)
    return {"w0": w0, "b0": b0, "w1": w1, "b1": b1}


@jax.jit
def conv_block_forward(x_nchw, params):
    return conv_block_forward_pallas(
        x_nchw, params["w0"], params["b0"], params["w1"], params["b1"])


def _reference_forward(x_nchw, params):
    """Pure-JAX reference (lax conv) for a correctness check."""
    def conv(x, w, b):
        w_oihw = jnp.transpose(w, (3, 2, 0, 1))      # (KH,KW,Cin,Cout) -> OIHW
        y = jax.lax.conv_general_dilated(
            x, w_oihw, window_strides=(1, 1), padding="VALID",
            dimension_numbers=("NCHW", "OIHW", "NCHW"))
        return jax.nn.relu(y + b[None, :, None, None])

    x = conv(x_nchw, params["w0"], params["b0"])
    x = conv(x, params["w1"], params["b1"])
    return x


if __name__ == "__main__":
    key = jax.random.PRNGKey(0)
    k_param, k_x = jax.random.split(key)

    in_channels, out_channels = 4, 8
    params = init_conv_block_params(k_param, in_channels, out_channels)

    # Input matches PyTorch NCHW convention: (batch=2, C=4, H=16, W=16)
    x = jax.random.normal(k_x, (2, in_channels, 16, 16), jnp.float32)

    out = conv_block_forward(x, params)
    out = jax.block_until_ready(out)

    assert out.shape == (2, out_channels, 12, 12), out.shape

    ref = _reference_forward(x, params)
    assert jnp.allclose(out, ref, rtol=1e-4, atol=1e-4), (
        float(jnp.max(jnp.abs(out - ref))))

    print("KERNEL_OK")
</pallas_src>

<mosaic_0001>
module attributes {stable_mosaic.version = 11 : i64} {
  func.func @_conv_block_kernel(%arg0: i32, %arg1: memref<2x4x256xf32, #tpu.memory_space<vmem>>, %arg2: memref<3x3x8x4xf32, #tpu.memory_space<vmem>>, %arg3: memref<8x1xf32, #tpu.memory_space<vmem>>, %arg4: memref<3x3x8x8xf32, #tpu.memory_space<vmem>>, %arg5: memref<8x1xf32, #tpu.memory_space<vmem>>, %arg6: memref<2x8x192xf32, #tpu.memory_space<vmem>>) attributes {dimension_semantics = [#tpu.dimension_semantics<arbitrary>], iteration_bounds = array<i64: 1>, scalar_prefetch = 0 : i64, scratch_operands = 0 : i64, tpu.core_type = #tpu.core_type<tc>, window_params = [{pipeline_mode = #tpu.pipeline_mode<synchronous>, transform_indices = @transform_0, window_bounds = array<i64: 2, 4, 256>}, {pipeline_mode = #tpu.pipeline_mode<synchronous>, transform_indices = @transform_1, window_bounds = array<i64: 3, 3, 8, 4>}, {pipeline_mode = #tpu.pipeline_mode<synchronous>, transform_indices = @transform_2, window_bounds = array<i64: 8, 1>}, {pipeline_mode = #tpu.pipeline_mode<synchronous>, transform_indices = @transform_3, window_bounds = array<i64: 3, 3, 8, 8>}, {pipeline_mode = #tpu.pipeline_mode<synchronous>, transform_indices = @transform_4, window_bounds = array<i64: 8, 1>}, {pipeline_mode = #tpu.pipeline_mode<synchronous>, transform_indices = @transform_5, window_bounds = array<i64: 2, 8, 192>}]} {
    %c0 = arith.constant 0 : index
    %c0_0 = arith.constant 0 : index
    %c0_1 = arith.constant 0 : index
    %0 = vector.load %arg1[%c0, %c0_0, %c0_1] : memref<2x4x256xf32, #tpu.memory_space<vmem>>, vector<1x4x256xf32>
    %1 = vector.shape_cast %0 : vector<1x4x256xf32> to vector<4x256xf32>
    %c1 = arith.constant 1 : index
    %c0_2 = arith.constant 0 : index
    %c0_3 = arith.constant 0 : index
    %2 = vector.load %arg1[%c1, %c0_2, %c0_3] : memref<2x4x256xf32, #tpu.memory_space<vmem>>, vector<1x4x256xf32>
    %3 = vector.shape_cast %2 : vector<1x4x256xf32> to vector<4x256xf32>
    %4 = tpu.concatenate %1, %3 in 1 : vector<4x256xf32>, vector<4x256xf32> -> vector<4x512xf32>
    %cst = arith.constant 0.000000e+00 : f32
    %5 = vector.broadcast %cst : f32 to vector<8x478xf32>
    %c0_4 = arith.constant 0 : index
    %c0_5 = arith.constant 0 : index
    %c0_6 = arith.constant 0 : index
    %c0_7 = arith.constant 0 : index
    %6 = vector.load %arg2[%c0_4, %c0_5, %c0_6, %c0_7] : memref<3x3x8x4xf32, #tpu.memory_space<vmem>>, vector<1x1x8x4xf32>
    %7 = vector.shape_cast %6 : vector<1x1x8x4xf32> to vector<8x4xf32>
    %8 = vector.extract_strided_slice %4 {offsets = [0, 0], sizes = [4, 478], strides = [1, 1]} : vector<4x512xf32> to vector<4x478xf32>
    %cst_8 = arith.constant dense<0.000000e+00> : vector<8x478xf32>
    %9 = tpu.matmul %7, %8, %cst_8 {dimension_numbers = #tpu.dot_dimension_numbers<[1], [0], [0], [1], [0, 0, 1, 1], [], []>} : vector<8x4xf32>, vector<4x478xf32>, vector<8x478xf32> -> vector<8x478xf32>
    %10 = arith.addf %5, %9 : vector<8x478xf32>
    %c0_9 = arith.constant 0 : index
    %c1_10 = arith.constant 1 : index
    %c0_11 = arith.constant 0 : index
    %c0_12 = arith.constant 0 : index
    %11 = vector.load %arg2[%c0_9, %c1_10, %c0_11, %c0_12] : memref<3x3x8x4xf32, #tpu.memory_space<vmem>>, vector<1x1x8x4xf32>
    %12 = vector.shape_cast %11 : vector<1x1x8x4xf32> to vector<8x4xf32>
    %13 = vector.extract_strided_slice %4 {offsets = [0, 1], sizes = [4, 478], strides = [1, 1]} : vector<4x512xf32> to vector<4x478xf32>
    %cst_13 = arith.constant dense<0.000000e+00> : vector<8x478xf32>
    %14 = tpu.matmul %12, %13, %cst_13 {dimension_numbers = #tpu.dot_dimension_numbers<[1], [0], [0], [1], [0, 0, 1, 1], [], []>} : vector<8x4xf32>, vector<4x478xf32>, vector<8x478xf32> -> vector<8x478xf32>
    %15 = arith.addf %10, %14 : vector<8x478xf32>
    %c0_14 = arith.constant 0 : index
    %c2 = arith.constant 2 : index
    %c0_15 = arith.constant 0 : index
    %c0_16 = arith.constant 0 : index
    %16 = vector.load %arg2[%c0_14, %c2, %c0_15, %c0_16] : memref<3x3x8x4xf32, #tpu.memory_space<vmem>>, vector<1x1x8x4xf32>
    %17 = vector.shape_cast %16 : vector<1x1x8x4xf32> to vector<8x4xf32>
    %18 = vector.extract_strided_slice %4 {offsets = [0, 2], sizes = [4, 478], strides = [1, 1]} : vector<4x512xf32> to vector<4x478xf32>
    %cst_17 = arith.constant dense<0.000000e+00> : vector<8x478xf32>
    %19 = tpu.matmul %17, %18, %cst_17 {dimension_numbers = #tpu.dot_dimension_numbers<[1], [0], [0], [1], [0, 0, 1, 1], [], []>} : vector<8x4xf32>, vector<4x478xf32>, vector<8x478xf32> -> vector<8x478xf32>
    %20 = arith.addf %15, %19 : vector<8x478xf32>
    %c1_18 = arith.constant 1 : index
    %c0_19 = arith.constant 0 : index
    %c0_20 = arith.constant 0 : index
    %c0_21 = arith.constant 0 : index
    %21 = vector.load %arg2[%c1_18, %c0_19, %c0_20, %c0_21] : memref<3x3x8x4xf32, #tpu.memory_space<vmem>>, vector<1x1x8x4xf32>
    %22 = vector.shape_cast %21 : vector<1x1x8x4xf32> to vector<8x4xf32>
    %23 = vector.extract_strided_slice %4 {offsets = [0, 16], sizes = [4, 478], strides = [1, 1]} : vector<4x512xf32> to vector<4x478xf32>
    %cst_22 = arith.constant dense<0.000000e+00> : vector<8x478xf32>
    %24 = tpu.matmul %22, %23, %cst_22 {dimension_numbers = #tpu.dot_dimension_numbers<[1], [0], [0], [1], [0, 0, 1, 1], [], []>} : vector<8x4xf32>, vector<4x478xf32>, vector<8x478xf32> -> vector<8x478xf32>
    %25 = arith.addf %20, %24 : vector<8x478xf32>
    %c1_23 = arith.constant 1 : index
    %c1_24 = arith.constant 1 : index
    %c0_25 = arith.constant 0 : index
    %c0_26 = arith.constant 0 : index
    %26 = vector.load %arg2[%c1_23, %c1_24, %c0_25, %c0_26] : memref<3x3x8x4xf32, #tpu.memory_space<vmem>>, vector<1x1x8x4xf32>
    %27 = vector.shape_cast %26 : vector<1x1x8x4xf32> to vector<8x4xf32>
    %28 = vector.extract_strided_slice %4 {offsets = [0, 17], sizes = [4, 478], strides = [1, 1]} : vector<4x512xf32> to vector<4x478xf32>
    %cst_27 = arith.constant dense<0.000000e+00> : vector<8x478xf32>
    %29 = tpu.matmul %27, %28, %cst_27 {dimension_numbers = #tpu.dot_dimension_numbers<[1], [0], [0], [1], [0, 0, 1, 1], [], []>} : vector<8x4xf32>, vector<4x478xf32>, vector<8x478xf32> -> vector<8x478xf32>
    %30 = arith.addf %25, %29 : vector<8x478xf32>
    %c1_28 = arith.constant 1 : index
    %c2_29 = arith.constant 2 : index
    %c0_30 = arith.constant 0 : index
    %c0_31 = arith.constant 0 : index
    %31 = vector.load %arg2[%c1_28, %c2_29, %c0_30, %c0_31] : memref<3x3x8x4xf32, #tpu.memory_space<vmem>>, vector<1x1x8x4xf32>
    %32 = vector.shape_cast %31 : vector<1x1x8x4xf32> to vector<8x4xf32>
    %33 = vector.extract_strided_slice %4 {offsets = [0, 18], sizes = [4, 478], strides = [1, 1]} : vector<4x512xf32> to vector<4x478xf32>
    %cst_32 = arith.constant dense<0.000000e+00> : vector<8x478xf32>
    %34 = tpu.matmul %32, %33, %cst_32 {dimension_numbers = #tpu.dot_dimension_numbers<[1], [0], [0], [1], [0, 0, 1, 1], [], []>} : vector<8x4xf32>, vector<4x478xf32>, vector<8x478xf32> -> vector<8x478xf32>
    %35 = arith.addf %30, %34 : vector<8x478xf32>
    %c2_33 = arith.constant 2 : index
    %c0_34 = arith.constant 0 : index
    %c0_35 = arith.constant 0 : index
    %c0_36 = arith.constant 0 : index
    %36 = vector.load %arg2[%c2_33, %c0_34, %c0_35, %c0_36] : memref<3x3x8x4xf32, #tpu.memory_space<vmem>>, vector<1x1x8x4xf32>
    %37 = vector.shape_cast %36 : vector<1x1x8x4xf32> to vector<8x4xf32>
    %38 = vector.extract_strided_slice %4 {offsets = [0, 32], sizes = [4, 478], strides = [1, 1]} : vector<4x512xf32> to vector<4x478xf32>
    %cst_37 = arith.constant dense<0.000000e+00> : vector<8x478xf32>
    %39 = tpu.matmul %37, %38, %cst_37 {dimension_numbers = #tpu.dot_dimension_numbers<[1], [0], [0], [1], [0, 0, 1, 1], [], []>} : vector<8x4xf32>, vector<4x478xf32>, vector<8x478xf32> -> vector<8x478xf32>
    %40 = arith.addf %35, %39 : vector<8x478xf32>
    %c2_38 = arith.constant 2 : index
    %c1_39 = arith.constant 1 : index
    %c0_40 = arith.constant 0 : index
    %c0_41 = arith.constant 0 : index
    %41 = vector.load %arg2[%c2_38, %c1_39, %c0_40, %c0_41] : memref<3x3x8x4xf32, #tpu.memory_space<vmem>>, vector<1x1x8x4xf32>
    %42 = vector.shape_cast %41 : vector<1x1x8x4xf32> to vector<8x4xf32>
    %43 = vector.extract_strided_slice %4 {offsets = [0, 33], sizes = [4, 478], strides = [1, 1]} : vector<4x512xf32> to vector<4x478xf32>
    %cst_42 = arith.constant dense<0.000000e+00> : vector<8x478xf32>
    %44 = tpu.matmul %42, %43, %cst_42 {dimension_numbers = #tpu.dot_dimension_numbers<[1], [0], [0], [1], [0, 0, 1, 1], [], []>} : vector<8x4xf32>, vector<4x478xf32>, vector<8x478xf32> -> vector<8x478xf32>
    %45 = arith.addf %40, %44 : vector<8x478xf32>
    %c2_43 = arith.constant 2 : index
    %c2_44 = arith.constant 2 : index
    %c0_45 = arith.constant 0 : index
    %c0_46 = arith.constant 0 : index
    %46 = vector.load %arg2[%c2_43, %c2_44, %c0_45, %c0_46] : memref<3x3x8x4xf32, #tpu.memory_space<vmem>>, vector<1x1x8x4xf32>
    %47 = vector.shape_cast %46 : vector<1x1x8x4xf32> to vector<8x4xf32>
    %48 = vector.extract_strided_slice %4 {offsets = [0, 34], sizes = [4, 478], strides = [1, 1]} : vector<4x512xf32> to vector<4x478xf32>
    %cst_47 = arith.constant dense<0.000000e+00> : vector<8x478xf32>
    %49 = tpu.matmul %47, %48, %cst_47 {dimension_numbers = #tpu.dot_dimension_numbers<[1], [0], [0], [1], [0, 0, 1, 1], [], []>} : vector<8x4xf32>, vector<4x478xf32>, vector<8x478xf32> -> vector<8x478xf32>
    %50 = arith.addf %45, %49 : vector<8x478xf32>
    %c0_48 = arith.constant 0 : index
    %c0_49 = arith.constant 0 : index
    %51 = vector.load %arg3[%c0_48, %c0_49] : memref<8x1xf32, #tpu.memory_space<vmem>>, vector<8x1xf32>
    %52 = vector.broadcast %51 : vector<8x1xf32> to vector<8x478xf32>
    %53 = arith.addf %50, %52 : vector<8x478xf32>
    %cst_50 = arith.constant 0.000000e+00 : f32
    %54 = vector.broadcast %cst_50 : f32 to vector<8x478xf32>
    %55 = arith.maximumf %53, %54 : vector<8x478xf32>
    %cst_51 = arith.constant 0.000000e+00 : f32
    %56 = vector.broadcast %cst_51 : f32 to vector<8x444xf32>
    %c0_52 = arith.constant 0 : index
    %c0_53 = arith.constant 0 : index
    %c0_54 = arith.constant 0 : index
    %c0_55 = arith.constant 0 : index
    %57 = vector.load %arg4[%c0_52, %c0_53, %c0_54, %c0_55] : memref<3x3x8x8xf32, #tpu.memory_space<vmem>>, vector<1x1x8x8xf32>
    %58 = vector.shape_cast %57 : vector<1x1x8x8xf32> to vector<8x8xf32>
    %59 = vector.extract_strided_slice %55 {offsets = [0, 0], sizes = [8, 444], strides = [1, 1]} : vector<8x478xf32> to vector<8x444xf32>
    %cst_56 = arith.constant dense<0.000000e+00> : vector<8x444xf32>
    %60 = tpu.matmul %58, %59, %cst_56 {dimension_numbers = #tpu.dot_dimension_numbers<[1], [0], [0], [1], [0, 0, 1, 1], [], []>} : vector<8x8xf32>, vector<8x444xf32>, vector<8x444xf32> -> vector<8x444xf32>
    %61 = arith.addf %56, %60 : vector<8x444xf32>
    %c0_57 = arith.constant 0 : index
    %c1_58 = arith.constant 1 : index
    %c0_59 = arith.constant 0 : index
    %c0_60 = arith.constant 0 : index
    %62 = vector.load %arg4[%c0_57, %c1_58, %c0_59, %c0_60] : memref<3x3x8x8xf32, #tpu.memory_space<vmem>>, vector<1x1x8x8xf32>
    %63 = vector.shape_cast %62 : vector<1x1x8x8xf32> to vector<8x8xf32>
    %64 = vector.extract_strided_slice %55 {offsets = [0, 1], sizes = [8, 444], strides = [1, 1]} : vector<8x478xf32> to vector<8x444xf32>
    %cst_61 = arith.constant dense<0.000000e+00> : vector<8x444xf32>
    %65 = tpu.matmul %63, %64, %cst_61 {dimension_numbers = #tpu.dot_dimension_numbers<[1], [0], [0], [1], [0, 0, 1, 1], [], []>} : vector<8x8xf32>, vector<8x444xf32>, vector<8x444xf32> -> vector<8x444xf32>
    %66 = arith.addf %61, %65 : vector<8x444xf32>
    %c0_62 = arith.constant 0 : index
    %c2_63 = arith.constant 2 : index
    %c0_64 = arith.constant 0 : index
    %c0_65 = arith.constant 0 : index
    %67 = vector.load %arg4[%c0_62, %c2_63, %c0_64, %c0_65] : memref<3x3x8x8xf32, #tpu.memory_space<vmem>>, vector<1x1x8x8xf32>
    %68 = vector.shape_cast %67 : vector<1x1x8x8xf32> to vector<8x8xf32>
    %69 = vector.extract_strided_slice %55 {offsets = [0, 2], sizes = [8, 444], strides = [1, 1]} : vector<8x478xf32> to vector<8x444xf32>
    %cst_66 = arith.constant dense<0.000000e+00> : vector<8x444xf32>
    %70 = tpu.matmul %68, %69, %cst_66 {dimension_numbers = #tpu.dot_dimension_numbers<[1], [0], [0], [1], [0, 0, 1, 1], [], []>} : vector<8x8xf32>, vector<8x444xf32>, vector<8x444xf32> -> vector<8x444xf32>
    %71 = arith.addf %66, %70 : vector<8x444xf32>
    %c1_67 = arith.constant 1 : index
    %c0_68 = arith.constant 0 : index
    %c0_69 = arith.constant 0 : index
    %c0_70 = arith.constant 0 : index
    %72 = vector.load %arg4[%c1_67, %c0_68, %c0_69, %c0_70] : memref<3x3x8x8xf32, #tpu.memory_space<vmem>>, vector<1x1x8x8xf32>
    %73 = vector.shape_cast %72 : vector<1x1x8x8xf32> to vector<8x8xf32>
    %74 = vector.extract_strided_slice %55 {offsets = [0, 16], sizes = [8, 444], strides = [1, 1]} : vector<8x478xf32> to vector<8x444xf32>
    %cst_71 = arith.constant dense<0.000000e+00> : vector<8x444xf32>
    %75 = tpu.matmul %73, %74, %cst_71 {dimension_numbers = #tpu.dot_dimension_numbers<[1], [0], [0], [1], [0, 0, 1, 1], [], []>} : vector<8x8xf32>, vector<8x444xf32>, vector<8x444xf32> -> vector<8x444xf32>
    %76 = arith.addf %71, %75 : vector<8x444xf32>
    %c1_72 = arith.constant 1 : index
    %c1_73 = arith.constant 1 : index
    %c0_74 = arith.constant 0 : index
    %c0_75 = arith.constant 0 : index
    %77 = vector.load %arg4[%c1_72, %c1_73, %c0_74, %c0_75] : memref<3x3x8x8xf32, #tpu.memory_space<vmem>>, vector<1x1x8x8xf32>
    %78 = vector.shape_cast %77 : vector<1x1x8x8xf32> to vector<8x8xf32>
    %79 = vector.extract_strided_slice %55 {offsets = [0, 17], sizes = [8, 444], strides = [1, 1]} : vector<8x478xf32> to vector<8x444xf32>
    %cst_76 = arith.constant dense<0.000000e+00> : vector<8x444xf32>
    %80 = tpu.matmul %78, %79, %cst_76 {dimension_numbers = #tpu.dot_dimension_numbers<[1], [0], [0], [1], [0, 0, 1, 1], [], []>} : vector<8x8xf32>, vector<8x444xf32>, vector<8x444xf32> -> vector<8x444xf32>
    %81 = arith.addf %76, %80 : vector<8x444xf32>
    %c1_77 = arith.constant 1 : index
    %c2_78 = arith.constant 2 : index
    %c0_79 = arith.constant 0 : index
    %c0_80 = arith.constant 0 : index
    %82 = vector.load %arg4[%c1_77, %c2_78, %c0_79, %c0_80] : memref<3x3x8x8xf32, #tpu.memory_space<vmem>>, vector<1x1x8x8xf32>
    %83 = vector.shape_cast %82 : vector<1x1x8x8xf32> to vector<8x8xf32>
    %84 = vector.extract_strided_slice %55 {offsets = [0, 18], sizes = [8, 444], strides = [1, 1]} : vector<8x478xf32> to vector<8x444xf32>
    %cst_81 = arith.constant dense<0.000000e+00> : vector<8x444xf32>
    %85 = tpu.matmul %83, %84, %cst_81 {dimension_numbers = #tpu.dot_dimension_numbers<[1], [0], [0], [1], [0, 0, 1, 1], [], []>} : vector<8x8xf32>, vector<8x444xf32>, vector<8x444xf32> -> vector<8x444xf32>
    %86 = arith.addf %81, %85 : vector<8x444xf32>
    %c2_82 = arith.constant 2 : index
    %c0_83 = arith.constant 0 : index
    %c0_84 = arith.constant 0 : index
    %c0_85 = arith.constant 0 : index
    %87 = vector.load %arg4[%c2_82, %c0_83, %c0_84, %c0_85] : memref<3x3x8x8xf32, #tpu.memory_space<vmem>>, vector<1x1x8x8xf32>
    %88 = vector.shape_cast %87 : vector<1x1x8x8xf32> to vector<8x8xf32>
    %89 = vector.extract_strided_slice %55 {offsets = [0, 32], sizes = [8, 444], strides = [1, 1]} : vector<8x478xf32> to vector<8x444xf32>
    %cst_86 = arith.constant dense<0.000000e+00> : vector<8x444xf32>
    %90 = tpu.matmul %88, %89, %cst_86 {dimension_numbers = #tpu.dot_dimension_numbers<[1], [0], [0], [1], [0, 0, 1, 1], [], []>} : vector<8x8xf32>, vector<8x444xf32>, vector<8x444xf32> -> vector<8x444xf32>
    %91 = arith.addf %86, %90 : vector<8x444xf32>
    %c2_87 = arith.constant 2 : index
    %c1_88 = arith.constant 1 : index
    %c0_89 = arith.constant 0 : index
    %c0_90 = arith.constant 0 : index
    %92 = vector.load %arg4[%c2_87, %c1_88, %c0_89, %c0_90] : memref<3x3x8x8xf32, #tpu.memory_space<vmem>>, vector<1x1x8x8xf32>
    %93 = vector.shape_cast %92 : vector<1x1x8x8xf32> to vector<8x8xf32>
    %94 = vector.extract_strided_slice %55 {offsets = [0, 33], sizes = [8, 444], strides = [1, 1]} : vector<8x478xf32> to vector<8x444xf32>
    %cst_91 = arith.constant dense<0.000000e+00> : vector<8x444xf32>
    %95 = tpu.matmul %93, %94, %cst_91 {dimension_numbers = #tpu.dot_dimension_numbers<[1], [0], [0], [1], [0, 0, 1, 1], [], []>} : vector<8x8xf32>, vector<8x444xf32>, vector<8x444xf32> -> vector<8x444xf32>
    %96 = arith.addf %91, %95 : vector<8x444xf32>
    %c2_92 = arith.constant 2 : index
    %c2_93 = arith.constant 2 : index
    %c0_94 = arith.constant 0 : index
    %c0_95 = arith.constant 0 : index
    %97 = vector.load %arg4[%c2_92, %c2_93, %c0_94, %c0_95] : memref<3x3x8x8xf32, #tpu.memory_space<vmem>>, vector<1x1x8x8xf32>
    %98 = vector.shape_cast %97 : vector<1x1x8x8xf32> to vector<8x8xf32>
    %99 = vector.extract_strided_slice %55 {offsets = [0, 34], sizes = [8, 444], strides = [1, 1]} : vector<8x478xf32> to vector<8x444xf32>
    %cst_96 = arith.constant dense<0.000000e+00> : vector<8x444xf32>
    %100 = tpu.matmul %98, %99, %cst_96 {dimension_numbers = #tpu.dot_dimension_numbers<[1], [0], [0], [1], [0, 0, 1, 1], [], []>} : vector<8x8xf32>, vector<8x444xf32>, vector<8x444xf32> -> vector<8x444xf32>
    %101 = arith.addf %96, %100 : vector<8x444xf32>
    %c0_97 = arith.constant 0 : index
    %c0_98 = arith.constant 0 : index
    %102 = vector.load %arg5[%c0_97, %c0_98] : memref<8x1xf32, #tpu.memory_space<vmem>>, vector<8x1xf32>
    %103 = vector.broadcast %102 : vector<8x1xf32> to vector<8x444xf32>
    %104 = arith.addf %101, %103 : vector<8x444xf32>
    %cst_99 = arith.constant 0.000000e+00 : f32
    %105 = vector.broadcast %cst_99 : f32 to vector<8x444xf32>
    %106 = arith.maximumf %104, %105 : vector<8x444xf32>
    %cst_100 = arith.constant 0.000000e+00 : f32
    %107 = vector.broadcast %cst_100 : f32 to vector<2x8x192xf32>
    %c0_101 = arith.constant 0 : index
    %c0_102 = arith.constant 0 : index
    %c0_103 = arith.constant 0 : index
    %108 = vector.load %arg6[%c0_101, %c0_102, %c0_103] : memref<2x8x192xf32, #tpu.memory_space<vmem>>, vector<2x8x192xf32>
    tpu.vector_store %arg6[%c0_101, %c0_102, %c0_103], %107 {strides = array<i32>} : memref<2x8x192xf32, #tpu.memory_space<vmem>>, vector<2x8x192xf32>,
    %109 = vector.extract_strided_slice %106 {offsets = [0, 0], sizes = [8, 188], strides = [1, 1]} : vector<8x444xf32> to vector<8x188xf32>
    %c0_104 = arith.constant 0 : index
    %c0_105 = arith.constant 0 : index
    %c0_106 = arith.constant 0 : index
    %110 = vector.load %arg6[%c0_104, %c0_105, %c0_106] : memref<2x8x192xf32, #tpu.memory_space<vmem>>, vector<1x8x188xf32>
    %111 = vector.shape_cast %110 : vector<1x8x188xf32> to vector<8x188xf32>
    %112 = vector.shape_cast %109 : vector<8x188xf32> to vector<1x8x188xf32>
    tpu.vector_store %arg6[%c0_104, %c0_105, %c0_106], %112 {strides = array<i32>} : memref<2x8x192xf32, #tpu.memory_space<vmem>>, vector<1x8x188xf32>,
    %113 = vector.extract_strided_slice %106 {offsets = [0, 256], sizes = [8, 188], strides = [1, 1]} : vector<8x444xf32> to vector<8x188xf32>
    %c1_107 = arith.constant 1 : index
    %c0_108 = arith.constant 0 : index
    %c0_109 = arith.constant 0 : index
    %114 = vector.load %arg6[%c1_107, %c0_108, %c0_109] : memref<2x8x192xf32, #tpu.memory_space<vmem>>, vector<1x8x188xf32>
    %115 = vector.shape_cast %114 : vector<1x8x188xf32> to vector<8x188xf32>
    %116 = vector.shape_cast %113 : vector<8x188xf32> to vector<1x8x188xf32>
    tpu.vector_store %arg6[%c1_107, %c0_108, %c0_109], %116 {strides = array<i32>} : memref<2x8x192xf32, #tpu.memory_space<vmem>>, vector<1x8x188xf32>,
    return
  }
  func.func @transform_0(%arg0: i32) -> (i32, i32, i32) {
    %c0_i32 = arith.constant 0 : i32
    %c0_i32_0 = arith.constant 0 : i32
    %c0_i32_1 = arith.constant 0 : i32
    %c0_i32_2 = arith.constant 0 : i32
    return %c0_i32, %c0_i32_0, %c0_i32_1 : i32, i32, i32
  }
  func.func @transform_1(%arg0: i32) -> (i32, i32, i32, i32) {
    %c0_i32 = arith.constant 0 : i32
    %c0_i32_0 = arith.constant 0 : i32
    %c0_i32_1 = arith.constant 0 : i32
    %c0_i32_2 = arith.constant 0 : i32
    %c0_i32_3 = arith.constant 0 : i32
    return %c0_i32, %c0_i32_0, %c0_i32_1, %c0_i32_2 : i32, i32, i32, i32
  }
  func.func @transform_2(%arg0: i32) -> (i32, i32) {
    %c0_i32 = arith.constant 0 : i32
    %c0_i32_0 = arith.constant 0 : i32
    %c0_i32_1 = arith.constant 0 : i32
    return %c0_i32, %c0_i32_0 : i32, i32
  }
  func.func @transform_3(%arg0: i32) -> (i32, i32, i32, i32) {
    %c0_i32 = arith.constant 0 : i32
    %c0_i32_0 = arith.constant 0 : i32
    %c0_i32_1 = arith.constant 0 : i32
    %c0_i32_2 = arith.constant 0 : i32
    %c0_i32_3 = arith.constant 0 : i32
    return %c0_i32, %c0_i32_0, %c0_i32_1, %c0_i32_2 : i32, i32, i32, i32
  }
  func.func @transform_4(%arg0: i32) -> (i32, i32) {
    %c0_i32 = arith.constant 0 : i32
    %c0_i32_0 = arith.constant 0 : i32
    %c0_i32_1 = arith.constant 0 : i32
    return %c0_i32, %c0_i32_0 : i32, i32
  }
  func.func @transform_5(%arg0: i32) -> (i32, i32, i32) {
    %c0_i32 = arith.constant 0 : i32
    %c0_i32_0 = arith.constant 0 : i32
    %c0_i32_1 = arith.constant 0 : i32
    %c0_i32_2 = arith.constant 0 : i32
    return %c0_i32, %c0_i32_0, %c0_i32_1 : i32, i32, i32
  }
}

</mosaic_0001>

<llo_original>
// kernel: conv_block_forward.1
$region0: #{conv_block_forward.1}
  #allocation0 [shape = 'u32[]', space=smem, size = 0x4, offset = 0x4, fixed_abs, tag = 'smem constant byte address 0x4 - core index']
  #allocation1 [shape = 'u32[144,128]{1,0:T(1,128)}', space=vmem, size = 0x12000, scoped, tag = 'internal scratch']
  %s0 = inlined_call_operand.vmem [shape: f32[2,4,256], index: 0, kind: input, shape index: {}]
  %s1 = inlined_call_operand.vmem [shape: f32[3,3,8,4], index: 1, kind: input, shape index: {}]
  %s2 = inlined_call_operand.vmem [shape: f32[8,1], index: 2, kind: input, shape index: {}]
  %s3 = inlined_call_operand.vmem [shape: f32[3,3,8,8], index: 3, kind: input, shape index: {}]
  %s4 = inlined_call_operand.vmem [shape: f32[8,1], index: 4, kind: input, shape index: {}]
  %s5 = inlined_call_operand.vmem [shape: f32[2,8,192], index: 5, kind: output, shape index: {}]
  %s6 = sld [smem:[#allocation0]]
  $region30: #{conv_block_forward.1} parent=0
    _
  %s8 = ssub.s32 1, %s6
  %s9 = scalar_select 0, %s8, %s6
  // Predicated region
  $region2: #{conv_block_forward.1} parent=0 // pred_check
    _
  $region3: #{conv_block_forward.1} parent=0 // pred_check_branch
    %11 = sbr.rel (0) target = $region5
  $region4: #{conv_block_forward.1} parent=0 // pred_region
    _
  $region5: #{conv_block_forward.1} parent=0 // pred_fallthru
    _
  // Predicated region
  $region6: #{conv_block_forward.1} parent=0 // pred_check
    _
  $region7: #{conv_block_forward.1} parent=0 // pred_check_branch
    %13 = sbr.rel (0) target = $region9
  $region8: #{conv_block_forward.1} parent=0 // pred_region
    _
  $region9: #{conv_block_forward.1} parent=0 // pred_fallthru
    _
  // Predicated region
  $region10: #{conv_block_forward.1} parent=0 // pred_check
    _
  $region11: #{conv_block_forward.1} parent=0 // pred_check_branch
    %15 = sbr.rel (0) target = $region13
  $region12: #{conv_block_forward.1} parent=0 // pred_region
    _
  $region13: #{conv_block_forward.1} parent=0 // pred_fallthru
    _
  // Predicated region
  $region14: #{conv_block_forward.1} parent=0 // pred_check
    _
  $region15: #{conv_block_forward.1} parent=0 // pred_check_branch
    %17 = sbr.rel (0) target = $region17
  $region16: #{conv_block_forward.1} parent=0 // pred_region
    _
  $region17: #{conv_block_forward.1} parent=0 // pred_fallthru
    _
  // Predicated region
  $region18: #{conv_block_forward.1} parent=0 // pred_check
    _
  $region19: #{conv_block_forward.1} parent=0 // pred_check_branch
    %19 = sbr.rel (0) target = $region21
  $region20: #{conv_block_forward.1} parent=0 // pred_region
    _
  $region21: #{conv_block_forward.1} parent=0 // pred_fallthru
    _
  %v20 = vld [vmem:[%s0] sm:$0xff]
  %s21 = scalar_lea.vmem %s0, 8
  %v22 = vld [vmem:[%s21] sm:$0xff]
  %v24 = vcombine.high %v20, %v20
  %v26 = vcombine.high %v22, %v22
  %v27 = vld [vmem:[%s1] sm:$0xff]
  %s28 = scalar_lea.vmem %s1, 8
  %v29 = vld [vmem:[%s28] sm:$0xff]
  %30 = vrot.lane.b32.xlu0 %v20, 127
  %v31 = vpop.permute.xlu0 %30
  %32 = vrot.lane.b32.xlu0 %v24, 127
  %v33 = vpop.permute.xlu0 %32
  %34 = vrot.lane.b32.xlu0 %v22, 127
  %v35 = vpop.permute.xlu0 %34
  %36 = vrot.lane.b32.xlu0 %v26, 127
  %v37 = vpop.permute.xlu0 %36
  %vm38 = vcmask 1039360
  %v39 = vsel %vm38, %v31, %v33
  %v40 = vsel %vm38, %v33, %v35
  %v41 = vsel %vm38, %v35, %v37
  %vm42 = vcmask 31744
  %v44 = vsel %vm42, %v29, 0
  %vm46 = vcmask 1043456
  %v47 = vsel %vm46, %v39, 0
  %v49 = vsel %vm46, %v40, 0
  %v51 = vsel %vm46, %v41, 0
  %v53 = vsel %vm46, %v37, 0
  %55 = vmatprep.subr.mxu0 %v49
  %56 = vmatpush1.msra.mxu0 %v47
  %57 = vmatprep.subr.mxu0 0.0
  %58 = vmatpush1.msra.mxu0 0.0
  %59 = vmatprep.subr.mxu0 0.0
  %60 = vmatpush1.msra.mxu0 0.0
  %61 = vmatprep.subr.mxu0 0.0
  %62 = vmatpush1.msra.mxu0 0.0
  %63 = vmatprep.subr.mxu0 0.0
  %64 = vmatpush1.msra.mxu0 0.0
  %65 = vmatprep.subr.mxu0 0.0
  %66 = vmatpush1.msra.mxu0 0.0
  %67 = vmatprep.subr.mxu0 0.0
  %68 = vmatpush1.msra.mxu0 0.0
  %69 = vmatprep.subr.mxu0 0.0
  %70 = vmatpush1.msra.mxu0 0.0
  %71 = vmatprep.subr.mxu0 0.0
  %72 = vmatpush1.msra.mxu0 0.0
  %73 = vmatprep.subr.mxu0 0.0
  %74 = vmatpush1.msra.mxu0 0.0
  %75 = vmatprep.subr.mxu0 0.0
  %76 = vmatpush1.msra.mxu0 0.0
  %77 = vmatprep.subr.mxu0 0.0
  %78 = vmatpush1.msra.mxu0 0.0
  %79 = vmatprep.subr.mxu0 0.0
  %80 = vmatpush1.msra.mxu0 0.0
  %81 = vmatprep.subr.mxu0 0.0
  %82 = vmatpush1.msra.mxu0 0.0
  %83 = vmatprep.subr.mxu0 0.0
  %84 = vmatpush1.msra.mxu0 0.0
  %85 = vmatprep.subr.mxu0 0.0
  %86 = vmatpush1.msra.mxu0 0.0
  %87 = vmatprep.subr.mxu0 0.0
  %88 = vmatpush1.msra.mxu0 0.0
  %89 = vmatprep.subr.mxu0 0.0
  %90 = vmatpush1.msra.mxu0 0.0
  %91 = vmatprep.subr.mxu0 0.0
  %92 = vmatpush1.msra.mxu0 0.0
  %93 = vmatprep.subr.mxu0 0.0
  %94 = vmatpush1.msra.mxu0 0.0
  %95 = vmatprep.subr.mxu0 0.0
  %96 = vmatpush1.msra.mxu0 0.0
  %97 = vmatprep.subr.mxu0 0.0
  %98 = vmatpush1.msra.mxu0 0.0
  %99 = vmatprep.subr.mxu0 0.0
  %100 = vmatpush1.msra.mxu0 0.0
  %101 = vmatprep.subr.mxu0 0.0
  %102 = vmatpush1.msra.mxu0 0.0
  %103 = vmatprep.subr.mxu0 0.0
  %104 = vmatpush1.msra.mxu0 0.0
  %105 = vmatprep.subr.mxu0 0.0
  %106 = vmatpush1.msra.mxu0 0.0
  %107 = vmatprep.subr.mxu0 0.0
  %108 = vmatpush1.msra.mxu0 0.0
  %109 = vmatprep.subr.mxu0 0.0
  %110 = vmatpush1.msra.mxu0 0.0
  %111 = vmatprep.subr.mxu0 0.0
  %112 = vmatpush1.msra.mxu0 0.0
  %113 = vmatprep.subr.mxu0 0.0
  %114 = vmatpush1.msra.mxu0 0.0
  %115 = vmatprep.subr.mxu0 0.0
  %116 = vmatpush1.msra.mxu0 0.0
  %117 = vmatprep.subr.mxu0 0.0
  %118 = vmatpush1.msra.mxu0 0.0
  %119 = vmatprep.mubr.f32.mxu0 0.0
  %120 = vmatmul.mubr.f32.gmra.mrb[0].mxu0 %v44
  %v121 = vpop.f32.mrb[0].mxu0
  %v122 = vadd.f32 0.0, %v121
  %v123 = vpop.f32.mrb[0].mxu0
  %v124 = vadd.f32 0.0, %v123
  %125 = vdwg.mxu0
  %126 = vmatprep.subr.mxu0 %v53
  %127 = vmatpush1.msra.mxu0 %v51
  %128 = vmatprep.subr.mxu0 0.0
  %129 = vmatpush1.msra.mxu0 0.0
  %130 = vmatprep.subr.mxu0 0.0
  %131 = vmatpush1.msra.mxu0 0.0
  %132 = vmatprep.subr.mxu0 0.0
  %133 = vmatpush1.msra.mxu0 0.0
  %134 = vmatprep.subr.mxu0 0.0
  %135 = vmatpush1.msra.mxu0 0.0
  %136 = vmatprep.subr.mxu0 0.0
  %137 = vmatpush1.msra.mxu0 0.0
  %138 = vmatprep.subr.mxu0 0.0
  %139 = vmatpush1.msra.mxu0 0.0
  %140 = vmatprep.subr.mxu0 0.0
  %141 = vmatpush1.msra.mxu0 0.0
  %142 = vmatprep.subr.mxu0 0.0
  %143 = vmatpush1.msra.mxu0 0.0
  %144 = vmatprep.subr.mxu0 0.0
  %145 = vmatpush1.msra.mxu0 0.0
  %146 = vmatprep.subr.mxu0 0.0
  %147 = vmatpush1.msra.mxu0 0.0
  %148 = vmatprep.subr.mxu0 0.0
  %149 = vmatpush1.msra.mxu0 0.0
  %150 = vmatprep.subr.mxu0 0.0
  %151 = vmatpush1.msra.mxu0 0.0
  %152 = vmatprep.subr.mxu0 0.0
  %153 = vmatpush1.msra.mxu0 0.0
  %154 = vmatprep.subr.mxu0 0.0
  %155 = vmatpush1.msra.mxu0 0.0
  %156 = vmatprep.subr.mxu0 0.0
  %157 = vmatpush1.msra.mxu0 0.0
  %158 = vmatprep.subr.mxu0 0.0
  %159 = vmatpush1.msra.mxu0 0.0
  %160 = vmatprep.subr.mxu0 0.0
  %161 = vmatpush1.msra.mxu0 0.0
  %162 = vmatprep.subr.mxu0 0.0
  %163 = vmatpush1.msra.mxu0 0.0
  %164 = vmatprep.subr.mxu0 0.0
  %165 = vmatpush1.msra.mxu0 0.0
  %166 = vmatprep.subr.mxu0 0.0
  %167 = vmatpush1.msra.mxu0 0.0
  %168 = vmatprep.subr.mxu0 0.0
  %169 = vmatpush1.msra.mxu0 0.0
  %170 = vmatprep.subr.mxu0 0.0
  %171 = vmatpush1.msra.mxu0 0.0
  %172 = vmatprep.subr.mxu0 0.0
  %173 = vmatpush1.msra.mxu0 0.0
  %174 = vmatprep.subr.mxu0 0.0
  %175 = vmatpush1.msra.mxu0 0.0
  %176 = vmatprep.subr.mxu0 0.0
  %177 = vmatpush1.msra.mxu0 0.0
  %178 = vmatprep.subr.mxu0 0.0
  %179 = vmatpush1.msra.mxu0 0.0
  %180 = vmatprep.subr.mxu0 0.0
  %181 = vmatpush1.msra.mxu0 0.0
  %182 = vmatprep.subr.mxu0 0.0
  %183 = vmatpush1.msra.mxu0 0.0
  %184 = vmatprep.subr.mxu0 0.0
  %185 = vmatpush1.msra.mxu0 0.0
  %186 = vmatprep.subr.mxu0 0.0
  %187 = vmatpush1.msra.mxu0 0.0
  %188 = vmatprep.subr.mxu0 0.0
  %189 = vmatpush1.msra.mxu0 0.0
  %190 = vmatprep.mubr.f32.mxu0 0.0
  %191 = vmatmul.mubr.f32.gmra.mrb[0].mxu0 %v44
  %v192 = vpop.f32.mrb[0].mxu0
  %v193 = vadd.f32 0.0, %v192
  %v194 = vpop.f32.mrb[0].mxu0
  %v195 = vadd.f32 0.0, %v194
  %196 = vdwg.mxu0
  %v198 = vsel %vm42, %v27, 0
  %v200 = vsel %vm46, %v20, 0
  %v202 = vsel %vm46, %v24, 0
  %v204 = vsel %vm46, %v22, 0
  %v206 = vsel %vm46, %v26, 0
  %208 = vmatprep.subr.mxu0 %v202
  %209 = vmatpush1.msra.mxu0 %v200
  %210 = vmatprep.subr.mxu0 0.0
  %211 = vmatpush1.msra.mxu0 0.0
  %212 = vmatprep.subr.mxu0 0.0
  %213 = vmatpush1.msra.mxu0 0.0
  %214 = vmatprep.subr.mxu0 0.0
  %215 = vmatpush1.msra.mxu0 0.0
  %216 = vmatprep.subr.mxu0 0.0
  %217 = vmatpush1.msra.mxu0 0.0
  %218 = vmatprep.subr.mxu0 0.0
  %219 = vmatpush1.msra.mxu0 0.0
  %220 = vmatprep.subr.mxu0 0.0
  %221 = vmatpush1.msra.mxu0 0.0
  %222 = vmatprep.subr.mxu0 0.0
  %223 = vmatpush1.msra.mxu0 0.0
  %224 = vmatprep.subr.mxu0 0.0
  %225 = vmatpush1.msra.mxu0 0.0
  %226 = vmatprep.subr.mxu0 0.0
  %227 = vmatpush1.msra.mxu0 0.0
  %228 = vmatprep.subr.mxu0 0.0
  %229 = vmatpush1.msra.mxu0 0.0
  %230 = vmatprep.subr.mxu0 0.0
  %231 = vmatpush1.msra.mxu0 0.0
  %232 = vmatprep.subr.mxu0 0.0
  %233 = vmatpush1.msra.mxu0 0.0
  %234 = vmatprep.subr.mxu0 0.0
  %235 = vmatpush1.msra.mxu0 0.0
  %236 = vmatprep.subr.mxu0 0.0
  %237 = vmatpush1.msra.mxu0 0.0
  %238 = vmatprep.subr.mxu0 0.0
  %239 = vmatpush1.msra.mxu0 0.0
  %240 = vmatprep.subr.mxu0 0.0
  %241 = vmatpush1.msra.mxu0 0.0
  %242 = vmatprep.subr.mxu0 0.0
  %243 = vmatpush1.msra.mxu0 0.0
  %244 = vmatprep.subr.mxu0 0.0
  %245 = vmatpush1.msra.mxu0 0.0
  %246 = vmatprep.subr.mxu0 0.0
  %247 = vmatpush1.msra.mxu0 0.0
  %248 = vmatprep.subr.mxu0 0.0
  %249 = vmatpush1.msra.mxu0 0.0
  %250 = vmatprep.subr.mxu0 0.0
  %251 = vmatpush1.msra.mxu0 0.0
  %252 = vmatprep.subr.mxu0 0.0
  %253 = vmatpush1.msra.mxu0 0.0
  %254 = vmatprep.subr.mxu0 0.0
  %255 = vmatpush1.msra.mxu0 0.0
  %256 = vmatprep.subr.mxu0 0.0
  %257 = vmatpush1.msra.mxu0 0.0
  %258 = vmatprep.subr.mxu0 0.0
  %259 = vmatpush1.msra.mxu0 0.0
  %260 = vmatprep.subr.mxu0 0.0
  %261 = vmatpush1.msra.mxu0 0.0
  %262 = vmatprep.subr.mxu0 0.0
  %263 = vmatpush1.msra.mxu0 0.0
  %264 = vmatprep.subr.mxu0 0.0
  %265 = vmatpush1.msra.mxu0 0.0
  %266 = vmatprep.subr.mxu0 0.0
  %267 = vmatpush1.msra.mxu0 0.0
  %268 = vmatprep.subr.mxu0 0.0
  %269 = vmatpush1.msra.mxu0 0.0
  %270 = vmatprep.subr.mxu0 0.0
  %271 = vmatpush1.msra.mxu0 0.0
  %272 = vmatprep.mubr.f32.mxu0 0.0
  %273 = vmatmul.mubr.f32.gmra.mrb[0].mxu0 %v198
  %v274 = vpop.f32.mrb[0].mxu0
  %v275 = vadd.f32 %v122, %v274
  %v276 = vpop.f32.mrb[0].mxu0
  %v277 = vadd.f32 %v124, %v276
  %278 = vdwg.mxu0
  %279 = vmatprep.subr.mxu0 %v206
  %280 = vmatpush1.msra.mxu0 %v204
  %281 = vmatprep.subr.mxu0 0.0
  %282 = vmatpush1.msra.mxu0 0.0
  %283 = vmatprep.subr.mxu0 0.0
  %284 = vmatpush1.msra.mxu0 0.0
  %285 = vmatprep.subr.mxu0 0.0
  %286 = vmatpush1.msra.mxu0 0.0
  %287 = vmatprep.subr.mxu0 0.0
  %288 = vmatpush1.msra.mxu0 0.0
  %289 = vmatprep.subr.mxu0 0.0
  %290 = vmatpush1.msra.mxu0 0.0
  %291 = vmatprep.subr.mxu0 0.0
  %292 = vmatpush1.msra.mxu0 0.0
  %293 = vmatprep.subr.mxu0 0.0
  %294 = vmatpush1.msra.mxu0 0.0
  %295 = vmatprep.subr.mxu0 0.0
  %296 = vmatpush1.msra.mxu0 0.0
  %297 = vmatprep.subr.mxu0 0.0
  %298 = vmatpush1.msra.mxu0 0.0
  %299 = vmatprep.subr.mxu0 0.0
  %300 = vmatpush1.msra.mxu0 0.0
  %301 = vmatprep.subr.mxu0 0.0
  %302 = vmatpush1.msra.mxu0 0.0
  %303 = vmatprep.subr.mxu0 0.0
  %304 = vmatpush1.msra.mxu0 0.0
  %305 = vmatprep.subr.mxu0 0.0
  %306 = vmatpush1.msra.mxu0 0.0
  %307 = vmatprep.subr.mxu0 0.0
  %308 = vmatpush1.msra.mxu0 0.0
  %309 = vmatprep.subr.mxu0 0.0
  %310 = vmatpush1.msra.mxu0 0.0
  %311 = vmatprep.subr.mxu0 0.0
  %312 = vmatpush1.msra.mxu0 0.0
  %313 = vmatprep.subr.mxu0 0.0
  %314 = vmatpush1.msra.mxu0 0.0
  %315 = vmatprep.subr.mxu0 0.0
  %316 = vmatpush1.msra.mxu0 0.0
  %317 = vmatprep.subr.mxu0 0.0
  %318 = vmatpush1.msra.mxu0 0.0
  %319 = vmatprep.subr.mxu0 0.0
  %320 = vmatpush1.msra.mxu0 0.0
  %321 = vmatprep.subr.mxu0 0.0
  %322 = vmatpush1.msra.mxu0 0.0
  %323 = vmatprep.subr.mxu0 0.0
  %324 = vmatpush1.msra.mxu0 0.0
  %325 = vmatprep.subr.mxu0 0.0
  %326 = vmatpush1.msra.mxu0 0.0
  %327 = vmatprep.subr.mxu0 0.0
  %328 = vmatpush1.msra.mxu0 0.0
  %329 = vmatprep.subr.mxu0 0.0
  %330 = vmatpush1.msra.mxu0 0.0
  %331 = vmatprep.subr.mxu0 0.0
  %332 = vmatpush1.msra.mxu0 0.0
  %333 = vmatprep.subr.mxu0 0.0
  %334 = vmatpush1.msra.mxu0 0.0
  %335 = vmatprep.subr.mxu0 0.0
  %336 = vmatpush1.msra.mxu0 0.0
  %337 = vmatprep.subr.mxu0 0.0
  %338 = vmatpush1.msra.mxu0 0.0
  %339 = vmatprep.subr.mxu0 0.0
  %340 = vmatpush1.msra.mxu0 0.0
  %341 = vmatprep.subr.mxu0 0.0
  %342 = vmatpush1.msra.mxu0 0.0
  %343 = vmatprep.mubr.f32.mxu0 0.0
  %344 = vmatmul.mubr.f32.gmra.mrb[0].mxu0 %v198
  %v345 = vpop.f32.mrb[0].mxu0
  %v346 = vadd.f32 %v193, %v345
  %v347 = vpop.f32.mrb[0].mxu0
  %v348 = vadd.f32 %v195, %v347
  %349 = vdwg.mxu0
  %s350 = scalar_lea.vmem %s1, 16
  %v351 = vld [vmem:[%s350] sm:$0xff]
  %352 = vrot.lane.b32.xlu0 %v20, 126
  %v353 = vpop.permute.xlu0 %352
  %354 = vrot.lane.b32.xlu0 %v24, 126
  %v355 = vpop.permute.xlu0 %354
  %356 = vrot.lane.b32.xlu0 %v22, 126
  %v357 = vpop.permute.xlu0 %356
  %358 = vrot.lane.b32.xlu0 %v26, 126
  %v359 = vpop.permute.xlu0 %358
  %vm360 = vcmask 1031168
  %v361 = vsel %vm360, %v353, %v355
  %v362 = vsel %vm360, %v355, %v357
  %v363 = vsel %vm360, %v357, %v359
  %v365 = vsel %vm42, %v351, 0
  %v367 = vsel %vm46, %v361, 0
  %v369 = vsel %vm46, %v362, 0
  %v371 = vsel %vm46, %v363, 0
  %v373 = vsel %vm46, %v359, 0
  %375 = vmatprep.subr.mxu0 %v369
  %376 = vmatpush1.msra.mxu0 %v367
  %377 = vmatprep.subr.mxu0 0.0
  %378 = vmatpush1.msra.mxu0 0.0
  %379 = vmatprep.subr.mxu0 0.0
  %380 = vmatpush1.msra.mxu0 0.0
  %381 = vmatprep.subr.mxu0 0.0
  %382 = vmatpush1.msra.mxu0 0.0
  %383 = vmatprep.subr.mxu0 0.0
  %384 = vmatpush1.msra.mxu0 0.0
  %385 = vmatprep.subr.mxu0 0.0
  %386 = vmatpush1.msra.mxu0 0.0
  %387 = vmatprep.subr.mxu0 0.0
  %388 = vmatpush1.msra.mxu0 0.0
  %389 = vmatprep.subr.mxu0 0.0
  %390 = vmatpush1.msra.mxu0 0.0
  %391 = vmatprep.subr.mxu0 0.0
  %392 = vmatpush1.msra.mxu0 0.0
  %393 = vmatprep.subr.mxu0 0.0
  %394 = vmatpush1.msra.mxu0 0.0
  %395 = vmatprep.subr.mxu0 0.0
  %396 = vmatpush1.msra.mxu0 0.0
  %397 = vmatprep.subr.mxu0 0.0
  %398 = vmatpush1.msra.mxu0 0.0
  %399 = vmatprep.subr.mxu0 0.0
  %400 = vmatpush1.msra.mxu0 0.0
  %401 = vmatprep.subr.mxu0 0.0
  %402 = vmatpush1.msra.mxu0 0.0
  %403 = vmatprep.subr.mxu0 0.0
  %404 = vmatpush1.msra.mxu0 0.0
  %405 = vmatprep.subr.mxu0 0.0
  %406 = vmatpush1.msra.mxu0 0.0
  %407 = vmatprep.subr.mxu0 0.0
  %408 = vmatpush1.msra.mxu0 0.0
  %409 = vmatprep.subr.mxu0 0.0
  %410 = vmatpush1.msra.mxu0 0.0
  %411 = vmatprep.subr.mxu0 0.0
  %412 = vmatpush1.msra.mxu0 0.0
  %413 = vmatprep.subr.mxu0 0.0
  %414 = vmatpush1.msra.mxu0 0.0
  %415 = vmatprep.subr.mxu0 0.0
  %416 = vmatpush1.msra.mxu0 0.0
  %417 = vmatprep.subr.mxu0 0.0
  %418 = vmatpush1.msra.mxu0 0.0
  %419 = vmatprep.subr.mxu0 0.0
  %420 = vmatpush1.msra.mxu0 0.0
  %421 = vmatprep.subr.mxu0 0.0
  %422 = vmatpush1.msra.mxu0 0.0
  %423 = vmatprep.subr.mxu0 0.0
  %424 = vmatpush1.msra.mxu0 0.0
  %425 = vmatprep.subr.mxu0 0.0
  %426 = vmatpush1.msra.mxu0 0.0
  %427 = vmatprep.subr.mxu0 0.0
  %428 = vmatpush1.msra.mxu0 0.0
  %429 = vmatprep.subr.mxu0 0.0
  %430 = vmatpush1.msra.mxu0 0.0
  %431 = vmatprep.subr.mxu0 0.0
  %432 = vmatpush1.msra.mxu0 0.0
  %433 = vmatprep.subr.mxu0 0.0
  %434 = vmatpush1.msra.mxu0 0.0
  %435 = vmatprep.subr.mxu0 0.0
  %436 = vmatpush1.msra.mxu0 0.0
  %437 = vmatprep.subr.mxu0 0.0
  %438 = vmatpush1.msra.mxu0 0.0
  %439 = vmatprep.mubr.f32.mxu0 0.0
  %440 = vmatmul.mubr.f32.gmra.mrb[0].mxu0 %v365
  %v441 = vpop.f32.mrb[0].mxu0
  %v442 = vadd.f32 0.0, %v441
  %v443 = vpop.f32.mrb[0].mxu0
  %v444 = vadd.f32 0.0, %v443
  %445 = vdwg.mxu0
  %446 = vmatprep.subr.mxu0 %v373
  %447 = vmatpush1.msra.mxu0 %v371
  %448 = vmatprep.subr.mxu0 0.0
  %449 = vmatpush1.msra.mxu0 0.0
  %450 = vmatprep.subr.mxu0 0.0
  %451 = vmatpush1.msra.mxu0 0.0
  %452 = vmatprep.subr.mxu0 0.0
  %453 = vmatpush1.msra.mxu0 0.0
  %454 = vmatprep.subr.mxu0 0.0
  %455 = vmatpush1.msra.mxu0 0.0
  %456 = vmatprep.subr.mxu0 0.0
  %457 = vmatpush1.msra.mxu0 0.0
  %458 = vmatprep.subr.mxu0 0.0
  %459 = vmatpush1.msra.mxu0 0.0
  %460 = vmatprep.subr.mxu0 0.0
  %461 = vmatpush1.msra.mxu0 0.0
  %462 = vmatprep.subr.mxu0 0.0
  %463 = vmatpush1.msra.mxu0 0.0
  %464 = vmatprep.subr.mxu0 0.0
  %465 = vmatpush1.msra.mxu0 0.0
  %466 = vmatprep.subr.mxu0 0.0
  %467 = vmatpush1.msra.mxu0 0.0
  %468 = vmatprep.subr.mxu0 0.0
  %469 = vmatpush1.msra.mxu0 0.0
  %470 = vmatprep.subr.mxu0 0.0
  %471 = vmatpush1.msra.mxu0 0.0
  %472 = vmatprep.subr.mxu0 0.0
  %473 = vmatpush1.msra.mxu0 0.0
  %474 = vmatprep.subr.mxu0 0.0
  %475 = vmatpush1.msra.mxu0 0.0
  %476 = vmatprep.subr.mxu0 0.0
  %477 = vmatpush1.msra.mxu0 0.0
  %478 = vmatprep.subr.mxu0 0.0
  %479 = vmatpush1.msra.mxu0 0.0
  %480 = vmatprep.subr.mxu0 0.0
  %481 = vmatpush1.msra.mxu0 0.0
  %482 = vmatprep.subr.mxu0 0.0
  %483 = vmatpush1.msra.mxu0 0.0
  %484 = vmatprep.subr.mxu0 0.0
  %485 = vmatpush1.msra.mxu0 0.0
  %486 = vmatprep.subr.mxu0 0.0
  %487 = vmatpush1.msra.mxu0 0.0
  %488 = vmatprep.subr.mxu0 0.0
  %489 = vmatpush1.msra.mxu0 0.0
  %490 = vmatprep.subr.mxu0 0.0
  %491 = vmatpush1.msra.mxu0 0.0
  %492 = vmatprep.subr.mxu0 0.0
  %493 = vmatpush1.msra.mxu0 0.0
  %494 = vmatprep.subr.mxu0 0.0
  %495 = vmatpush1.msra.mxu0 0.0
  %496 = vmatprep.subr.mxu0 0.0
  %497 = vmatpush1.msra.mxu0 0.0
  %498 = vmatprep.subr.mxu0 0.0
  %499 = vmatpush1.msra.mxu0 0.0
  %500 = vmatprep.subr.mxu0 0.0
  %501 = vmatpush1.msra.mxu0 0.0
  %502 = vmatprep.subr.mxu0 0.0
  %503 = vmatpush1.msra.mxu0 0.0
  %504 = vmatprep.subr.mxu0 0.0
  %505 = vmatpush1.msra.mxu0 0.0
  %506 = vmatprep.subr.mxu0 0.0
  %507 = vmatpush1.msra.mxu0 0.0
  %508 = vmatprep.subr.mxu0 0.0
  %509 = vmatpush1.msra.mxu0 0.0
  %510 = vmatprep.mubr.f32.mxu0 0.0
  %511 = vmatmul.mubr.f32.gmra.mrb[0].mxu0 %v365
  %v512 = vpop.f32.mrb[0].mxu0
  %v513 = vadd.f32 0.0, %v512
  %v514 = vpop.f32.mrb[0].mxu0
  %v515 = vadd.f32 0.0, %v514
  %516 = vdwg.mxu0
  %v517 = vadd.f32 %v275, %v442
  %v518 = vadd.f32 %v277, %v444
  %v519 = vadd.f32 %v346, %v513
  %v520 = vadd.f32 %v348, %v515
  %s521 = scalar_lea.vmem %s1, 24
  %v522 = vld [vmem:[%s521] sm:$0xff]
  %523 = vrot.lane.b32.xlu0 %v20, 112
  %v524 = vpop.permute.xlu0 %523
  %525 = vrot.lane.b32.xlu0 %v24, 112
  %v526 = vpop.permute.xlu0 %525
  %527 = vrot.lane.b32.xlu0 %v22, 112
  %v528 = vpop.permute.xlu0 %527
  %529 = vrot.lane.b32.xlu0 %v26, 112
  %v530 = vpop.permute.xlu0 %529
  %vm531 = vcmask 916480
  %v532 = vsel %vm531, %v524, %v526
  %v533 = vsel %vm531, %v526, %v528
  %v534 = vsel %vm531, %v528, %v530
  %v536 = vsel %vm42, %v522, 0
  %v538 = vsel %vm46, %v532, 0
  %v540 = vsel %vm46, %v533, 0
  %v542 = vsel %vm46, %v534, 0
  %v544 = vsel %vm46, %v530, 0
  %546 = vmatprep.subr.mxu0 %v540
  %547 = vmatpush1.msra.mxu0 %v538
  %548 = vmatprep.subr.mxu0 0.0
  %549 = vmatpush1.msra.mxu0 0.0
  %550 = vmatprep.subr.mxu0 0.0
  %551 = vmatpush1.msra.mxu0 0.0
  %552 = vmatprep.subr.mxu0 0.0
  %553 = vmatpush1.msra.mxu0 0.0
  %554 = vmatprep.subr.mxu0 0.0
  %555 = vmatpush1.msra.mxu0 0.0
  %556 = vmatprep.subr.mxu0 0.0
  %557 = vmatpush1.msra.mxu0 0.0
  %558 = vmatprep.subr.mxu0 0.0
  %559 = vmatpush1.msra.mxu0 0.0
  %560 = vmatprep.subr.mxu0 0.0
  %561 = vmatpush1.msra.mxu0 0.0
  %562 = vmatprep.subr.mxu0 0.0
  %563 = vmatpush1.msra.mxu0 0.0
  %564 = vmatprep.subr.mxu0 0.0
  %565 = vmatpush1.msra.mxu0 0.0
  %566 = vmatprep.subr.mxu0 0.0
  %567 = vmatpush1.msra.mxu0 0.0
  %568 = vmatprep.subr.mxu0 0.0
  %569 = vmatpush1.msra.mxu0 0.0
  %570 = vmatprep.subr.mxu0 0.0
  %571 = vmatpush1.msra.mxu0 0.0
  %572 = vmatprep.subr.mxu0 0.0
  %573 = vmatpush1.msra.mxu0 0.0
  %574 = vmatprep.subr.mxu0 0.0
  %575 = vmatpush1.msra.mxu0 0.0
  %576 = vmatprep.subr.mxu0 0.0
  %577 = vmatpush1.msra.mxu0 0.0
  %578 = vmatprep.subr.mxu0 0.0
  %579 = vmatpush1.msra.mxu0 0.0
  %580 = vmatprep.subr.mxu0 0.0
  %581 = vmatpush1.msra.mxu0 0.0
  %582 = vmatprep.subr.mxu0 0.0
  %583 = vmatpush1.msra.mxu0 0.0
  %584 = vmatprep.subr.mxu0 0.0
  %585 = vmatpush1.msra.mxu0 0.0
  %586 = vmatprep.subr.mxu0 0.0
  %587 = vmatpush1.msra.mxu0 0.0
  %588 = vmatprep.subr.mxu0 0.0
  %589 = vmatpush1.msra.mxu0 0.0
  %590 = vmatprep.subr.mxu0 0.0
  %591 = vmatpush1.msra.mxu0 0.0
  %592 = vmatprep.subr.mxu0 0.0
  %593 = vmatpush1.msra.mxu0 0.0
  %594 = vmatprep.subr.mxu0 0.0
  %595 = vmatpush1.msra.mxu0 0.0
  %596 = vmatprep.subr.mxu0 0.0
  %597 = vmatpush1.msra.mxu0 0.0
  %598 = vmatprep.subr.mxu0 0.0
  %599 = vmatpush1.msra.mxu0 0.0
  %600 = vmatprep.subr.mxu0 0.0
  %601 = vmatpush1.msra.mxu0 0.0
  %602 = vmatprep.subr.mxu0 0.0
  %603 = vmatpush1.msra.mxu0 0.0
  %604 = vmatprep.subr.mxu0 0.0
  %605 = vmatpush1.msra.mxu0 0.0
  %606 = vmatprep.subr.mxu0 0.0
  %607 = vmatpush1.msra.mxu0 0.0
  %608 = vmatprep.subr.mxu0 0.0
  %609 = vmatpush1.msra.mxu0 0.0
  %610 = vmatprep.mubr.f32.mxu0 0.0
  %611 = vmatmul.mubr.f32.gmra.mrb[0].mxu0 %v536
  %v612 = vpop.f32.mrb[0].mxu0
  %v613 = vadd.f32 0.0, %v612
  %v614 = vpop.f32.mrb[0].mxu0
  %v615 = vadd.f32 0.0, %v614
  %616 = vdwg.mxu0
  %617 = vmatprep.subr.mxu0 %v544
  %618 = vmatpush1.msra.mxu0 %v542
  %619 = vmatprep.subr.mxu0 0.0
  %620 = vmatpush1.msra.mxu0 0.0
  %621 = vmatprep.subr.mxu0 0.0
  %622 = vmatpush1.msra.mxu0 0.0
  %623 = vmatprep.subr.mxu0 0.0
  %624 = vmatpush1.msra.mxu0 0.0
  %625 = vmatprep.subr.mxu0 0.0
  %626 = vmatpush1.msra.mxu0 0.0
  %627 = vmatprep.subr.mxu0 0.0
  %628 = vmatpush1.msra.mxu0 0.0
  %629 = vmatprep.subr.mxu0 0.0
  %630 = vmatpush1.msra.mxu0 0.0
  %631 = vmatprep.subr.mxu0 0.0
  %632 = vmatpush1.msra.mxu0 0.0
  %633 = vmatprep.subr.mxu0 0.0
  %634 = vmatpush1.msra.mxu0 0.0
  %635 = vmatprep.subr.mxu0 0.0
  %636 = vmatpush1.msra.mxu0 0.0
  %637 = vmatprep.subr.mxu0 0.0
  %638 = vmatpush1.msra.mxu0 0.0
  %639 = vmatprep.subr.mxu0 0.0
  %640 = vmatpush1.msra.mxu0 0.0
  %641 = vmatprep.subr.mxu0 0.0
  %642 = vmatpush1.msra.mxu0 0.0
  %643 = vmatprep.subr.mxu0 0.0
  %644 = vmatpush1.msra.mxu0 0.0
  %645 = vmatprep.subr.mxu0 0.0
  %646 = vmatpush1.msra.mxu0 0.0
  %647 = vmatprep.subr.mxu0 0.0
  %648 = vmatpush1.msra.mxu0 0.0
  %649 = vmatprep.subr.mxu0 0.0
  %650 = vmatpush1.msra.mxu0 0.0
  %651 = vmatprep.subr.mxu0 0.0
  %652 = vmatpush1.msra.mxu0 0.0
  %653 = vmatprep.subr.mxu0 0.0
  %654 = vmatpush1.msra.mxu0 0.0
  %655 = vmatprep.subr.mxu0 0.0
  %656 = vmatpush1.msra.mxu0 0.0
  %657 = vmatprep.subr.mxu0 0.0
  %658 = vmatpush1.msra.mxu0 0.0
  %659 = vmatprep.subr.mxu0 0.0
  %660 = vmatpush1.msra.mxu0 0.0
  %661 = vmatprep.subr.mxu0 0.0
  %662 = vmatpush1.msra.mxu0 0.0
  %663 = vmatprep.subr.mxu0 0.0
  %664 = vmatpush1.msra.mxu0 0.0
  %665 = vmatprep.subr.mxu0 0.0
  %666 = vmatpush1.msra.mxu0 0.0
  %667 = vmatprep.subr.mxu0 0.0
  %668 = vmatpush1.msra.mxu0 0.0
  %669 = vmatprep.subr.mxu0 0.0
  %670 = vmatpush1.msra.mxu0 0.0
  %671 = vmatprep.subr.mxu0 0.0
  %672 = vmatpush1.msra.mxu0 0.0
  %673 = vmatprep.subr.mxu0 0.0
  %674 = vmatpush1.msra.mxu0 0.0
  %675 = vmatprep.subr.mxu0 0.0
  %676 = vmatpush1.msra.mxu0 0.0
  %677 = vmatprep.subr.mxu0 0.0
  %678 = vmatpush1.msra.mxu0 0.0
  %679 = vmatprep.subr.mxu0 0.0
  %680 = vmatpush1.msra.mxu0 0.0
  %681 = vmatprep.mubr.f32.mxu0 0.0
  %682 = vmatmul.mubr.f32.gmra.mrb[0].mxu0 %v536
  %v683 = vpop.f32.mrb[0].mxu0
  %v684 = vadd.f32 0.0, %v683
  %v685 = vpop.f32.mrb[0].mxu0
  %v686 = vadd.f32 0.0, %v685
  %687 = vdwg.mxu0
  %v688 = vadd.f32 %v517, %v613
  %v689 = vadd.f32 %v518, %v615
  %v690 = vadd.f32 %v519, %v684
  %v691 = vadd.f32 %v520, %v686
  %s692 = scalar_lea.vmem %s1, 32
  %v693 = vld [vmem:[%s692] sm:$0xff]
  %694 = vrot.lane.b32.xlu0 %v20, 111
  %v695 = vpop.permute.xlu0 %694
  %696 = vrot.lane.b32.xlu0 %v24, 111
  %v697 = vpop.permute.xlu0 %696
  %698 = vrot.lane.b32.xlu0 %v22, 111
  %v699 = vpop.permute.xlu0 %698
  %700 = vrot.lane.b32.xlu0 %v26, 111
  %v701 = vpop.permute.xlu0 %700
  %vm702 = vcmask 908288
  %v703 = vsel %vm702, %v695, %v697
  %v704 = vsel %vm702, %v697, %v699
  %v705 = vsel %vm702, %v699, %v701
  %v707 = vsel %vm42, %v693, 0
  %v709 = vsel %vm46, %v703, 0
  %v711 = vsel %vm46, %v704, 0
  %v713 = vsel %vm46, %v705, 0
  %v715 = vsel %vm46, %v701, 0
  %717 = vmatprep.subr.mxu0 %v711
  %718 = vmatpush1.msra.mxu0 %v709
  %719 = vmatprep.subr.mxu0 0.0
  %720 = vmatpush1.msra.mxu0 0.0
  %721 = vmatprep.subr.mxu0 0.0
  %722 = vmatpush1.msra.mxu0 0.0
  %723 = vmatprep.subr.mxu0 0.0
  %724 = vmatpush1.msra.mxu0 0.0
  %725 = vmatprep.subr.mxu0 0.0
  %726 = vmatpush1.msra.mxu0 0.0
  %727 = vmatprep.subr.mxu0 0.0
  %728 = vmatpush1.msra.mxu0 0.0
  %729 = vmatprep.subr.mxu0 0.0
  %730 = vmatpush1.msra.mxu0 0.0
  %731 = vmatprep.subr.mxu0 0.0
  %732 = vmatpush1.msra.mxu0 0.0
  %733 = vmatprep.subr.mxu0 0.0
  %734 = vmatpush1.msra.mxu0 0.0
  %735 = vmatprep.subr.mxu0 0.0
  %736 = vmatpush1.msra.mxu0 0.0
  %737 = vmatprep.subr.mxu0 0.0
  %738 = vmatpush1.msra.mxu0 0.0
  %739 = vmatprep.subr.mxu0 0.0
  %740 = vmatpush1.msra.mxu0 0.0
  %741 = vmatprep.subr.mxu0 0.0
  %742 = vmatpush1.msra.mxu0 0.0
  %743 = vmatprep.subr.mxu0 0.0
  %744 = vmatpush1.msra.mxu0 0.0
  %745 = vmatprep.subr.mxu0 0.0
  %746 = vmatpush1.msra.mxu0 0.0
  %747 = vmatprep.subr.mxu0 0.0
  %748 = vmatpush1.msra.mxu0 0.0
  %749 = vmatprep.subr.mxu0 0.0
  %750 = vmatpush1.msra.mxu0 0.0
  %751 = vmatprep.subr.mxu0 0.0
  %752 = vmatpush1.msra.mxu0 0.0
  %753 = vmatprep.subr.mxu0 0.0
  %754 = vmatpush1.msra.mxu0 0.0
  %755 = vmatprep.subr.mxu0 0.0
  %756 = vmatpush1.msra.mxu0 0.0
  %757 = vmatprep.subr.mxu0 0.0
  %758 = vmatpush1.msra.mxu0 0.0
  %759 = vmatprep.subr.mxu0 0.0
  %760 = vmatpush1.msra.mxu0 0.0
  %761 = vmatprep.subr.mxu0 0.0
  %762 = vmatpush1.msra.mxu0 0.0
  %763 = vmatprep.subr.mxu0 0.0
  %764 = vmatpush1.msra.mxu0 0.0
  %765 = vmatprep.subr.mxu0 0.0
  %766 = vmatpush1.msra.mxu0 0.0
  %767 = vmatprep.subr.mxu0 0.0
  %768 = vmatpush1.msra.mxu0 0.0
  %769 = vmatprep.subr.mxu0 0.0
  %770 = vmatpush1.msra.mxu0 0.0
  %771 = vmatprep.subr.mxu0 0.0
  %772 = vmatpush1.msra.mxu0 0.0
  %773 = vmatprep.subr.mxu0 0.0
  %774 = vmatpush1.msra.mxu0 0.0
  %775 = vmatprep.subr.mxu0 0.0
  %776 = vmatpush1.msra.mxu0 0.0
  %777 = vmatprep.subr.mxu0 0.0
  %778 = vmatpush1.msra.mxu0 0.0
  %779 = vmatprep.subr.mxu0 0.0
  %780 = vmatpush1.msra.mxu0 0.0
  %781 = vmatprep.mubr.f32.mxu0 0.0
  %782 = vmatmul.mubr.f32.gmra.mrb[0].mxu0 %v707
  %v783 = vpop.f32.mrb[0].mxu0
  %v784 = vadd.f32 0.0, %v783
  %v785 = vpop.f32.mrb[0].mxu0
  %v786 = vadd.f32 0.0, %v785
  %787 = vdwg.mxu0
  %788 = vmatprep.subr.mxu0 %v715
  %789 = vmatpush1.msra.mxu0 %v713
  %790 = vmatprep.subr.mxu0 0.0
  %791 = vmatpush1.msra.mxu0 0.0
  %792 = vmatprep.subr.mxu0 0.0
  %793 = vmatpush1.msra.mxu0 0.0
  %794 = vmatprep.subr.mxu0 0.0
  %795 = vmatpush1.msra.mxu0 0.0
  %796 = vmatprep.subr.mxu0 0.0
  %797 = vmatpush1.msra.mxu0 0.0
  %798 = vmatprep.subr.mxu0 0.0
  %799 = vmatpush1.msra.mxu0 0.0
  %800 = vmatprep.subr.mxu0 0.0
  %801 = vmatpush1.msra.mxu0 0.0
  %802 = vmatprep.subr.mxu0 0.0
  %803 = vmatpush1.msra.mxu0 0.0
  %804 = vmatprep.subr.mxu0 0.0
  %805 = vmatpush1.msra.mxu0 0.0
  %806 = vmatprep.subr.mxu0 0.0
  %807 = vmatpush1.msra.mxu0 0.0
  %808 = vmatprep.subr.mxu0 0.0
  %809 = vmatpush1.msra.mxu0 0.0
  %810 = vmatprep.subr.mxu0 0.0
  %811 = vmatpush1.msra.mxu0 0.0
  %812 = vmatprep.subr.mxu0 0.0
  %813 = vmatpush1.msra.mxu0 0.0
  %814 = vmatprep.subr.mxu0 0.0
  %815 = vmatpush1.msra.mxu0 0.0
  %816 = vmatprep.subr.mxu0 0.0
  %817 = vmatpush1.msra.mxu0 0.0
  %818 = vmatprep.subr.mxu0 0.0
  %819 = vmatpush1.msra.mxu0 0.0
  %820 = vmatprep.subr.mxu0 0.0
  %821 = vmatpush1.msra.mxu0 0.0
  %822 = vmatprep.subr.mxu0 0.0
  %823 = vmatpush1.msra.mxu0 0.0
  %824 = vmatprep.subr.mxu0 0.0
  %825 = vmatpush1.msra.mxu0 0.0
  %826 = vmatprep.subr.mxu0 0.0
  %827 = vmatpush1.msra.mxu0 0.0
  %828 = vmatprep.subr.mxu0 0.0
  %829 = vmatpush1.msra.mxu0 0.0
  %830 = vmatprep.subr.mxu0 0.0
  %831 = vmatpush1.msra.mxu0 0.0
  %832 = vmatprep.subr.mxu0 0.0
  %833 = vmatpush1.msra.mxu0 0.0
  %834 = vmatprep.subr.mxu0 0.0
  %835 = vmatpush1.msra.mxu0 0.0
  %836 = vmatprep.subr.mxu0 0.0
  %837 = vmatpush1.msra.mxu0 0.0
  %838 = vmatprep.subr.mxu0 0.0
  %839 = vmatpush1.msra.mxu0 0.0
  %840 = vmatprep.subr.mxu0 0.0
  %841 = vmatpush1.msra.mxu0 0.0
  %842 = vmatprep.subr.mxu0 0.0
  %843 = vmatpush1.msra.mxu0 0.0
  %844 = vmatprep.subr.mxu0 0.0
  %845 = vmatpush1.msra.mxu0 0.0
  %846 = vmatprep.subr.mxu0 0.0
  %847 = vmatpush1.msra.mxu0 0.0
  %848 = vmatprep.subr.mxu0 0.0
  %849 = vmatpush1.msra.mxu0 0.0
  %850 = vmatprep.subr.mxu0 0.0
  %851 = vmatpush1.msra.mxu0 0.0
  %852 = vmatprep.mubr.f32.mxu0 0.0
  %853 = vmatmul.mubr.f32.gmra.mrb[0].mxu0 %v707
  %v854 = vpop.f32.mrb[0].mxu0
  %v855 = vadd.f32 0.0, %v854
  %v856 = vpop.f32.mrb[0].mxu0
  %v857 = vadd.f32 0.0, %v856
  %858 = vdwg.mxu0
  %v859 = vadd.f32 %v688, %v784
  %v860 = vadd.f32 %v689, %v786
  %v861 = vadd.f32 %v690, %v855
  %v862 = vadd.f32 %v691, %v857
  %s863 = scalar_lea.vmem %s1, 40
  %v864 = vld [vmem:[%s863] sm:$0xff]
  %865 = vrot.lane.b32.xlu0 %v20, 110
  %v866 = vpop.permute.xlu0 %865
  %867 = vrot.lane.b32.xlu0 %v24, 110
  %v868 = vpop.permute.xlu0 %867
  %869 = vrot.lane.b32.xlu0 %v22, 110
  %v870 = vpop.permute.xlu0 %869
  %871 = vrot.lane.b32.xlu0 %v26, 110
  %v872 = vpop.permute.xlu0 %871
  %vm873 = vcmask 900096
  %v874 = vsel %vm873, %v866, %v868
  %v875 = vsel %vm873, %v868, %v870
  %v876 = vsel %vm873, %v870, %v872
  %v878 = vsel %vm42, %v864, 0
  %v880 = vsel %vm46, %v874, 0
  %v882 = vsel %vm46, %v875, 0
  %v884 = vsel %vm46, %v876, 0
  %v886 = vsel %vm46, %v872, 0
  %888 = vmatprep.subr.mxu0 %v882
  %889 = vmatpush1.msra.mxu0 %v880
  %890 = vmatprep.subr.mxu0 0.0
  %891 = vmatpush1.msra.mxu0 0.0
  %892 = vmatprep.subr.mxu0 0.0
  %893 = vmatpush1.msra.mxu0 0.0
  %894 = vmatprep.subr.mxu0 0.0
  %895 = vmatpush1.msra.mxu0 0.0
  %896 = vmatprep.subr.mxu0 0.0
  %897 = vmatpush1.msra.mxu0 0.0
  %898 = vmatprep.subr.mxu0 0.0
  %899 = vmatpush1.msra.mxu0 0.0
  %900 = vmatprep.subr.mxu0 0.0
  %901 = vmatpush1.msra.mxu0 0.0
  %902 = vmatprep.subr.mxu0 0.0
  %903 = vmatpush1.msra.mxu0 0.0
  %904 = vmatprep.subr.mxu0 0.0
  %905 = vmatpush1.msra.mxu0 0.0
  %906 = vmatprep.subr.mxu0 0.0
  %907 = vmatpush1.msra.mxu0 0.0
  %908 = vmatprep.subr.mxu0 0.0
  %909 = vmatpush1.msra.mxu0 0.0
  %910 = vmatprep.subr.mxu0 0.0
  %911 = vmatpush1.msra.mxu0 0.0
  %912 = vmatprep.subr.mxu0 0.0
  %913 = vmatpush1.msra.mxu0 0.0
  %914 = vmatprep.subr.mxu0 0.0
  %915 = vmatpush1.msra.mxu0 0.0
  %916 = vmatprep.subr.mxu0 0.0
  %917 = vmatpush1.msra.mxu0 0.0
  %918 = vmatprep.subr.mxu0 0.0
  %919 = vmatpush1.msra.mxu0 0.0
  %920 = vmatprep.subr.mxu0 0.0
  %921 = vmatpush1.msra.mxu0 0.0
  %922 = vmatprep.subr.mxu0 0.0
  %923 = vmatpush1.msra.mxu0 0.0
  %924 = vmatprep.subr.mxu0 0.0
  %925 = vmatpush1.msra.mxu0 0.0
  %926 = vmatprep.subr.mxu0 0.0
  %927 = vmatpush1.msra.mxu0 0.0
  %928 = vmatprep.subr.mxu0 0.0
  %929 = vmatpush1.msra.mxu0 0.0
  %930 = vmatprep.subr.mxu0 0.0
  %931 = vmatpush1.msra.mxu0 0.0
  %932 = vmatprep.subr.mxu0 0.0
  %933 = vmatpush1.msra.mxu0 0.0
  %934 = vmatprep.subr.mxu0 0.0
  %935 = vmatpush1.msra.mxu0 0.0
  %936 = vmatprep.subr.mxu0 0.0
  %937 = vmatpush1.msra.mxu0 0.0
  %938 = vmatprep.subr.mxu0 0.0
  %939 = vmatpush1.msra.mxu0 0.0
  %940 = vmatprep.subr.mxu0 0.0
  %941 = vmatpush1.msra.mxu0 0.0
  %942 = vmatprep.subr.mxu0 0.0
  %943 = vmatpush1.msra.mxu0 0.0
  %944 = vmatprep.subr.mxu0 0.0
  %945 = vmatpush1.msra.mxu0 0.0
  %946 = vmatprep.subr.mxu0 0.0
  %947 = vmatpush1.msra.mxu0 0.0
  %948 = vmatprep.subr.mxu0 0.0
  %949 = vmatpush1.msra.mxu0 0.0
  %950 = vmatprep.subr.mxu0 0.0
  %951 = vmatpush1.msra.mxu0 0.0
  %952 = vmatprep.mubr.f32.mxu0 0.0
  %953 = vmatmul.mubr.f32.gmra.mrb[0].mxu0 %v878
  %v954 = vpop.f32.mrb[0].mxu0
  %v955 = vadd.f32 0.0, %v954
  %v956 = vpop.f32.mrb[0].mxu0
  %v957 = vadd.f32 0.0, %v956
  %958 = vdwg.mxu0
  %959 = vmatprep.subr.mxu0 %v886
  %960 = vmatpush1.msra.mxu0 %v884
  %961 = vmatprep.subr.mxu0 0.0
  %962 = vmatpush1.msra.mxu0 0.0
  %963 = vmatprep.subr.mxu0 0.0
  %964 = vmatpush1.msra.mxu0 0.0
  %965 = vmatprep.subr.mxu0 0.0
  %966 = vmatpush1.msra.mxu0 0.0
  %967 = vmatprep.subr.mxu0 0.0
  %968 = vmatpush1.msra.mxu0 0.0
  %969 = vmatprep.subr.mxu0 0.0
  %970 = vmatpush1.msra.mxu0 0.0
  %971 = vmatprep.subr.mxu0 0.0
  %972 = vmatpush1.msra.mxu0 0.0
  %973 = vmatprep.subr.mxu0 0.0
  %974 = vmatpush1.msra.mxu0 0.0
  %975 = vmatprep.subr.mxu0 0.0
  %976 = vmatpush1.msra.mxu0 0.0
  %977 = vmatprep.subr.mxu0 0.0
  %978 = vmatpush1.msra.mxu0 0.0
  %979 = vmatprep.subr.mxu0 0.0
  %980 = vmatpush1.msra.mxu0 0.0
  %981 = vmatprep.subr.mxu0 0.0
  %982 = vmatpush1.msra.mxu0 0.0
  %983 = vmatprep.subr.mxu0 0.0
  %984 = vmatpush1.msra.mxu0 0.0
  %985 = vmatprep.subr.mxu0 0.0
  %986 = vmatpush1.msra.mxu0 0.0
  %987 = vmatprep.subr.mxu0 0.0
  %988 = vmatpush1.msra.mxu0 0.0
  %989 = vmatprep.subr.mxu0 0.0
  %990 = vmatpush1.msra.mxu0 0.0
  %991 = vmatprep.subr.mxu0 0.0
  %992 = vmatpush1.msra.mxu0 0.0
  %993 = vmatprep.subr.mxu0 0.0
  %994 = vmatpush1.msra.mxu0 0.0
  %995 = vmatprep.subr.mxu0 0.0
  %996 = vmatpush1.msra.mxu0 0.0
  %997 = vmatprep.subr.mxu0 0.0
  %998 = vmatpush1.msra.mxu0 0.0
  %999 = vmatprep.subr.mxu0 0.0
  %1000 = vmatpush1.msra.mxu0 0.0
  %1001 = vmatprep.subr.mxu0 0.0
  %1002 = vmatpush1.msra.mxu0 0.0
  %1003 = vmatprep.subr.mxu0 0.0
  %1004 = vmatpush1.msra.mxu0 0.0
  %1005 = vmatprep.subr.mxu0 0.0
  %1006 = vmatpush1.msra.mxu0 0.0
  %1007 = vmatprep.subr.mxu0 0.0
  %1008 = vmatpush1.msra.mxu0 0.0
  %1009 = vmatprep.subr.mxu0 0.0
  %1010 = vmatpush1.msra.mxu0 0.0
  %1011 = vmatprep.subr.mxu0 0.0
  %1012 = vmatpush1.msra.mxu0 0.0
  %1013 = vmatprep.subr.mxu0 0.0
  %1014 = vmatpush1.msra.mxu0 0.0
  %1015 = vmatprep.subr.mxu0 0.0
  %1016 = vmatpush1.msra.mxu0 0.0
  %1017 = vmatprep.subr.mxu0 0.0
  %1018 = vmatpush1.msra.mxu0 0.0
  %1019 = vmatprep.subr.mxu0 0.0
  %1020 = vmatpush1.msra.mxu0 0.0
  %1021 = vmatprep.subr.mxu0 0.0
  %1022 = vmatpush1.msra.mxu0 0.0
  %1023 = vmatprep.mubr.f32.mxu0 0.0
  %1024 = vmatmul.mubr.f32.gmra.mrb[0].mxu0 %v878
  %v1025 = vpop.f32.mrb[0].mxu0
  %v1026 = vadd.f32 0.0, %v1025
  %v1027 = vpop.f32.mrb[0].mxu0
  %v1028 = vadd.f32 0.0, %v1027
  %1029 = vdwg.mxu0
  %v1030 = vadd.f32 %v859, %v955
  %v1031 = vadd.f32 %v860, %v957
  %v1032 = vadd.f32 %v861, %v1026
  %v1033 = vadd.f32 %v862, %v1028
  %s1034 = scalar_lea.vmem %s1, 48
  %v1035 = vld [vmem:[%s1034] sm:$0xff]
  %1036 = vrot.lane.b32.xlu0 %v20, 96
  %v1037 = vpop.permute.xlu0 %1036
  %1038 = vrot.lane.b32.xlu0 %v24, 96
  %v1039 = vpop.permute.xlu0 %1038
  %1040 = vrot.lane.b32.xlu0 %v22, 96
  %v1041 = vpop.permute.xlu0 %1040
  %1042 = vrot.lane.b32.xlu0 %v26, 96
  %v1043 = vpop.permute.xlu0 %1042
  %vm1044 = vcmask 785408
  %v1045 = vsel %vm1044, %v1037, %v1039
  %v1046 = vsel %vm1044, %v1039, %v1041
  %v1047 = vsel %vm1044, %v1041, %v1043
  %v1049 = vsel %vm42, %v1035, 0
  %v1051 = vsel %vm46, %v1045, 0
  %v1053 = vsel %vm46, %v1046, 0
  %v1055 = vsel %vm46, %v1047, 0
  %v1057 = vsel %vm46, %v1043, 0
  %1059 = vmatprep.subr.mxu0 %v1053
  %1060 = vmatpush1.msra.mxu0 %v1051
  %1061 = vmatprep.subr.mxu0 0.0
  %1062 = vmatpush1.msra.mxu0 0.0
  %1063 = vmatprep.subr.mxu0 0.0
  %1064 = vmatpush1.msra.mxu0 0.0
  %1065 = vmatprep.subr.mxu0 0.0
  %1066 = vmatpush1.msra.mxu0 0.0
  %1067 = vmatprep.subr.mxu0 0.0
  %1068 = vmatpush1.msra.mxu0 0.0
  %1069 = vmatprep.subr.mxu0 0.0
  %1070 = vmatpush1.msra.mxu0 0.0
  %1071 = vmatprep.subr.mxu0 0.0
  %1072 = vmatpush1.msra.mxu0 0.0
  %1073 = vmatprep.subr.mxu0 0.0
  %1074 = vmatpush1.msra.mxu0 0.0
  %1075 = vmatprep.subr.mxu0 0.0
  %1076 = vmatpush1.msra.mxu0 0.0
  %1077 = vmatprep.subr.mxu0 0.0
  %1078 = vmatpush1.msra.mxu0 0.0
  %1079 = vmatprep.subr.mxu0 0.0
  %1080 = vmatpush1.msra.mxu0 0.0
  %1081 = vmatprep.subr.mxu0 0.0
  %1082 = vmatpush1.msra.mxu0 0.0
  %1083 = vmatprep.subr.mxu0 0.0
  %1084 = vmatpush1.msra.mxu0 0.0
  %1085 = vmatprep.subr.mxu0 0.0
  %1086 = vmatpush1.msra.mxu0 0.0
  %1087 = vmatprep.subr.mxu0 0.0
  %1088 = vmatpush1.msra.mxu0 0.0
  %1089 = vmatprep.subr.mxu0 0.0
  %1090 = vmatpush1.msra.mxu0 0.0
  %1091 = vmatprep.subr.mxu0 0.0
  %1092 = vmatpush1.msra.mxu0 0.0
  %1093 = vmatprep.subr.mxu0 0.0
  %1094 = vmatpush1.msra.mxu0 0.0
  %1095 = vmatprep.subr.mxu0 0.0
  %1096 = vmatpush1.msra.mxu0 0.0
  %1097 = vmatprep.subr.mxu0 0.0
  %1098 = vmatpush1.msra.mxu0 0.0
  %1099 = vmatprep.subr.mxu0 0.0
  %1100 = vmatpush1.msra.mxu0 0.0
  %1101 = vmatprep.subr.mxu0 0.0
  %1102 = vmatpush1.msra.mxu0 0.0
  %1103 = vmatprep.subr.mxu0 0.0
  %1104 = vmatpush1.msra.mxu0 0.0
  %1105 = vmatprep.subr.mxu0 0.0
  %1106 = vmatpush1.msra.mxu0 0.0
  %1107 = vmatprep.subr.mxu0 0.0
  %1108 = vmatpush1.msra.mxu0 0.0
  %1109 = vmatprep.subr.mxu0 0.0
  %1110 = vmatpush1.msra.mxu0 0.0
  %1111 = vmatprep.subr.mxu0 0.0
  %1112 = vmatpush1.msra.mxu0 0.0
  %1113 = vmatprep.subr.mxu0 0.0
  %1114 = vmatpush1.msra.mxu0 0.0
  %1115 = vmatprep.subr.mxu0 0.0
  %1116 = vmatpush1.msra.mxu0 0.0
  %1117 = vmatprep.subr.mxu0 0.0
  %1118 = vmatpush1.msra.mxu0 0.0
  %1119 = vmatprep.subr.mxu0 0.0
  %1120 = vmatpush1.msra.mxu0 0.0
  %1121 = vmatprep.subr.mxu0 0.0
  %1122 = vmatpush1.msra.mxu0 0.0
  %1123 = vmatprep.mubr.f32.mxu0 0.0
  %1124 = vmatmul.mubr.f32.gmra.mrb[0].mxu0 %v1049
  %v1125 = vpop.f32.mrb[0].mxu0
  %v1126 = vadd.f32 0.0, %v1125
  %v1127 = vpop.f32.mrb[0].mxu0
  %v1128 = vadd.f32 0.0, %v1127
  %1129 = vdwg.mxu0
  %1130 = vmatprep.subr.mxu0 %v1057
  %1131 = vmatpush1.msra.mxu0 %v1055
  %1132 = vmatprep.subr.mxu0 0.0
  %1133 = vmatpush1.msra.mxu0 0.0
  %1134 = vmatprep.subr.mxu0 0.0
  %1135 = vmatpush1.msra.mxu0 0.0
  %1136 = vmatprep.subr.mxu0 0.0
  %1137 = vmatpush1.msra.mxu0 0.0
  %1138 = vmatprep.subr.mxu0 0.0
  %1139 = vmatpush1.msra.mxu0 0.0
  %1140 = vmatprep.subr.mxu0 0.0
  %1141 = vmatpush1.msra.mxu0 0.0
  %1142 = vmatprep.subr.mxu0 0.0
  %1143 = vmatpush1.msra.mxu0 0.0
  %1144 = vmatprep.subr.mxu0 0.0
  %1145 = vmatpush1.msra.mxu0 0.0
  %1146 = vmatprep.subr.mxu0 0.0
  %1147 = vmatpush1.msra.mxu0 0.0
  %1148 = vmatprep.subr.mxu0 0.0
  %1149 = vmatpush1.msra.mxu0 0.0
  %1150 = vmatprep.subr.mxu0 0.0
  %1151 = vmatpush1.msra.mxu0 0.0
  %1152 = vmatprep.subr.mxu0 0.0
  %1153 = vmatpush1.msra.mxu0 0.0
  %1154 = vmatprep.subr.mxu0 0.0
  %1155 = vmatpush1.msra.mxu0 0.0
  %1156 = vmatprep.subr.mxu0 0.0
  %1157 = vmatpush1.msra.mxu0 0.0
  %1158 = vmatprep.subr.mxu0 0.0
  %1159 = vmatpush1.msra.mxu0 0.0
  %1160 = vmatprep.subr.mxu0 0.0
  %1161 = vmatpush1.msra.mxu0 0.0
  %1162 = vmatprep.subr.mxu0 0.0
  %1163 = vmatpush1.msra.mxu0 0.0
  %1164 = vmatprep.subr.mxu0 0.0
  %1165 = vmatpush1.msra.mxu0 0.0
  %1166 = vmatprep.subr.mxu0 0.0
  %1167 = vmatpush1.msra.mxu0 0.0
  %1168 = vmatprep.subr.mxu0 0.0
  %1169 = vmatpush1.msra.mxu0 0.0
  %1170 = vmatprep.subr.mxu0 0.0
  %1171 = vmatpush1.msra.mxu0 0.0
  %1172 = vmatprep.subr.mxu0 0.0
  %1173 = vmatpush1.msra.mxu0 0.0
  %1174 = vmatprep.subr.mxu0 0.0
  %1175 = vmatpush1.msra.mxu0 0.0
  %1176 = vmatprep.subr.mxu0 0.0
  %1177 = vmatpush1.msra.mxu0 0.0
  %1178 = vmatprep.subr.mxu0 0.0
  %1179 = vmatpush1.msra.mxu0 0.0
  %1180 = vmatprep.subr.mxu0 0.0
  %1181 = vmatpush1.msra.mxu0 0.0
  %1182 = vmatprep.subr.mxu0 0.0
  %1183 = vmatpush1.msra.mxu0 0.0
  %1184 = vmatprep.subr.mxu0 0.0
  %1185 = vmatpush1.msra.mxu0 0.0
  %1186 = vmatprep.subr.mxu0 0.0
  %1187 = vmatpush1.msra.mxu0 0.0
  %1188 = vmatprep.subr.mxu0 0.0
  %1189 = vmatpush1.msra.mxu0 0.0
  %1190 = vmatprep.subr.mxu0 0.0
  %1191 = vmatpush1.msra.mxu0 0.0
  %1192 = vmatprep.subr.mxu0 0.0
  %1193 = vmatpush1.msra.mxu0 0.0
  %1194 = vmatprep.mubr.f32.mxu0 0.0
  %1195 = vmatmul.mubr.f32.gmra.mrb[0].mxu0 %v1049
  %v1196 = vpop.f32.mrb[0].mxu0
  %v1197 = vadd.f32 0.0, %v1196
  %v1198 = vpop.f32.mrb[0].mxu0
  %v1199 = vadd.f32 0.0, %v1198
  %1200 = vdwg.mxu0
  %v1201 = vadd.f32 %v1030, %v1126
  %v1202 = vadd.f32 %v1031, %v1128
  %v1203 = vadd.f32 %v1032, %v1197
  %v1204 = vadd.f32 %v1033, %v1199
  %s1205 = scalar_lea.vmem %s1, 56
  %v1206 = vld [vmem:[%s1205] sm:$0xff]
  %1207 = vrot.lane.b32.xlu0 %v20, 95
  %v1208 = vpop.permute.xlu0 %1207
  %1209 = vrot.lane.b32.xlu0 %v24, 95
  %v1210 = vpop.permute.xlu0 %1209
  %1211 = vrot.lane.b32.xlu0 %v22, 95
  %v1212 = vpop.permute.xlu0 %1211
  %1213 = vrot.lane.b32.xlu0 %v26, 95
  %v1214 = vpop.permute.xlu0 %1213
  %vm1215 = vcmask 777216
  %v1216 = vsel %vm1215, %v1208, %v1210
  %v1217 = vsel %vm1215, %v1210, %v1212
  %v1218 = vsel %vm1215, %v1212, %v1214
  %v1220 = vsel %vm42, %v1206, 0
  %v1222 = vsel %vm46, %v1216, 0
  %v1224 = vsel %vm46, %v1217, 0
  %v1226 = vsel %vm46, %v1218, 0
  %v1228 = vsel %vm46, %v1214, 0
  %1230 = vmatprep.subr.mxu0 %v1224
  %1231 = vmatpush1.msra.mxu0 %v1222
  %1232 = vmatprep.subr.mxu0 0.0
  %1233 = vmatpush1.msra.mxu0 0.0
  %1234 = vmatprep.subr.mxu0 0.0
  %1235 = vmatpush1.msra.mxu0 0.0
  %1236 = vmatprep.subr.mxu0 0.0
  %1237 = vmatpush1.msra.mxu0 0.0
  %1238 = vmatprep.subr.mxu0 0.0
  %1239 = vmatpush1.msra.mxu0 0.0
  %1240 = vmatprep.subr.mxu0 0.0
  %1241 = vmatpush1.msra.mxu0 0.0
  %1242 = vmatprep.subr.mxu0 0.0
  %1243 = vmatpush1.msra.mxu0 0.0
  %1244 = vmatprep.subr.mxu0 0.0
  %1245 = vmatpush1.msra.mxu0 0.0
  %1246 = vmatprep.subr.mxu0 0.0
  %1247 = vmatpush1.msra.mxu0 0.0
  %1248 = vmatprep.subr.mxu0 0.0
  %1249 = vmatpush1.msra.mxu0 0.0
  %1250 = vmatprep.subr.mxu0 0.0
  %1251 = vmatpush1.msra.mxu0 0.0
  %1252 = vmatprep.subr.mxu0 0.0
  %1253 = vmatpush1.msra.mxu0 0.0
  %1254 = vmatprep.subr.mxu0 0.0
  %1255 = vmatpush1.msra.mxu0 0.0
  %1256 = vmatprep.subr.mxu0 0.0
  %1257 = vmatpush1.msra.mxu0 0.0
  %1258 = vmatprep.subr.mxu0 0.0
  %1259 = vmatpush1.msra.mxu0 0.0
  %1260 = vmatprep.subr.mxu0 0.0
  %1261 = vmatpush1.msra.mxu0 0.0
  %1262 = vmatprep.subr.mxu0 0.0
  %1263 = vmatpush1.msra.mxu0 0.0
  %1264 = vmatprep.subr.mxu0 0.0
  %1265 = vmatpush1.msra.mxu0 0.0
  %1266 = vmatprep.subr.mxu0 0.0
  %1267 = vmatpush1.msra.mxu0 0.0
  %1268 = vmatprep.subr.mxu0 0.0
  %1269 = vmatpush1.msra.mxu0 0.0
  %1270 = vmatprep.subr.mxu0 0.0
  %1271 = vmatpush1.msra.mxu0 0.0
  %1272 = vmatprep.subr.mxu0 0.0
  %1273 = vmatpush1.msra.mxu0 0.0
  %1274 = vmatprep.subr.mxu0 0.0
  %1275 = vmatpush1.msra.mxu0 0.0
  %1276 = vmatprep.subr.mxu0 0.0
  %1277 = vmatpush1.msra.mxu0 0.0
  %1278 = vmatprep.subr.mxu0 0.0
  %1279 = vmatpush1.msra.mxu0 0.0
  %1280 = vmatprep.subr.mxu0 0.0
  %1281 = vmatpush1.msra.mxu0 0.0
  %1282 = vmatprep.subr.mxu0 0.0
  %1283 = vmatpush1.msra.mxu0 0.0
  %1284 = vmatprep.subr.mxu0 0.0
  %1285 = vmatpush1.msra.mxu0 0.0
  %1286 = vmatprep.subr.mxu0 0.0
  %1287 = vmatpush1.msra.mxu0 0.0
  %1288 = vmatprep.subr.mxu0 0.0
  %1289 = vmatpush1.msra.mxu0 0.0
  %1290 = vmatprep.subr.mxu0 0.0
  %1291 = vmatpush1.msra.mxu0 0.0
  %1292 = vmatprep.subr.mxu0 0.0
  %1293 = vmatpush1.msra.mxu0 0.0
  %1294 = vmatprep.mubr.f32.mxu0 0.0
  %1295 = vmatmul.mubr.f32.gmra.mrb[0].mxu0 %v1220
  %v1296 = vpop.f32.mrb[0].mxu0
  %v1297 = vadd.f32 0.0, %v1296
  %v1298 = vpop.f32.mrb[0].mxu0
  %v1299 = vadd.f32 0.0, %v1298
  %1300 = vdwg.mxu0
  %1301 = vmatprep.subr.mxu0 %v1228
  %1302 = vmatpush1.msra.mxu0 %v1226
  %1303 = vmatprep.subr.mxu0 0.0
  %1304 = vmatpush1.msra.mxu0 0.0
  %1305 = vmatprep.subr.mxu0 0.0
  %1306 = vmatpush1.msra.mxu0 0.0
  %1307 = vmatprep.subr.mxu0 0.0
  %1308 = vmatpush1.msra.mxu0 0.0
  %1309 = vmatprep.subr.mxu0 0.0
  %1310 = vmatpush1.msra.mxu0 0.0
  %1311 = vmatprep.subr.mxu0 0.0
  %1312 = vmatpush1.msra.mxu0 0.0
  %1313 = vmatprep.subr.mxu0 0.0
  %1314 = vmatpush1.msra.mxu0 0.0
  %1315 = vmatprep.subr.mxu0 0.0
  %1316 = vmatpush1.msra.mxu0 0.0
  %1317 = vmatprep.subr.mxu0 0.0
  %1318 = vmatpush1.msra.mxu0 0.0
  %1319 = vmatprep.subr.mxu0 0.0
  %1320 = vmatpush1.msra.mxu0 0.0
  %1321 = vmatprep.subr.mxu0 0.0
  %1322 = vmatpush1.msra.mxu0 0.0
  %1323 = vmatprep.subr.mxu0 0.0
  %1324 = vmatpush1.msra.mxu0 0.0
  %1325 = vmatprep.subr.mxu0 0.0
  %1326 = vmatpush1.msra.mxu0 0.0
  %1327 = vmatprep.subr.mxu0 0.0
  %1328 = vmatpush1.msra.mxu0 0.0
  %1329 = vmatprep.subr.mxu0 0.0
  %1330 = vmatpush1.msra.mxu0 0.0
  %1331 = vmatprep.subr.mxu0 0.0
  %1332 = vmatpush1.msra.mxu0 0.0
  %1333 = vmatprep.subr.mxu0 0.0
  %1334 = vmatpush1.msra.mxu0 0.0
  %1335 = vmatprep.subr.mxu0 0.0
  %1336 = vmatpush1.msra.mxu0 0.0
  %1337 = vmatprep.subr.mxu0 0.0
  %1338 = vmatpush1.msra.mxu0 0.0
  %1339 = vmatprep.subr.mxu0 0.0
  %1340 = vmatpush1.msra.mxu0 0.0
  %1341 = vmatprep.subr.mxu0 0.0
  %1342 = vmatpush1.msra.mxu0 0.0
  %1343 = vmatprep.subr.mxu0 0.0
  %1344 = vmatpush1.msra.mxu0 0.0
  %1345 = vmatprep.subr.mxu0 0.0
  %1346 = vmatpush1.msra.mxu0 0.0
  %1347 = vmatprep.subr.mxu0 0.0
  %1348 = vmatpush1.msra.mxu0 0.0
  %1349 = vmatprep.subr.mxu0 0.0
  %1350 = vmatpush1.msra.mxu0 0.0
  %1351 = vmatprep.subr.mxu0 0.0
  %1352 = vmatpush1.msra.mxu0 0.0
  %1353 = vmatprep.subr.mxu0 0.0
  %1354 = vmatpush1.msra.mxu0 0.0
  %1355 = vmatprep.subr.mxu0 0.0
  %1356 = vmatpush1.msra.mxu0 0.0
  %1357 = vmatprep.subr.mxu0 0.0
  %1358 = vmatpush1.msra.mxu0 0.0
  %1359 = vmatprep.subr.mxu0 0.0
  %1360 = vmatpush1.msra.mxu0 0.0
  %1361 = vmatprep.subr.mxu0 0.0
  %1362 = vmatpush1.msra.mxu0 0.0
  %1363 = vmatprep.subr.mxu0 0.0
  %1364 = vmatpush1.msra.mxu0 0.0
  %1365 = vmatprep.mubr.f32.mxu0 0.0
  %1366 = vmatmul.mubr.f32.gmra.mrb[0].mxu0 %v1220
  %v1367 = vpop.f32.mrb[0].mxu0
  %v1368 = vadd.f32 0.0, %v1367
  %v1369 = vpop.f32.mrb[0].mxu0
  %v1370 = vadd.f32 0.0, %v1369
  %1371 = vdwg.mxu0
  %v1372 = vadd.f32 %v1201, %v1297
  %v1373 = vadd.f32 %v1202, %v1299
  %v1374 = vadd.f32 %v1203, %v1368
  %v1375 = vadd.f32 %v1204, %v1370
  %s1376 = scalar_lea.vmem %s1, 64
  %v1377 = vld [vmem:[%s1376] sm:$0xff]
  %1378 = vrot.lane.b32.xlu0 %v20, 94
  %v1379 = vpop.permute.xlu0 %1378
  %1380 = vrot.lane.b32.xlu0 %v24, 94
  %v1381 = vpop.permute.xlu0 %1380
  %1382 = vrot.lane.b32.xlu0 %v22, 94
  %v1383 = vpop.permute.xlu0 %1382
  %1384 = vrot.lane.b32.xlu0 %v26, 94
  %v1385 = vpop.permute.xlu0 %1384
  %vm1386 = vcmask 769024
  %v1387 = vsel %vm1386, %v1379, %v1381
  %v1388 = vsel %vm1386, %v1381, %v1383
  %v1389 = vsel %vm1386, %v1383, %v1385
  %v1391 = vsel %vm42, %v1377, 0
  %v1393 = vsel %vm46, %v1387, 0
  %v1395 = vsel %vm46, %v1388, 0
  %v1397 = vsel %vm46, %v1389, 0
  %v1399 = vsel %vm46, %v1385, 0
  %1401 = vmatprep.subr.mxu0 %v1395
  %1402 = vmatpush1.msra.mxu0 %v1393
  %1403 = vmatprep.subr.mxu0 0.0
  %1404 = vmatpush1.msra.mxu0 0.0
  %1405 = vmatprep.subr.mxu0 0.0
  %1406 = vmatpush1.msra.mxu0 0.0
  %1407 = vmatprep.subr.mxu0 0.0
  %1408 = vmatpush1.msra.mxu0 0.0
  %1409 = vmatprep.subr.mxu0 0.0
  %1410 = vmatpush1.msra.mxu0 0.0
  %1411 = vmatprep.subr.mxu0 0.0
  %1412 = vmatpush1.msra.mxu0 0.0
  %1413 = vmatprep.subr.mxu0 0.0
  %1414 = vmatpush1.msra.mxu0 0.0
  %1415 = vmatprep.subr.mxu0 0.0
  %1416 = vmatpush1.msra.mxu0 0.0
  %1417 = vmatprep.subr.mxu0 0.0
  %1418 = vmatpush1.msra.mxu0 0.0
  %1419 = vmatprep.subr.mxu0 0.0
  %1420 = vmatpush1.msra.mxu0 0.0
  %1421 = vmatprep.subr.mxu0 0.0
  %1422 = vmatpush1.msra.mxu0 0.0
  %1423 = vmatprep.subr.mxu0 0.0
  %1424 = vmatpush1.msra.mxu0 0.0
  %1425 = vmatprep.subr.mxu0 0.0
  %1426 = vmatpush1.msra.mxu0 0.0
  %1427 = vmatprep.subr.mxu0 0.0
  %1428 = vmatpush1.msra.mxu0 0.0
  %1429 = vmatprep.subr.mxu0 0.0
  %1430 = vmatpush1.msra.mxu0 0.0
  %1431 = vmatprep.subr.mxu0 0.0
  %1432 = vmatpush1.msra.mxu0 0.0
  %1433 = vmatprep.subr.mxu0 0.0
  %1434 = vmatpush1.msra.mxu0 0.0
  %1435 = vmatprep.subr.mxu0 0.0
  %1436 = vmatpush1.msra.mxu0 0.0
  %1437 = vmatprep.subr.mxu0 0.0
  %1438 = vmatpush1.msra.mxu0 0.0
  %1439 = vmatprep.subr.mxu0 0.0
  %1440 = vmatpush1.msra.mxu0 0.0
  %1441 = vmatprep.subr.mxu0 0.0
  %1442 = vmatpush1.msra.mxu0 0.0
  %1443 = vmatprep.subr.mxu0 0.0
  %1444 = vmatpush1.msra.mxu0 0.0
  %1445 = vmatprep.subr.mxu0 0.0
  %1446 = vmatpush1.msra.mxu0 0.0
  %1447 = vmatprep.subr.mxu0 0.0
  %1448 = vmatpush1.msra.mxu0 0.0
  %1449 = vmatprep.subr.mxu0 0.0
  %1450 = vmatpush1.msra.mxu0 0.0
  %1451 = vmatprep.subr.mxu0 0.0
  %1452 = vmatpush1.msra.mxu0 0.0
  %1453 = vmatprep.subr.mxu0 0.0
  %1454 = vmatpush1.msra.mxu0 0.0
  %1455 = vmatprep.subr.mxu0 0.0
  %1456 = vmatpush1.msra.mxu0 0.0
  %1457 = vmatprep.subr.mxu0 0.0
  %1458 = vmatpush1.msra.mxu0 0.0
  %1459 = vmatprep.subr.mxu0 0.0
  %1460 = vmatpush1.msra.mxu0 0.0
  %1461 = vmatprep.subr.mxu0 0.0
  %1462 = vmatpush1.msra.mxu0 0.0
  %1463 = vmatprep.subr.mxu0 0.0
  %1464 = vmatpush1.msra.mxu0 0.0
  %1465 = vmatprep.mubr.f32.mxu0 0.0
  %1466 = vmatmul.mubr.f32.gmra.mrb[0].mxu0 %v1391
  %v1467 = vpop.f32.mrb[0].mxu0
  %v1468 = vadd.f32 0.0, %v1467
  %v1469 = vpop.f32.mrb[0].mxu0
  %v1470 = vadd.f32 0.0, %v1469
  %1471 = vdwg.mxu0
  %1472 = vmatprep.subr.mxu0 %v1399
  %1473 = vmatpush1.msra.mxu0 %v1397
  %1474 = vmatprep.subr.mxu0 0.0
  %1475 = vmatpush1.msra.mxu0 0.0
  %1476 = vmatprep.subr.mxu0 0.0
  %1477 = vmatpush1.msra.mxu0 0.0
  %1478 = vmatprep.subr.mxu0 0.0
  %1479 = vmatpush1.msra.mxu0 0.0
  %1480 = vmatprep.subr.mxu0 0.0
  %1481 = vmatpush1.msra.mxu0 0.0
  %1482 = vmatprep.subr.mxu0 0.0
  %1483 = vmatpush1.msra.mxu0 0.0
  %1484 = vmatprep.subr.mxu0 0.0
  %1485 = vmatpush1.msra.mxu0 0.0
  %1486 = vmatprep.subr.mxu0 0.0
  %1487 = vmatpush1.msra.mxu0 0.0
  %1488 = vmatprep.subr.mxu0 0.0
  %1489 = vmatpush1.msra.mxu0 0.0
  %1490 = vmatprep.subr.mxu0 0.0
  %1491 = vmatpush1.msra.mxu0 0.0
  %1492 = vmatprep.subr.mxu0 0.0
  %1493 = vmatpush1.msra.mxu0 0.0
  %1494 = vmatprep.subr.mxu0 0.0
  %1495 = vmatpush1.msra.mxu0 0.0
  %1496 = vmatprep.subr.mxu0 0.0
  %1497 = vmatpush1.msra.mxu0 0.0
  %1498 = vmatprep.subr.mxu0 0.0
  %1499 = vmatpush1.msra.mxu0 0.0
  %1500 = vmatprep.subr.mxu0 0.0
  %1501 = vmatpush1.msra.mxu0 0.0
  %1502 = vmatprep.subr.mxu0 0.0
  %1503 = vmatpush1.msra.mxu0 0.0
  %1504 = vmatprep.subr.mxu0 0.0
  %1505 = vmatpush1.msra.mxu0 0.0
  %1506 = vmatprep.subr.mxu0 0.0
  %1507 = vmatpush1.msra.mxu0 0.0
  %1508 = vmatprep.subr.mxu0 0.0
  %1509 = vmatpush1.msra.mxu0 0.0
  %1510 = vmatprep.subr.mxu0 0.0
  %1511 = vmatpush1.msra.mxu0 0.0
  %1512 = vmatprep.subr.mxu0 0.0
  %1513 = vmatpush1.msra.mxu0 0.0
  %1514 = vmatprep.subr.mxu0 0.0
  %1515 = vmatpush1.msra.mxu0 0.0
  %1516 = vmatprep.subr.mxu0 0.0
  %1517 = vmatpush1.msra.mxu0 0.0
  %1518 = vmatprep.subr.mxu0 0.0
  %1519 = vmatpush1.msra.mxu0 0.0
  %1520 = vmatprep.subr.mxu0 0.0
  %1521 = vmatpush1.msra.mxu0 0.0
  %1522 = vmatprep.subr.mxu0 0.0
  %1523 = vmatpush1.msra.mxu0 0.0
  %1524 = vmatprep.subr.mxu0 0.0
  %1525 = vmatpush1.msra.mxu0 0.0
  %1526 = vmatprep.subr.mxu0 0.0
  %1527 = vmatpush1.msra.mxu0 0.0
  %1528 = vmatprep.subr.mxu0 0.0
  %1529 = vmatpush1.msra.mxu0 0.0
  %1530 = vmatprep.subr.mxu0 0.0
  %1531 = vmatpush1.msra.mxu0 0.0
  %1532 = vmatprep.subr.mxu0 0.0
  %1533 = vmatpush1.msra.mxu0 0.0
  %1534 = vmatprep.subr.mxu0 0.0
  %1535 = vmatpush1.msra.mxu0 0.0
  %1536 = vmatprep.mubr.f32.mxu0 0.0
  %1537 = vmatmul.mubr.f32.gmra.mrb[0].mxu0 %v1391
  %v1538 = vpop.f32.mrb[0].mxu0
  %v1539 = vadd.f32 0.0, %v1538
  %v1540 = vpop.f32.mrb[0].mxu0
  %v1541 = vadd.f32 0.0, %v1540
  %1542 = vdwg.mxu0
  %v1543 = vadd.f32 %v1372, %v1468
  %v1544 = vadd.f32 %v1373, %v1470
  %v1545 = vadd.f32 %v1374, %v1539
  %v1546 = vadd.f32 %v1375, %v1541
  %v1547 = vld [vmem:[%s2] sm:$0xff]
  %1549 = vset.pattern.permute.xlu0 0
  %1550 = vperm.xlu0 %1549, %v1547
  %v1551 = vpop.permute.xlu0 %1550
  %v1553 = vadd.f32 %v1543, %v1551
  %v1554 = vadd.f32 %v1544, %v1551
  %v1555 = vadd.f32 %v1545, %v1551
  %v1556 = vadd.f32 %v1546, %v1551
  %v1557 = vmax.f32 %v1553, 0.0
  %v1558 = vmax.f32 %v1554, 0.0
  %v1559 = vmax.f32 %v1555, 0.0
  %v1560 = vmax.f32 %v1556, 0.0
  %v1561 = vld [vmem:[%s3] sm:$0xff]
  %s1562 = scalar_lea.vmem %s3, 8
  %v1563 = vld [vmem:[%s1562] sm:$0xff]
  %1568 = vrot.lane.b32.xlu0 %v1557, 127
  %v1569 = vpop.permute.xlu0 %1568
  %1570 = vrot.lane.b32.xlu0 %v1558, 127
  %v1571 = vpop.permute.xlu0 %1570
  %1572 = vrot.lane.b32.xlu0 %v1559, 127
  %v1573 = vpop.permute.xlu0 %1572
  %1574 = vrot.lane.b32.xlu0 %v1560, 127
  %v1575 = vpop.permute.xlu0 %1574
  %v1576 = vsel %vm38, %v1569, %v1571
  %v1577 = vsel %vm38, %v1571, %v1573
  %v1578 = vsel %vm38, %v1573, %v1575
  %vm1583 = vcmask 64512
  %v1585 = vsel %vm1583, %v1563, 0
  %1587 = vmatprep.subr.mxu0 %v1577
  %1588 = vmatpush1.msra.mxu0 %v1576
  %1589 = vmatprep.subr.mxu0 0.0
  %1590 = vmatpush1.msra.mxu0 0.0
  %1591 = vmatprep.subr.mxu0 0.0
  %1592 = vmatpush1.msra.mxu0 0.0
  %1593 = vmatprep.subr.mxu0 0.0
  %1594 = vmatpush1.msra.mxu0 0.0
  %1595 = vmatprep.subr.mxu0 0.0
  %1596 = vmatpush1.msra.mxu0 0.0
  %1597 = vmatprep.subr.mxu0 0.0
  %1598 = vmatpush1.msra.mxu0 0.0
  %1599 = vmatprep.subr.mxu0 0.0
  %1600 = vmatpush1.msra.mxu0 0.0
  %1601 = vmatprep.subr.mxu0 0.0
  %1602 = vmatpush1.msra.mxu0 0.0
  %1603 = vmatprep.subr.mxu0 0.0
  %1604 = vmatpush1.msra.mxu0 0.0
  %1605 = vmatprep.subr.mxu0 0.0
  %1606 = vmatpush1.msra.mxu0 0.0
  %1607 = vmatprep.subr.mxu0 0.0
  %1608 = vmatpush1.msra.mxu0 0.0
  %1609 = vmatprep.subr.mxu0 0.0
  %1610 = vmatpush1.msra.mxu0 0.0
  %1611 = vmatprep.subr.mxu0 0.0
  %1612 = vmatpush1.msra.mxu0 0.0
  %1613 = vmatprep.subr.mxu0 0.0
  %1614 = vmatpush1.msra.mxu0 0.0
  %1615 = vmatprep.subr.mxu0 0.0
  %1616 = vmatpush1.msra.mxu0 0.0
  %1617 = vmatprep.subr.mxu0 0.0
  %1618 = vmatpush1.msra.mxu0 0.0
  %1619 = vmatprep.subr.mxu0 0.0
  %1620 = vmatpush1.msra.mxu0 0.0
  %1621 = vmatprep.subr.mxu0 0.0
  %1622 = vmatpush1.msra.mxu0 0.0
  %1623 = vmatprep.subr.mxu0 0.0
  %1624 = vmatpush1.msra.mxu0 0.0
  %1625 = vmatprep.subr.mxu0 0.0
  %1626 = vmatpush1.msra.mxu0 0.0
  %1627 = vmatprep.subr.mxu0 0.0
  %1628 = vmatpush1.msra.mxu0 0.0
  %1629 = vmatprep.subr.mxu0 0.0
  %1630 = vmatpush1.msra.mxu0 0.0
  %1631 = vmatprep.subr.mxu0 0.0
  %1632 = vmatpush1.msra.mxu0 0.0
  %1633 = vmatprep.subr.mxu0 0.0
  %1634 = vmatpush1.msra.mxu0 0.0
  %1635 = vmatprep.subr.mxu0 0.0
  %1636 = vmatpush1.msra.mxu0 0.0
  %1637 = vmatprep.subr.mxu0 0.0
  %1638 = vmatpush1.msra.mxu0 0.0
  %1639 = vmatprep.subr.mxu0 0.0
  %1640 = vmatpush1.msra.mxu0 0.0
  %1641 = vmatprep.subr.mxu0 0.0
  %1642 = vmatpush1.msra.mxu0 0.0
  %1643 = vmatprep.subr.mxu0 0.0
  %1644 = vmatpush1.msra.mxu0 0.0
  %1645 = vmatprep.subr.mxu0 0.0
  %1646 = vmatpush1.msra.mxu0 0.0
  %1647 = vmatprep.subr.mxu0 0.0
  %1648 = vmatpush1.msra.mxu0 0.0
  %1649 = vmatprep.subr.mxu0 0.0
  %1650 = vmatpush1.msra.mxu0 0.0
  %1651 = vmatprep.mubr.f32.mxu0 0.0
  %1652 = vmatmul.mubr.f32.gmra.mrb[0].mxu0 %v1585
  %v1653 = vpop.f32.mrb[0].mxu0
  %v1654 = vadd.f32 0.0, %v1653
  %v1655 = vpop.f32.mrb[0].mxu0
  %v1656 = vadd.f32 0.0, %v1655
  %1657 = vdwg.mxu0
  %1658 = vmatprep.subr.mxu0 %v1575
  %1659 = vmatpush1.msra.mxu0 %v1578
  %1660 = vmatprep.subr.mxu0 0.0
  %1661 = vmatpush1.msra.mxu0 0.0
  %1662 = vmatprep.subr.mxu0 0.0
  %1663 = vmatpush1.msra.mxu0 0.0
  %1664 = vmatprep.subr.mxu0 0.0
  %1665 = vmatpush1.msra.mxu0 0.0
  %1666 = vmatprep.subr.mxu0 0.0
  %1667 = vmatpush1.msra.mxu0 0.0
  %1668 = vmatprep.subr.mxu0 0.0
  %1669 = vmatpush1.msra.mxu0 0.0
  %1670 = vmatprep.subr.mxu0 0.0
  %1671 = vmatpush1.msra.mxu0 0.0
  %1672 = vmatprep.subr.mxu0 0.0
  %1673 = vmatpush1.msra.mxu0 0.0
  %1674 = vmatprep.subr.mxu0 0.0
  %1675 = vmatpush1.msra.mxu0 0.0
  %1676 = vmatprep.subr.mxu0 0.0
  %1677 = vmatpush1.msra.mxu0 0.0
  %1678 = vmatprep.subr.mxu0 0.0
  %1679 = vmatpush1.msra.mxu0 0.0
  %1680 = vmatprep.subr.mxu0 0.0
  %1681 = vmatpush1.msra.mxu0 0.0
  %1682 = vmatprep.subr.mxu0 0.0
  %1683 = vmatpush1.msra.mxu0 0.0
  %1684 = vmatprep.subr.mxu0 0.0
  %1685 = vmatpush1.msra.mxu0 0.0
  %1686 = vmatprep.subr.mxu0 0.0
  %1687 = vmatpush1.msra.mxu0 0.0
  %1688 = vmatprep.subr.mxu0 0.0
  %1689 = vmatpush1.msra.mxu0 0.0
  %1690 = vmatprep.subr.mxu0 0.0
  %1691 = vmatpush1.msra.mxu0 0.0
  %1692 = vmatprep.subr.mxu0 0.0
  %1693 = vmatpush1.msra.mxu0 0.0
  %1694 = vmatprep.subr.mxu0 0.0
  %1695 = vmatpush1.msra.mxu0 0.0
  %1696 = vmatprep.subr.mxu0 0.0
  %1697 = vmatpush1.msra.mxu0 0.0
  %1698 = vmatprep.subr.mxu0 0.0
  %1699 = vmatpush1.msra.mxu0 0.0
  %1700 = vmatprep.subr.mxu0 0.0
  %1701 = vmatpush1.msra.mxu0 0.0
  %1702 = vmatprep.subr.mxu0 0.0
  %1703 = vmatpush1.msra.mxu0 0.0
  %1704 = vmatprep.subr.mxu0 0.0
  %1705 = vmatpush1.msra.mxu0 0.0
  %1706 = vmatprep.subr.mxu0 0.0
  %1707 = vmatpush1.msra.mxu0 0.0
  %1708 = vmatprep.subr.mxu0 0.0
  %1709 = vmatpush1.msra.mxu0 0.0
  %1710 = vmatprep.subr.mxu0 0.0
  %1711 = vmatpush1.msra.mxu0 0.0
  %1712 = vmatprep.subr.mxu0 0.0
  %1713 = vmatpush1.msra.mxu0 0.0
  %1714 = vmatprep.subr.mxu0 0.0
  %1715 = vmatpush1.msra.mxu0 0.0
  %1716 = vmatprep.subr.mxu0 0.0
  %1717 = vmatpush1.msra.mxu0 0.0
  %1718 = vmatprep.subr.mxu0 0.0
  %1719 = vmatpush1.msra.mxu0 0.0
  %1720 = vmatprep.subr.mxu0 0.0
  %1721 = vmatpush1.msra.mxu0 0.0
  %1722 = vmatprep.mubr.f32.mxu0 0.0
  %1723 = vmatmul.mubr.f32.gmra.mrb[0].mxu0 %v1585
  %v1724 = vpop.f32.mrb[0].mxu0
  %v1725 = vadd.f32 0.0, %v1724
  %v1726 = vpop.f32.mrb[0].mxu0
  %v1727 = vadd.f32 0.0, %v1726
  %1728 = vdwg.mxu0
  %v1730 = vsel %vm1583, %v1561, 0
  %1732 = vmatprep.subr.mxu0 %v1558
  %1733 = vmatpush1.msra.mxu0 %v1557
  %1734 = vmatprep.subr.mxu0 0.0
  %1735 = vmatpush1.msra.mxu0 0.0
  %1736 = vmatprep.subr.mxu0 0.0
  %1737 = vmatpush1.msra.mxu0 0.0
  %1738 = vmatprep.subr.mxu0 0.0
  %1739 = vmatpush1.msra.mxu0 0.0
  %1740 = vmatprep.subr.mxu0 0.0
  %1741 = vmatpush1.msra.mxu0 0.0
  %1742 = vmatprep.subr.mxu0 0.0
  %1743 = vmatpush1.msra.mxu0 0.0
  %1744 = vmatprep.subr.mxu0 0.0
  %1745 = vmatpush1.msra.mxu0 0.0
  %1746 = vmatprep.subr.mxu0 0.0
  %1747 = vmatpush1.msra.mxu0 0.0
  %1748 = vmatprep.subr.mxu0 0.0
  %1749 = vmatpush1.msra.mxu0 0.0
  %1750 = vmatprep.subr.mxu0 0.0
  %1751 = vmatpush1.msra.mxu0 0.0
  %1752 = vmatprep.subr.mxu0 0.0
  %1753 = vmatpush1.msra.mxu0 0.0
  %1754 = vmatprep.subr.mxu0 0.0
  %1755 = vmatpush1.msra.mxu0 0.0
  %1756 = vmatprep.subr.mxu0 0.0
  %1757 = vmatpush1.msra.mxu0 0.0
  %1758 = vmatprep.subr.mxu0 0.0
  %1759 = vmatpush1.msra.mxu0 0.0
  %1760 = vmatprep.subr.mxu0 0.0
  %1761 = vmatpush1.msra.mxu0 0.0
  %1762 = vmatprep.subr.mxu0 0.0
  %1763 = vmatpush1.msra.mxu0 0.0
  %1764 = vmatprep.subr.mxu0 0.0
  %1765 = vmatpush1.msra.mxu0 0.0
  %1766 = vmatprep.subr.mxu0 0.0
  %1767 = vmatpush1.msra.mxu0 0.0
  %1768 = vmatprep.subr.mxu0 0.0
  %1769 = vmatpush1.msra.mxu0 0.0
  %1770 = vmatprep.subr.mxu0 0.0
  %1771 = vmatpush1.msra.mxu0 0.0
  %1772 = vmatprep.subr.mxu0 0.0
  %1773 = vmatpush1.msra.mxu0 0.0
  %1774 = vmatprep.subr.mxu0 0.0
  %1775 = vmatpush1.msra.mxu0 0.0
  %1776 = vmatprep.subr.mxu0 0.0
  %1777 = vmatpush1.msra.mxu0 0.0
  %1778 = vmatprep.subr.mxu0 0.0
  %1779 = vmatpush1.msra.mxu0 0.0
  %1780 = vmatprep.subr.mxu0 0.0
  %1781 = vmatpush1.msra.mxu0 0.0
  %1782 = vmatprep.subr.mxu0 0.0
  %1783 = vmatpush1.msra.mxu0 0.0
  %1784 = vmatprep.subr.mxu0 0.0
  %1785 = vmatpush1.msra.mxu0 0.0
  %1786 = vmatprep.subr.mxu0 0.0
  %1787 = vmatpush1.msra.mxu0 0.0
  %1788 = vmatprep.subr.mxu0 0.0
  %1789 = vmatpush1.msra.mxu0 0.0
  %1790 = vmatprep.subr.mxu0 0.0
  %1791 = vmatpush1.msra.mxu0 0.0
  %1792 = vmatprep.subr.mxu0 0.0
  %1793 = vmatpush1.msra.mxu0 0.0
  %1794 = vmatprep.subr.mxu0 0.0
  %1795 = vmatpush1.msra.mxu0 0.0
  %1796 = vmatprep.mubr.f32.mxu0 0.0
  %1797 = vmatmul.mubr.f32.gmra.mrb[0].mxu0 %v1730
  %v1798 = vpop.f32.mrb[0].mxu0
  %v1799 = vadd.f32 %v1654, %v1798
  %v1800 = vpop.f32.mrb[0].mxu0
  %v1801 = vadd.f32 %v1656, %v1800
  %1802 = vdwg.mxu0
  %1803 = vmatprep.subr.mxu0 %v1560
  %1804 = vmatpush1.msra.mxu0 %v1559
  %1805 = vmatprep.subr.mxu0 0.0
  %1806 = vmatpush1.msra.mxu0 0.0
  %1807 = vmatprep.subr.mxu0 0.0
  %1808 = vmatpush1.msra.mxu0 0.0
  %1809 = vmatprep.subr.mxu0 0.0
  %1810 = vmatpush1.msra.mxu0 0.0
  %1811 = vmatprep.subr.mxu0 0.0
  %1812 = vmatpush1.msra.mxu0 0.0
  %1813 = vmatprep.subr.mxu0 0.0
  %1814 = vmatpush1.msra.mxu0 0.0
  %1815 = vmatprep.subr.mxu0 0.0
  %1816 = vmatpush1.msra.mxu0 0.0
  %1817 = vmatprep.subr.mxu0 0.0
  %1818 = vmatpush1.msra.mxu0 0.0
  %1819 = vmatprep.subr.mxu0 0.0
  %1820 = vmatpush1.msra.mxu0 0.0
  %1821 = vmatprep.subr.mxu0 0.0
  %1822 = vmatpush1.msra.mxu0 0.0
  %1823 = vmatprep.subr.mxu0 0.0
  %1824 = vmatpush1.msra.mxu0 0.0
  %1825 = vmatprep.subr.mxu0 0.0
  %1826 = vmatpush1.msra.mxu0 0.0
  %1827 = vmatprep.subr.mxu0 0.0
  %1828 = vmatpush1.msra.mxu0 0.0
  %1829 = vmatprep.subr.mxu0 0.0
  %1830 = vmatpush1.msra.mxu0 0.0
  %1831 = vmatprep.subr.mxu0 0.0
  %1832 = vmatpush1.msra.mxu0 0.0
  %1833 = vmatprep.subr.mxu0 0.0
  %1834 = vmatpush1.msra.mxu0 0.0
  %1835 = vmatprep.subr.mxu0 0.0
  %1836 = vmatpush1.msra.mxu0 0.0
  %1837 = vmatprep.subr.mxu0 0.0
  %1838 = vmatpush1.msra.mxu0 0.0
  %1839 = vmatprep.subr.mxu0 0.0
  %1840 = vmatpush1.msra.mxu0 0.0
  %1841 = vmatprep.subr.mxu0 0.0
  %1842 = vmatpush1.msra.mxu0 0.0
  %1843 = vmatprep.subr.mxu0 0.0
  %1844 = vmatpush1.msra.mxu0 0.0
  %1845 = vmatprep.subr.mxu0 0.0
  %1846 = vmatpush1.msra.mxu0 0.0
  %1847 = vmatprep.subr.mxu0 0.0
  %1848 = vmatpush1.msra.mxu0 0.0
  %1849 = vmatprep.subr.mxu0 0.0
  %1850 = vmatpush1.msra.mxu0 0.0
  %1851 = vmatprep.subr.mxu0 0.0
  %1852 = vmatpush1.msra.mxu0 0.0
  %1853 = vmatprep.subr.mxu0 0.0
  %1854 = vmatpush1.msra.mxu0 0.0
  %1855 = vmatprep.subr.mxu0 0.0
  %1856 = vmatpush1.msra.mxu0 0.0
  %1857 = vmatprep.subr.mxu0 0.0
  %1858 = vmatpush1.msra.mxu0 0.0
  %1859 = vmatprep.subr.mxu0 0.0
  %1860 = vmatpush1.msra.mxu0 0.0
  %1861 = vmatprep.subr.mxu0 0.0
  %1862 = vmatpush1.msra.mxu0 0.0
  %1863 = vmatprep.subr.mxu0 0.0
  %1864 = vmatpush1.msra.mxu0 0.0
  %1865 = vmatprep.subr.mxu0 0.0
  %1866 = vmatpush1.msra.mxu0 0.0
  %1867 = vmatprep.mubr.f32.mxu0 0.0
  %1868 = vmatmul.mubr.f32.gmra.mrb[0].mxu0 %v1730
  %v1869 = vpop.f32.mrb[0].mxu0
  %v1870 = vadd.f32 %v1725, %v1869
  %v1871 = vpop.f32.mrb[0].mxu0
  %v1872 = vadd.f32 %v1727, %v1871
  %1873 = vdwg.mxu0
  %s1874 = scalar_lea.vmem %s3, 16
  %v1875 = vld [vmem:[%s1874] sm:$0xff]
  %1876 = vrot.lane.b32.xlu0 %v1557, 126
  %v1877 = vpop.permute.xlu0 %1876
  %1878 = vrot.lane.b32.xlu0 %v1558, 126
  %v1879 = vpop.permute.xlu0 %1878
  %1880 = vrot.lane.b32.xlu0 %v1559, 126
  %v1881 = vpop.permute.xlu0 %1880
  %1882 = vrot.lane.b32.xlu0 %v1560, 126
  %v1883 = vpop.permute.xlu0 %1882
  %v1884 = vsel %vm360, %v1877, %v1879
  %v1885 = vsel %vm360, %v1879, %v1881
  %v1886 = vsel %vm360, %v1881, %v1883
  %v1892 = vsel %vm1583, %v1875, 0
  %1894 = vmatprep.subr.mxu0 %v1885
  %1895 = vmatpush1.msra.mxu0 %v1884
  %1896 = vmatprep.subr.mxu0 0.0
  %1897 = vmatpush1.msra.mxu0 0.0
  %1898 = vmatprep.subr.mxu0 0.0
  %1899 = vmatpush1.msra.mxu0 0.0
  %1900 = vmatprep.subr.mxu0 0.0
  %1901 = vmatpush1.msra.mxu0 0.0
  %1902 = vmatprep.subr.mxu0 0.0
  %1903 = vmatpush1.msra.mxu0 0.0
  %1904 = vmatprep.subr.mxu0 0.0
  %1905 = vmatpush1.msra.mxu0 0.0
  %1906 = vmatprep.subr.mxu0 0.0
  %1907 = vmatpush1.msra.mxu0 0.0
  %1908 = vmatprep.subr.mxu0 0.0
  %1909 = vmatpush1.msra.mxu0 0.0
  %1910 = vmatprep.subr.mxu0 0.0
  %1911 = vmatpush1.msra.mxu0 0.0
  %1912 = vmatprep.subr.mxu0 0.0
  %1913 = vmatpush1.msra.mxu0 0.0
  %1914 = vmatprep.subr.mxu0 0.0
  %1915 = vmatpush1.msra.mxu0 0.0
  %1916 = vmatprep.subr.mxu0 0.0
  %1917 = vmatpush1.msra.mxu0 0.0
  %1918 = vmatprep.subr.mxu0 0.0
  %1919 = vmatpush1.msra.mxu0 0.0
  %1920 = vmatprep.subr.mxu0 0.0
  %1921 = vmatpush1.msra.mxu0 0.0
  %1922 = vmatprep.subr.mxu0 0.0
  %1923 = vmatpush1.msra.mxu0 0.0
  %1924 = vmatprep.subr.mxu0 0.0
  %1925 = vmatpush1.msra.mxu0 0.0
  %1926 = vmatprep.subr.mxu0 0.0
  %1927 = vmatpush1.msra.mxu0 0.0
  %1928 = vmatprep.subr.mxu0 0.0
  %1929 = vmatpush1.msra.mxu0 0.0
  %1930 = vmatprep.subr.mxu0 0.0
  %1931 = vmatpush1.msra.mxu0 0.0
  %1932 = vmatprep.subr.mxu0 0.0
  %1933 = vmatpush1.msra.mxu0 0.0
  %1934 = vmatprep.subr.mxu0 0.0
  %1935 = vmatpush1.msra.mxu0 0.0
  %1936 = vmatprep.subr.mxu0 0.0
  %1937 = vmatpush1.msra.mxu0 0.0
  %1938 = vmatprep.subr.mxu0 0.0
  %1939 = vmatpush1.msra.mxu0 0.0
  %1940 = vmatprep.subr.mxu0 0.0
  %1941 = vmatpush1.msra.mxu0 0.0
  %1942 = vmatprep.subr.mxu0 0.0
  %1943 = vmatpush1.msra.mxu0 0.0
  %1944 = vmatprep.subr.mxu0 0.0
  %1945 = vmatpush1.msra.mxu0 0.0
  %1946 = vmatprep.subr.mxu0 0.0
  %1947 = vmatpush1.msra.mxu0 0.0
  %1948 = vmatprep.subr.mxu0 0.0
  %1949 = vmatpush1.msra.mxu0 0.0
  %1950 = vmatprep.subr.mxu0 0.0
  %1951 = vmatpush1.msra.mxu0 0.0
  %1952 = vmatprep.subr.mxu0 0.0
  %1953 = vmatpush1.msra.mxu0 0.0
  %1954 = vmatprep.subr.mxu0 0.0
  %1955 = vmatpush1.msra.mxu0 0.0
  %1956 = vmatprep.subr.mxu0 0.0
  %1957 = vmatpush1.msra.mxu0 0.0
  %1958 = vmatprep.mubr.f32.mxu0 0.0
  %1959 = vmatmul.mubr.f32.gmra.mrb[0].mxu0 %v1892
  %v1960 = vpop.f32.mrb[0].mxu0
  %v1961 = vadd.f32 0.0, %v1960
  %v1962 = vpop.f32.mrb[0].mxu0
  %v1963 = vadd.f32 0.0, %v1962
  %1964 = vdwg.mxu0
  %1965 = vmatprep.subr.mxu0 %v1883
  %1966 = vmatpush1.msra.mxu0 %v1886
  %1967 = vmatprep.subr.mxu0 0.0
  %1968 = vmatpush1.msra.mxu0 0.0
  %1969 = vmatprep.subr.mxu0 0.0
  %1970 = vmatpush1.msra.mxu0 0.0
  %1971 = vmatprep.subr.mxu0 0.0
  %1972 = vmatpush1.msra.mxu0 0.0
  %1973 = vmatprep.subr.mxu0 0.0
  %1974 = vmatpush1.msra.mxu0 0.0
  %1975 = vmatprep.subr.mxu0 0.0
  %1976 = vmatpush1.msra.mxu0 0.0
  %1977 = vmatprep.subr.mxu0 0.0
  %1978 = vmatpush1.msra.mxu0 0.0
  %1979 = vmatprep.subr.mxu0 0.0
  %1980 = vmatpush1.msra.mxu0 0.0
  %1981 = vmatprep.subr.mxu0 0.0
  %1982 = vmatpush1.msra.mxu0 0.0
  %1983 = vmatprep.subr.mxu0 0.0
  %1984 = vmatpush1.msra.mxu0 0.0
  %1985 = vmatprep.subr.mxu0 0.0
  %1986 = vmatpush1.msra.mxu0 0.0
  %1987 = vmatprep.subr.mxu0 0.0
  %1988 = vmatpush1.msra.mxu0 0.0
  %1989 = vmatprep.subr.mxu0 0.0
  %1990 = vmatpush1.msra.mxu0 0.0
  %1991 = vmatprep.subr.mxu0 0.0
  %1992 = vmatpush1.msra.mxu0 0.0
  %1993 = vmatprep.subr.mxu0 0.0
  %1994 = vmatpush1.msra.mxu0 0.0
  %1995 = vmatprep.subr.mxu0 0.0
  %1996 = vmatpush1.msra.mxu0 0.0
  %1997 = vmatprep.subr.mxu0 0.0
  %1998 = vmatpush1.msra.mxu0 0.0
  %1999 = vmatprep.subr.mxu0 0.0
  %2000 = vmatpush1.msra.mxu0 0.0
  %2001 = vmatprep.subr.mxu0 0.0
  %2002 = vmatpush1.msra.mxu0 0.0
  %2003 = vmatprep.subr.mxu0 0.0
  %2004 = vmatpush1.msra.mxu0 0.0
  %2005 = vmatprep.subr.mxu0 0.0
  %2006 = vmatpush1.msra.mxu0 0.0
  %2007 = vmatprep.subr.mxu0 0.0
  %2008 = vmatpush1.msra.mxu0 0.0
  %2009 = vmatprep.subr.mxu0 0.0
  %2010 = vmatpush1.msra.mxu0 0.0
  %2011 = vmatprep.subr.mxu0 0.0
  %2012 = vmatpush1.msra.mxu0 0.0
  %2013 = vmatprep.subr.mxu0 0.0
  %2014 = vmatpush1.msra.mxu0 0.0
  %2015 = vmatprep.subr.mxu0 0.0
  %2016 = vmatpush1.msra.mxu0 0.0
  %2017 = vmatprep.subr.mxu0 0.0
  %2018 = vmatpush1.msra.mxu0 0.0
  %2019 = vmatprep.subr.mxu0 0.0
  %2020 = vmatpush1.msra.mxu0 0.0
  %2021 = vmatprep.subr.mxu0 0.0
  %2022 = vmatpush1.msra.mxu0 0.0
  %2023 = vmatprep.subr.mxu0 0.0
  %2024 = vmatpush1.msra.mxu0 0.0
  %2025 = vmatprep.subr.mxu0 0.0
  %2026 = vmatpush1.msra.mxu0 0.0
  %2027 = vmatprep.subr.mxu0 0.0
  %2028 = vmatpush1.msra.mxu0 0.0
  %2029 = vmatprep.mubr.f32.mxu0 0.0
  %2030 = vmatmul.mubr.f32.gmra.mrb[0].mxu0 %v1892
  %v2031 = vpop.f32.mrb[0].mxu0
  %v2032 = vadd.f32 0.0, %v2031
  %v2033 = vpop.f32.mrb[0].mxu0
  %v2034 = vadd.f32 0.0, %v2033
  %2035 = vdwg.mxu0
  %v2036 = vadd.f32 %v1799, %v1961
  %v2037 = vadd.f32 %v1801, %v1963
  %v2038 = vadd.f32 %v1870, %v2032
  %v2039 = vadd.f32 %v1872, %v2034
  %s2040 = scalar_lea.vmem %s3, 24
  %v2041 = vld [vmem:[%s2040] sm:$0xff]
  %2042 = vrot.lane.b32.xlu0 %v1557, 112
  %v2043 = vpop.permute.xlu0 %2042
  %2044 = vrot.lane.b32.xlu0 %v1558, 112
  %v2045 = vpop.permute.xlu0 %2044
  %2046 = vrot.lane.b32.xlu0 %v1559, 112
  %v2047 = vpop.permute.xlu0 %2046
  %2048 = vrot.lane.b32.xlu0 %v1560, 112
  %v2049 = vpop.permute.xlu0 %2048
  %v2050 = vsel %vm531, %v2043, %v2045
  %v2051 = vsel %vm531, %v2045, %v2047
  %v2052 = vsel %vm531, %v2047, %v2049
  %v2058 = vsel %vm1583, %v2041, 0
  %2060 = vmatprep.subr.mxu0 %v2051
  %2061 = vmatpush1.msra.mxu0 %v2050
  %2062 = vmatprep.subr.mxu0 0.0
  %2063 = vmatpush1.msra.mxu0 0.0
  %2064 = vmatprep.subr.mxu0 0.0
  %2065 = vmatpush1.msra.mxu0 0.0
  %2066 = vmatprep.subr.mxu0 0.0
  %2067 = vmatpush1.msra.mxu0 0.0
  %2068 = vmatprep.subr.mxu0 0.0
  %2069 = vmatpush1.msra.mxu0 0.0
  %2070 = vmatprep.subr.mxu0 0.0
  %2071 = vmatpush1.msra.mxu0 0.0
  %2072 = vmatprep.subr.mxu0 0.0
  %2073 = vmatpush1.msra.mxu0 0.0
  %2074 = vmatprep.subr.mxu0 0.0
  %2075 = vmatpush1.msra.mxu0 0.0
  %2076 = vmatprep.subr.mxu0 0.0
  %2077 = vmatpush1.msra.mxu0 0.0
  %2078 = vmatprep.subr.mxu0 0.0
  %2079 = vmatpush1.msra.mxu0 0.0
  %2080 = vmatprep.subr.mxu0 0.0
  %2081 = vmatpush1.msra.mxu0 0.0
  %2082 = vmatprep.subr.mxu0 0.0
  %2083 = vmatpush1.msra.mxu0 0.0
  %2084 = vmatprep.subr.mxu0 0.0
  %2085 = vmatpush1.msra.mxu0 0.0
  %2086 = vmatprep.subr.mxu0 0.0
  %2087 = vmatpush1.msra.mxu0 0.0
  %2088 = vmatprep.subr.mxu0 0.0
  %2089 = vmatpush1.msra.mxu0 0.0
  %2090 = vmatprep.subr.mxu0 0.0
  %2091 = vmatpush1.msra.mxu0 0.0
  %2092 = vmatprep.subr.mxu0 0.0
  %2093 = vmatpush1.msra.mxu0 0.0
  %2094 = vmatprep.subr.mxu0 0.0
  %2095 = vmatpush1.msra.mxu0 0.0
  %2096 = vmatprep.subr.mxu0 0.0
  %2097 = vmatpush1.msra.mxu0 0.0
  %2098 = vmatprep.subr.mxu0 0.0
  %2099 = vmatpush1.msra.mxu0 0.0
  %2100 = vmatprep.subr.mxu0 0.0
  %2101 = vmatpush1.msra.mxu0 0.0
  %2102 = vmatprep.subr.mxu0 0.0
  %2103 = vmatpush1.msra.mxu0 0.0
  %2104 = vmatprep.subr.mxu0 0.0
  %2105 = vmatpush1.msra.mxu0 0.0
  %2106 = vmatprep.subr.mxu0 0.0
  %2107 = vmatpush1.msra.mxu0 0.0
  %2108 = vmatprep.subr.mxu0 0.0
  %2109 = vmatpush1.msra.mxu0 0.0
  %2110 = vmatprep.subr.mxu0 0.0
  %2111 = vmatpush1.msra.mxu0 0.0
  %2112 = vmatprep.subr.mxu0 0.0
  %2113 = vmatpush1.msra.mxu0 0.0
  %2114 = vmatprep.subr.mxu0 0.0
  %2115 = vmatpush1.msra.mxu0 0.0
  %2116 = vmatprep.subr.mxu0 0.0
  %2117 = vmatpush1.msra.mxu0 0.0
  %2118 = vmatprep.subr.mxu0 0.0
  %2119 = vmatpush1.msra.mxu0 0.0
  %2120 = vmatprep.subr.mxu0 0.0
  %2121 = vmatpush1.msra.mxu0 0.0
  %2122 = vmatprep.subr.mxu0 0.0
  %2123 = vmatpush1.msra.mxu0 0.0
  %2124 = vmatprep.mubr.f32.mxu0 0.0
  %2125 = vmatmul.mubr.f32.gmra.mrb[0].mxu0 %v2058
  %v2126 = vpop.f32.mrb[0].mxu0
  %v2127 = vadd.f32 0.0, %v2126
  %v2128 = vpop.f32.mrb[0].mxu0
  %v2129 = vadd.f32 0.0, %v2128
  %2130 = vdwg.mxu0
  %2131 = vmatprep.subr.mxu0 %v2049
  %2132 = vmatpush1.msra.mxu0 %v2052
  %2133 = vmatprep.subr.mxu0 0.0
  %2134 = vmatpush1.msra.mxu0 0.0
  %2135 = vmatprep.subr.mxu0 0.0
  %2136 = vmatpush1.msra.mxu0 0.0
  %2137 = vmatprep.subr.mxu0 0.0
  %2138 = vmatpush1.msra.mxu0 0.0
  %2139 = vmatprep.subr.mxu0 0.0
  %2140 = vmatpush1.msra.mxu0 0.0
  %2141 = vmatprep.subr.mxu0 0.0
  %2142 = vmatpush1.msra.mxu0 0.0
  %2143 = vmatprep.subr.mxu0 0.0
  %2144 = vmatpush1.msra.mxu0 0.0
  %2145 = vmatprep.subr.mxu0 0.0
  %2146 = vmatpush1.msra.mxu0 0.0
  %2147 = vmatprep.subr.mxu0 0.0
  %2148 = vmatpush1.msra.mxu0 0.0
  %2149 = vmatprep.subr.mxu0 0.0
  %2150 = vmatpush1.msra.mxu0 0.0
  %2151 = vmatprep.subr.mxu0 0.0
  %2152 = vmatpush1.msra.mxu0 0.0
  %2153 = vmatprep.subr.mxu0 0.0
  %2154 = vmatpush1.msra.mxu0 0.0
  %2155 = vmatprep.subr.mxu0 0.0
  %2156 = vmatpush1.msra.mxu0 0.0
  %2157 = vmatprep.subr.mxu0 0.0
  %2158 = vmatpush1.msra.mxu0 0.0
  %2159 = vmatprep.subr.mxu0 0.0
  %2160 = vmatpush1.msra.mxu0 0.0
  %2161 = vmatprep.subr.mxu0 0.0
  %2162 = vmatpush1.msra.mxu0 0.0
  %2163 = vmatprep.subr.mxu0 0.0
  %2164 = vmatpush1.msra.mxu0 0.0
  %2165 = vmatprep.subr.mxu0 0.0
  %2166 = vmatpush1.msra.mxu0 0.0
  %2167 = vmatprep.subr.mxu0 0.0
  %2168 = vmatpush1.msra.mxu0 0.0
  %2169 = vmatprep.subr.mxu0 0.0
  %2170 = vmatpush1.msra.mxu0 0.0
  %2171 = vmatprep.subr.mxu0 0.0
  %2172 = vmatpush1.msra.mxu0 0.0
  %2173 = vmatprep.subr.mxu0 0.0
  %2174 = vmatpush1.msra.mxu0 0.0
  %2175 = vmatprep.subr.mxu0 0.0
  %2176 = vmatpush1.msra.mxu0 0.0
  %2177 = vmatprep.subr.mxu0 0.0
  %2178 = vmatpush1.msra.mxu0 0.0
  %2179 = vmatprep.subr.mxu0 0.0
  %2180 = vmatpush1.msra.mxu0 0.0
  %2181 = vmatprep.subr.mxu0 0.0
  %2182 = vmatpush1.msra.mxu0 0.0
  %2183 = vmatprep.subr.mxu0 0.0
  %2184 = vmatpush1.msra.mxu0 0.0
  %2185 = vmatprep.subr.mxu0 0.0
  %2186 = vmatpush1.msra.mxu0 0.0
  %2187 = vmatprep.subr.mxu0 0.0
  %2188 = vmatpush1.msra.mxu0 0.0
  %2189 = vmatprep.subr.mxu0 0.0
  %2190 = vmatpush1.msra.mxu0 0.0
  %2191 = vmatprep.subr.mxu0 0.0
  %2192 = vmatpush1.msra.mxu0 0.0
  %2193 = vmatprep.subr.mxu0 0.0
  %2194 = vmatpush1.msra.mxu0 0.0
  %2195 = vmatprep.mubr.f32.mxu0 0.0
  %2196 = vmatmul.mubr.f32.gmra.mrb[0].mxu0 %v2058
  %v2197 = vpop.f32.mrb[0].mxu0
  %v2198 = vadd.f32 0.0, %v2197
  %v2199 = vpop.f32.mrb[0].mxu0
  %v2200 = vadd.f32 0.0, %v2199
  %2201 = vdwg.mxu0
  %v2202 = vadd.f32 %v2036, %v2127
  %v2203 = vadd.f32 %v2037, %v2129
  %v2204 = vadd.f32 %v2038, %v2198
  %v2205 = vadd.f32 %v2039, %v2200
  %s2206 = scalar_lea.vmem %s3, 32
  %v2207 = vld [vmem:[%s2206] sm:$0xff]
  %2208 = vrot.lane.b32.xlu0 %v1557, 111
  %v2209 = vpop.permute.xlu0 %2208
  %2210 = vrot.lane.b32.xlu0 %v1558, 111
  %v2211 = vpop.permute.xlu0 %2210
  %2212 = vrot.lane.b32.xlu0 %v1559, 111
  %v2213 = vpop.permute.xlu0 %2212
  %2214 = vrot.lane.b32.xlu0 %v1560, 111
  %v2215 = vpop.permute.xlu0 %2214
  %v2216 = vsel %vm702, %v2209, %v2211
  %v2217 = vsel %vm702, %v2211, %v2213
  %v2218 = vsel %vm702, %v2213, %v2215
  %v2224 = vsel %vm1583, %v2207, 0
  %2226 = vmatprep.subr.mxu0 %v2217
  %2227 = vmatpush1.msra.mxu0 %v2216
  %2228 = vmatprep.subr.mxu0 0.0
  %2229 = vmatpush1.msra.mxu0 0.0
  %2230 = vmatprep.subr.mxu0 0.0
  %2231 = vmatpush1.msra.mxu0 0.0
  %2232 = vmatprep.subr.mxu0 0.0
  %2233 = vmatpush1.msra.mxu0 0.0
  %2234 = vmatprep.subr.mxu0 0.0
  %2235 = vmatpush1.msra.mxu0 0.0
  %2236 = vmatprep.subr.mxu0 0.0
  %2237 = vmatpush1.msra.mxu0 0.0
  %2238 = vmatprep.subr.mxu0 0.0
  %2239 = vmatpush1.msra.mxu0 0.0
  %2240 = vmatprep.subr.mxu0 0.0
  %2241 = vmatpush1.msra.mxu0 0.0
  %2242 = vmatprep.subr.mxu0 0.0
  %2243 = vmatpush1.msra.mxu0 0.0
  %2244 = vmatprep.subr.mxu0 0.0
  %2245 = vmatpush1.msra.mxu0 0.0
  %2246 = vmatprep.subr.mxu0 0.0
  %2247 = vmatpush1.msra.mxu0 0.0
  %2248 = vmatprep.subr.mxu0 0.0
  %2249 = vmatpush1.msra.mxu0 0.0
  %2250 = vmatprep.subr.mxu0 0.0
  %2251 = vmatpush1.msra.mxu0 0.0
  %2252 = vmatprep.subr.mxu0 0.0
  %2253 = vmatpush1.msra.mxu0 0.0
  %2254 = vmatprep.subr.mxu0 0.0
  %2255 = vmatpush1.msra.mxu0 0.0
  %2256 = vmatprep.subr.mxu0 0.0
  %2257 = vmatpush1.msra.mxu0 0.0
  %2258 = vmatprep.subr.mxu0 0.0
  %2259 = vmatpush1.msra.mxu0 0.0
  %2260 = vmatprep.subr.mxu0 0.0
  %2261 = vmatpush1.msra.mxu0 0.0
  %2262 = vmatprep.subr.mxu0 0.0
  %2263 = vmatpush1.msra.mxu0 0.0
  %2264 = vmatprep.subr.mxu0 0.0
  %2265 = vmatpush1.msra.mxu0 0.0
  %2266 = vmatprep.subr.mxu0 0.0
  %2267 = vmatpush1.msra.mxu0 0.0
  %2268 = vmatprep.subr.mxu0 0.0
  %2269 = vmatpush1.msra.mxu0 0.0
  %2270 = vmatprep.subr.mxu0 0.0
  %2271 = vmatpush1.msra.mxu0 0.0
  %2272 = vmatprep.subr.mxu0 0.0
  %2273 = vmatpush1.msra.mxu0 0.0
  %2274 = vmatprep.subr.mxu0 0.0
  %2275 = vmatpush1.msra.mxu0 0.0
  %2276 = vmatprep.subr.mxu0 0.0
  %2277 = vmatpush1.msra.mxu0 0.0
  %2278 = vmatprep.subr.mxu0 0.0
  %2279 = vmatpush1.msra.mxu0 0.0
  %2280 = vmatprep.subr.mxu0 0.0
  %2281 = vmatpush1.msra.mxu0 0.0
  %2282 = vmatprep.subr.mxu0 0.0
  %2283 = vmatpush1.msra.mxu0 0.0
  %2284 = vmatprep.subr.mxu0 0.0
  %2285 = vmatpush1.msra.mxu0 0.0
  %2286 = vmatprep.subr.mxu0 0.0
  %2287 = vmatpush1.msra.mxu0 0.0
  %2288 = vmatprep.subr.mxu0 0.0
  %2289 = vmatpush1.msra.mxu0 0.0
  %2290 = vmatprep.mubr.f32.mxu0 0.0
  %2291 = vmatmul.mubr.f32.gmra.mrb[0].mxu0 %v2224
  %v2292 = vpop.f32.mrb[0].mxu0
  %v2293 = vadd.f32 0.0, %v2292
  %v2294 = vpop.f32.mrb[0].mxu0
  %v2295 = vadd.f32 0.0, %v2294
  %2296 = vdwg.mxu0
  %2297 = vmatprep.subr.mxu0 %v2215
  %2298 = vmatpush1.msra.mxu0 %v2218
  %2299 = vmatprep.subr.mxu0 0.0
  %2300 = vmatpush1.msra.mxu0 0.0
  %2301 = vmatprep.subr.mxu0 0.0
  %2302 = vmatpush1.msra.mxu0 0.0
  %2303 = vmatprep.subr.mxu0 0.0
  %2304 = vmatpush1.msra.mxu0 0.0
  %2305 = vmatprep.subr.mxu0 0.0
  %2306 = vmatpush1.msra.mxu0 0.0
  %2307 = vmatprep.subr.mxu0 0.0
  %2308 = vmatpush1.msra.mxu0 0.0
  %2309 = vmatprep.subr.mxu0 0.0
  %2310 = vmatpush1.msra.mxu0 0.0
  %2311 = vmatprep.subr.mxu0 0.0
  %2312 = vmatpush1.msra.mxu0 0.0
  %2313 = vmatprep.subr.mxu0 0.0
  %2314 = vmatpush1.msra.mxu0 0.0
  %2315 = vmatprep.subr.mxu0 0.0
  %2316 = vmatpush1.msra.mxu0 0.0
  %2317 = vmatprep.subr.mxu0 0.0
  %2318 = vmatpush1.msra.mxu0 0.0
  %2319 = vmatprep.subr.mxu0 0.0
  %2320 = vmatpush1.msra.mxu0 0.0
  %2321 = vmatprep.subr.mxu0 0.0
  %2322 = vmatpush1.msra.mxu0 0.0
  %2323 = vmatprep.subr.mxu0 0.0
  %2324 = vmatpush1.msra.mxu0 0.0
  %2325 = vmatprep.subr.mxu0 0.0
  %2326 = vmatpush1.msra.mxu0 0.0
  %2327 = vmatprep.subr.mxu0 0.0
  %2328 = vmatpush1.msra.mxu0 0.0
  %2329 = vmatprep.subr.mxu0 0.0
  %2330 = vmatpush1.msra.mxu0 0.0
  %2331 = vmatprep.subr.mxu0 0.0
  %2332 = vmatpush1.msra.mxu0 0.0
  %2333 = vmatprep.subr.mxu0 0.0
  %2334 = vmatpush1.msra.mxu0 0.0
  %2335 = vmatprep.subr.mxu0 0.0
  %2336 = vmatpush1.msra.mxu0 0.0
  %2337 = vmatprep.subr.mxu0 0.0
  %2338 = vmatpush1.msra.mxu0 0.0
  %2339 = vmatprep.subr.mxu0 0.0
  %2340 = vmatpush1.msra.mxu0 0.0
  %2341 = vmatprep.subr.mxu0 0.0
  %2342 = vmatpush1.msra.mxu0 0.0
  %2343 = vmatprep.subr.mxu0 0.0
  %2344 = vmatpush1.msra.mxu0 0.0
  %2345 = vmatprep.subr.mxu0 0.0
  %2346 = vmatpush1.msra.mxu0 0.0
  %2347 = vmatprep.subr.mxu0 0.0
  %2348 = vmatpush1.msra.mxu0 0.0
  %2349 = vmatprep.subr.mxu0 0.0
  %2350 = vmatpush1.msra.mxu0 0.0
  %2351 = vmatprep.subr.mxu0 0.0
  %2352 = vmatpush1.msra.mxu0 0.0
  %2353 = vmatprep.subr.mxu0 0.0
  %2354 = vmatpush1.msra.mxu0 0.0
  %2355 = vmatprep.subr.mxu0 0.0
  %2356 = vmatpush1.msra.mxu0 0.0
  %2357 = vmatprep.subr.mxu0 0.0
  %2358 = vmatpush1.msra.mxu0 0.0
  %2359 = vmatprep.subr.mxu0 0.0
  %2360 = vmatpush1.msra.mxu0 0.0
  %2361 = vmatprep.mubr.f32.mxu0 0.0
  %2362 = vmatmul.mubr.f32.gmra.mrb[0].mxu0 %v2224
  %v2363 = vpop.f32.mrb[0].mxu0
  %v2364 = vadd.f32 0.0, %v2363
  %v2365 = vpop.f32.mrb[0].mxu0
  %v2366 = vadd.f32 0.0, %v2365
  %2367 = vdwg.mxu0
  %v2368 = vadd.f32 %v2202, %v2293
  %v2369 = vadd.f32 %v2203, %v2295
  %v2370 = vadd.f32 %v2204, %v2364
  %v2371 = vadd.f32 %v2205, %v2366
  %s2372 = scalar_lea.vmem %s3, 40
  %v2373 = vld [vmem:[%s2372] sm:$0xff]
  %2374 = vrot.lane.b32.xlu0 %v1557, 110
  %v2375 = vpop.permute.xlu0 %2374
  %2376 = vrot.lane.b32.xlu0 %v1558, 110
  %v2377 = vpop.permute.xlu0 %2376
  %2378 = vrot.lane.b32.xlu0 %v1559, 110
  %v2379 = vpop.permute.xlu0 %2378
  %2380 = vrot.lane.b32.xlu0 %v1560, 110
  %v2381 = vpop.permute.xlu0 %2380
  %v2382 = vsel %vm873, %v2375, %v2377
  %v2383 = vsel %vm873, %v2377, %v2379
  %v2384 = vsel %vm873, %v2379, %v2381
  %v2390 = vsel %vm1583, %v2373, 0
  %2392 = vmatprep.subr.mxu0 %v2383
  %2393 = vmatpush1.msra.mxu0 %v2382
  %2394 = vmatprep.subr.mxu0 0.0
  %2395 = vmatpush1.msra.mxu0 0.0
  %2396 = vmatprep.subr.mxu0 0.0
  %2397 = vmatpush1.msra.mxu0 0.0
  %2398 = vmatprep.subr.mxu0 0.0
  %2399 = vmatpush1.msra.mxu0 0.0
  %2400 = vmatprep.subr.mxu0 0.0
  %2401 = vmatpush1.msra.mxu0 0.0
  %2402 = vmatprep.subr.mxu0 0.0
  %2403 = vmatpush1.msra.mxu0 0.0
  %2404 = vmatprep.subr.mxu0 0.0
  %2405 = vmatpush1.msra.mxu0 0.0
  %2406 = vmatprep.subr.mxu0 0.0
  %2407 = vmatpush1.msra.mxu0 0.0
  %2408 = vmatprep.subr.mxu0 0.0
  %2409 = vmatpush1.msra.mxu0 0.0
  %2410 = vmatprep.subr.mxu0 0.0
  %2411 = vmatpush1.msra.mxu0 0.0
  %2412 = vmatprep.subr.mxu0 0.0
  %2413 = vmatpush1.msra.mxu0 0.0
  %2414 = vmatprep.subr.mxu0 0.0
  %2415 = vmatpush1.msra.mxu0 0.0
  %2416 = vmatprep.subr.mxu0 0.0
  %2417 = vmatpush1.msra.mxu0 0.0
  %2418 = vmatprep.subr.mxu0 0.0
  %2419 = vmatpush1.msra.mxu0 0.0
  %2420 = vmatprep.subr.mxu0 0.0
  %2421 = vmatpush1.msra.mxu0 0.0
  %2422 = vmatprep.subr.mxu0 0.0
  %2423 = vmatpush1.msra.mxu0 0.0
  %2424 = vmatprep.subr.mxu0 0.0
  %2425 = vmatpush1.msra.mxu0 0.0
  %2426 = vmatprep.subr.mxu0 0.0
  %2427 = vmatpush1.msra.mxu0 0.0
  %2428 = vmatprep.subr.mxu0 0.0
  %2429 = vmatpush1.msra.mxu0 0.0
  %2430 = vmatprep.subr.mxu0 0.0
  %2431 = vmatpush1.msra.mxu0 0.0
  %2432 = vmatprep.subr.mxu0 0.0
  %2433 = vmatpush1.msra.mxu0 0.0
  %2434 = vmatprep.subr.mxu0 0.0
  %2435 = vmatpush1.msra.mxu0 0.0
  %2436 = vmatprep.subr.mxu0 0.0
  %2437 = vmatpush1.msra.mxu0 0.0
  %2438 = vmatprep.subr.mxu0 0.0
  %2439 = vmatpush1.msra.mxu0 0.0
  %2440 = vmatprep.subr.mxu0 0.0
  %2441 = vmatpush1.msra.mxu0 0.0
  %2442 = vmatprep.subr.mxu0 0.0
  %2443 = vmatpush1.msra.mxu0 0.0
  %2444 = vmatprep.subr.mxu0 0.0
  %2445 = vmatpush1.msra.mxu0 0.0
  %2446 = vmatprep.subr.mxu0 0.0
  %2447 = vmatpush1.msra.mxu0 0.0
  %2448 = vmatprep.subr.mxu0 0.0
  %2449 = vmatpush1.msra.mxu0 0.0
  %2450 = vmatprep.subr.mxu0 0.0
  %2451 = vmatpush1.msra.mxu0 0.0
  %2452 = vmatprep.subr.mxu0 0.0
  %2453 = vmatpush1.msra.mxu0 0.0
  %2454 = vmatprep.subr.mxu0 0.0
  %2455 = vmatpush1.msra.mxu0 0.0
  %2456 = vmatprep.mubr.f32.mxu0 0.0
  %2457 = vmatmul.mubr.f32.gmra.mrb[0].mxu0 %v2390
  %v2458 = vpop.f32.mrb[0].mxu0
  %v2459 = vadd.f32 0.0, %v2458
  %v2460 = vpop.f32.mrb[0].mxu0
  %v2461 = vadd.f32 0.0, %v2460
  %2462 = vdwg.mxu0
  %2463 = vmatprep.subr.mxu0 %v2381
  %2464 = vmatpush1.msra.mxu0 %v2384
  %2465 = vmatprep.subr.mxu0 0.0
  %2466 = vmatpush1.msra.mxu0 0.0
  %2467 = vmatprep.subr.mxu0 0.0
  %2468 = vmatpush1.msra.mxu0 0.0
  %2469 = vmatprep.subr.mxu0 0.0
  %2470 = vmatpush1.msra.mxu0 0.0
  %2471 = vmatprep.subr.mxu0 0.0
  %2472 = vmatpush1.msra.mxu0 0.0
  %2473 = vmatprep.subr.mxu0 0.0
  %2474 = vmatpush1.msra.mxu0 0.0
  %2475 = vmatprep.subr.mxu0 0.0
  %2476 = vmatpush1.msra.mxu0 0.0
  %2477 = vmatprep.subr.mxu0 0.0
  %2478 = vmatpush1.msra.mxu0 0.0
  %2479 = vmatprep.subr.mxu0 0.0
  %2480 = vmatpush1.msra.mxu0 0.0
  %2481 = vmatprep.subr.mxu0 0.0
  %2482 = vmatpush1.msra.mxu0 0.0
  %2483 = vmatprep.subr.mxu0 0.0
  %2484 = vmatpush1.msra.mxu0 0.0
  %2485 = vmatprep.subr.mxu0 0.0
  %2486 = vmatpush1.msra.mxu0 0.0
  %2487 = vmatprep.subr.mxu0 0.0
  %2488 = vmatpush1.msra.mxu0 0.0
  %2489 = vmatprep.subr.mxu0 0.0
  %2490 = vmatpush1.msra.mxu0 0.0
  %2491 = vmatprep.subr.mxu0 0.0
  %2492 = vmatpush1.msra.mxu0 0.0
  %2493 = vmatprep.subr.mxu0 0.0
  %2494 = vmatpush1.msra.mxu0 0.0
  %2495 = vmatprep.subr.mxu0 0.0
  %2496 = vmatpush1.msra.mxu0 0.0
  %2497 = vmatprep.subr.mxu0 0.0
  %2498 = vmatpush1.msra.mxu0 0.0
  %2499 = vmatprep.subr.mxu0 0.0
  %2500 = vmatpush1.msra.mxu0 0.0
  %2501 = vmatprep.subr.mxu0 0.0
  %2502 = vmatpush1.msra.mxu0 0.0
  %2503 = vmatprep.subr.mxu0 0.0
  %2504 = vmatpush1.msra.mxu0 0.0
  %2505 = vmatprep.subr.mxu0 0.0
  %2506 = vmatpush1.msra.mxu0 0.0
  %2507 = vmatprep.subr.mxu0 0.0
  %2508 = vmatpush1.msra.mxu0 0.0
  %2509 = vmatprep.subr.mxu0 0.0
  %2510 = vmatpush1.msra.mxu0 0.0
  %2511 = vmatprep.subr.mxu0 0.0
  %2512 = vmatpush1.msra.mxu0 0.0
  %2513 = vmatprep.subr.mxu0 0.0
  %2514 = vmatpush1.msra.mxu0 0.0
  %2515 = vmatprep.subr.mxu0 0.0
  %2516 = vmatpush1.msra.mxu0 0.0
  %2517 = vmatprep.subr.mxu0 0.0
  %2518 = vmatpush1.msra.mxu0 0.0
  %2519 = vmatprep.subr.mxu0 0.0
  %2520 = vmatpush1.msra.mxu0 0.0
  %2521 = vmatprep.subr.mxu0 0.0
  %2522 = vmatpush1.msra.mxu0 0.0
  %2523 = vmatprep.subr.mxu0 0.0
  %2524 = vmatpush1.msra.mxu0 0.0
  %2525 = vmatprep.subr.mxu0 0.0
  %2526 = vmatpush1.msra.mxu0 0.0
  %2527 = vmatprep.mubr.f32.mxu0 0.0
  %2528 = vmatmul.mubr.f32.gmra.mrb[0].mxu0 %v2390
  %v2529 = vpop.f32.mrb[0].mxu0
  %v2530 = vadd.f32 0.0, %v2529
  %v2531 = vpop.f32.mrb[0].mxu0
  %v2532 = vadd.f32 0.0, %v2531
  %2533 = vdwg.mxu0
  %v2534 = vadd.f32 %v2368, %v2459
  %v2535 = vadd.f32 %v2369, %v2461
  %v2536 = vadd.f32 %v2370, %v2530
  %v2537 = vadd.f32 %v2371, %v2532
  %s2538 = scalar_lea.vmem %s3, 48
  %v2539 = vld [vmem:[%s2538] sm:$0xff]
  %2540 = vrot.lane.b32.xlu0 %v1557, 96
  %v2541 = vpop.permute.xlu0 %2540
  %2542 = vrot.lane.b32.xlu0 %v1558, 96
  %v2543 = vpop.permute.xlu0 %2542
  %2544 = vrot.lane.b32.xlu0 %v1559, 96
  %v2545 = vpop.permute.xlu0 %2544
  %2546 = vrot.lane.b32.xlu0 %v1560, 96
  %v2547 = vpop.permute.xlu0 %2546
  %v2548 = vsel %vm1044, %v2541, %v2543
  %v2549 = vsel %vm1044, %v2543, %v2545
  %v2550 = vsel %vm1044, %v2545, %v2547
  %v2556 = vsel %vm1583, %v2539, 0
  %2558 = vmatprep.subr.mxu0 %v2549
  %2559 = vmatpush1.msra.mxu0 %v2548
  %2560 = vmatprep.subr.mxu0 0.0
  %2561 = vmatpush1.msra.mxu0 0.0
  %2562 = vmatprep.subr.mxu0 0.0
  %2563 = vmatpush1.msra.mxu0 0.0
  %2564 = vmatprep.subr.mxu0 0.0
  %2565 = vmatpush1.msra.mxu0 0.0
  %2566 = vmatprep.subr.mxu0 0.0
  %2567 = vmatpush1.msra.mxu0 0.0
  %2568 = vmatprep.subr.mxu0 0.0
  %2569 = vmatpush1.msra.mxu0 0.0
  %2570 = vmatprep.subr.mxu0 0.0
  %2571 = vmatpush1.msra.mxu0 0.0
  %2572 = vmatprep.subr.mxu0 0.0
  %2573 = vmatpush1.msra.mxu0 0.0
  %2574 = vmatprep.subr.mxu0 0.0
  %2575 = vmatpush1.msra.mxu0 0.0
  %2576 = vmatprep.subr.mxu0 0.0
  %2577 = vmatpush1.msra.mxu0 0.0
  %2578 = vmatprep.subr.mxu0 0.0
  %2579 = vmatpush1.msra.mxu0 0.0
  %2580 = vmatprep.subr.mxu0 0.0
  %2581 = vmatpush1.msra.mxu0 0.0
  %2582 = vmatprep.subr.mxu0 0.0
  %2583 = vmatpush1.msra.mxu0 0.0
  %2584 = vmatprep.subr.mxu0 0.0
  %2585 = vmatpush1.msra.mxu0 0.0
  %2586 = vmatprep.subr.mxu0 0.0
  %2587 = vmatpush1.msra.mxu0 0.0
  %2588 = vmatprep.subr.mxu0 0.0
  %2589 = vmatpush1.msra.mxu0 0.0
  %2590 = vmatprep.subr.mxu0 0.0
  %2591 = vmatpush1.msra.mxu0 0.0
  %2592 = vmatprep.subr.mxu0 0.0
  %2593 = vmatpush1.msra.mxu0 0.0
  %2594 = vmatprep.subr.mxu0 0.0
  %2595 = vmatpush1.msra.mxu0 0.0
  %2596 = vmatprep.subr.mxu0 0.0
  %2597 = vmatpush1.msra.mxu0 0.0
  %2598 = vmatprep.subr.mxu0 0.0
  %2599 = vmatpush1.msra.mxu0 0.0
  %2600 = vmatprep.subr.mxu0 0.0
  %2601 = vmatpush1.msra.mxu0 0.0
  %2602 = vmatprep.subr.mxu0 0.0
  %2603 = vmatpush1.msra.mxu0 0.0
  %2604 = vmatprep.subr.mxu0 0.0
  %2605 = vmatpush1.msra.mxu0 0.0
  %2606 = vmatprep.subr.mxu0 0.0
  %2607 = vmatpush1.msra.mxu0 0.0
  %2608 = vmatprep.subr.mxu0 0.0
  %2609 = vmatpush1.msra.mxu0 0.0
  %2610 = vmatprep.subr.mxu0 0.0
  %2611 = vmatpush1.msra.mxu0 0.0
  %2612 = vmatprep.subr.mxu0 0.0
  %2613 = vmatpush1.msra.mxu0 0.0
  %2614 = vmatprep.subr.mxu0 0.0
  %2615 = vmatpush1.msra.mxu0 0.0
  %2616 = vmatprep.subr.mxu0 0.0
  %2617 = vmatpush1.msra.mxu0 0.0
  %2618 = vmatprep.subr.mxu0 0.0
  %2619 = vmatpush1.msra.mxu0 0.0
  %2620 = vmatprep.subr.mxu0 0.0
  %2621 = vmatpush1.msra.mxu0 0.0
  %2622 = vmatprep.mubr.f32.mxu0 0.0
  %2623 = vmatmul.mubr.f32.gmra.mrb[0].mxu0 %v2556
  %v2624 = vpop.f32.mrb[0].mxu0
  %v2625 = vadd.f32 0.0, %v2624
  %v2626 = vpop.f32.mrb[0].mxu0
  %v2627 = vadd.f32 0.0, %v2626
  %2628 = vdwg.mxu0
  %2629 = vmatprep.subr.mxu0 %v2547
  %2630 = vmatpush1.msra.mxu0 %v2550
  %2631 = vmatprep.subr.mxu0 0.0
  %2632 = vmatpush1.msra.mxu0 0.0
  %2633 = vmatprep.subr.mxu0 0.0
  %2634 = vmatpush1.msra.mxu0 0.0
  %2635 = vmatprep.subr.mxu0 0.0
  %2636 = vmatpush1.msra.mxu0 0.0
  %2637 = vmatprep.subr.mxu0 0.0
  %2638 = vmatpush1.msra.mxu0 0.0
  %2639 = vmatprep.subr.mxu0 0.0
  %2640 = vmatpush1.msra.mxu0 0.0
  %2641 = vmatprep.subr.mxu0 0.0
  %2642 = vmatpush1.msra.mxu0 0.0
  %2643 = vmatprep.subr.mxu0 0.0
  %2644 = vmatpush1.msra.mxu0 0.0
  %2645 = vmatprep.subr.mxu0 0.0
  %2646 = vmatpush1.msra.mxu0 0.0
  %2647 = vmatprep.subr.mxu0 0.0
  %2648 = vmatpush1.msra.mxu0 0.0
  %2649 = vmatprep.subr.mxu0 0.0
  %2650 = vmatpush1.msra.mxu0 0.0
  %2651 = vmatprep.subr.mxu0 0.0
  %2652 = vmatpush1.msra.mxu0 0.0
  %2653 = vmatprep.subr.mxu0 0.0
  %2654 = vmatpush1.msra.mxu0 0.0
  %2655 = vmatprep.subr.mxu0 0.0
  %2656 = vmatpush1.msra.mxu0 0.0
  %2657 = vmatprep.subr.mxu0 0.0
  %2658 = vmatpush1.msra.mxu0 0.0
  %2659 = vmatprep.subr.mxu0 0.0
  %2660 = vmatpush1.msra.mxu0 0.0
  %2661 = vmatprep.subr.mxu0 0.0
  %2662 = vmatpush1.msra.mxu0 0.0
  %2663 = vmatprep.subr.mxu0 0.0
  %2664 = vmatpush1.msra.mxu0 0.0
  %2665 = vmatprep.subr.mxu0 0.0
  %2666 = vmatpush1.msra.mxu0 0.0
  %2667 = vmatprep.subr.mxu0 0.0
  %2668 = vmatpush1.msra.mxu0 0.0
  %2669 = vmatprep.subr.mxu0 0.0
  %2670 = vmatpush1.msra.mxu0 0.0
  %2671 = vmatprep.subr.mxu0 0.0
  %2672 = vmatpush1.msra.mxu0 0.0
  %2673 = vmatprep.subr.mxu0 0.0
  %2674 = vmatpush1.msra.mxu0 0.0
  %2675 = vmatprep.subr.mxu0 0.0
  %2676 = vmatpush1.msra.mxu0 0.0
  %2677 = vmatprep.subr.mxu0 0.0
  %2678 = vmatpush1.msra.mxu0 0.0
  %2679 = vmatprep.subr.mxu0 0.0
  %2680 = vmatpush1.msra.mxu0 0.0
  %2681 = vmatprep.subr.mxu0 0.0
  %2682 = vmatpush1.msra.mxu0 0.0
  %2683 = vmatprep.subr.mxu0 0.0
  %2684 = vmatpush1.msra.mxu0 0.0
  %2685 = vmatprep.subr.mxu0 0.0
  %2686 = vmatpush1.msra.mxu0 0.0
  %2687 = vmatprep.subr.mxu0 0.0
  %2688 = vmatpush1.msra.mxu0 0.0
  %2689 = vmatprep.subr.mxu0 0.0
  %2690 = vmatpush1.msra.mxu0 0.0
  %2691 = vmatprep.subr.mxu0 0.0
  %2692 = vmatpush1.msra.mxu0 0.0
  %2693 = vmatprep.mubr.f32.mxu0 0.0
  %2694 = vmatmul.mubr.f32.gmra.mrb[0].mxu0 %v2556
  %v2695 = vpop.f32.mrb[0].mxu0
  %v2696 = vadd.f32 0.0, %v2695
  %v2697 = vpop.f32.mrb[0].mxu0
  %v2698 = vadd.f32 0.0, %v2697
  %2699 = vdwg.mxu0
  %v2700 = vadd.f32 %v2534, %v2625
  %v2701 = vadd.f32 %v2535, %v2627
  %v2702 = vadd.f32 %v2536, %v2696
  %v2703 = vadd.f32 %v2537, %v2698
  %s2704 = scalar_lea.vmem %s3, 56
  %v2705 = vld [vmem:[%s2704] sm:$0xff]
  %2706 = vrot.lane.b32.xlu0 %v1557, 95
  %v2707 = vpop.permute.xlu0 %2706
  %2708 = vrot.lane.b32.xlu0 %v1558, 95
  %v2709 = vpop.permute.xlu0 %2708
  %2710 = vrot.lane.b32.xlu0 %v1559, 95
  %v2711 = vpop.permute.xlu0 %2710
  %2712 = vrot.lane.b32.xlu0 %v1560, 95
  %v2713 = vpop.permute.xlu0 %2712
  %v2714 = vsel %vm1215, %v2707, %v2709
  %v2715 = vsel %vm1215, %v2709, %v2711
  %v2716 = vsel %vm1215, %v2711, %v2713
  %v2722 = vsel %vm1583, %v2705, 0
  %2724 = vmatprep.subr.mxu0 %v2715
  %2725 = vmatpush1.msra.mxu0 %v2714
  %2726 = vmatprep.subr.mxu0 0.0
  %2727 = vmatpush1.msra.mxu0 0.0
  %2728 = vmatprep.subr.mxu0 0.0
  %2729 = vmatpush1.msra.mxu0 0.0
  %2730 = vmatprep.subr.mxu0 0.0
  %2731 = vmatpush1.msra.mxu0 0.0
  %2732 = vmatprep.subr.mxu0 0.0
  %2733 = vmatpush1.msra.mxu0 0.0
  %2734 = vmatprep.subr.mxu0 0.0
  %2735 = vmatpush1.msra.mxu0 0.0
  %2736 = vmatprep.subr.mxu0 0.0
  %2737 = vmatpush1.msra.mxu0 0.0
  %2738 = vmatprep.subr.mxu0 0.0
  %2739 = vmatpush1.msra.mxu0 0.0
  %2740 = vmatprep.subr.mxu0 0.0
  %2741 = vmatpush1.msra.mxu0 0.0
  %2742 = vmatprep.subr.mxu0 0.0
  %2743 = vmatpush1.msra.mxu0 0.0
  %2744 = vmatprep.subr.mxu0 0.0
  %2745 = vmatpush1.msra.mxu0 0.0
  %2746 = vmatprep.subr.mxu0 0.0
  %2747 = vmatpush1.msra.mxu0 0.0
  %2748 = vmatprep.subr.mxu0 0.0
  %2749 = vmatpush1.msra.mxu0 0.0
  %2750 = vmatprep.subr.mxu0 0.0
  %2751 = vmatpush1.msra.mxu0 0.0
  %2752 = vmatprep.subr.mxu0 0.0
  %2753 = vmatpush1.msra.mxu0 0.0
  %2754 = vmatprep.subr.mxu0 0.0
  %2755 = vmatpush1.msra.mxu0 0.0
  %2756 = vmatprep.subr.mxu0 0.0
  %2757 = vmatpush1.msra.mxu0 0.0
  %2758 = vmatprep.subr.mxu0 0.0
  %2759 = vmatpush1.msra.mxu0 0.0
  %2760 = vmatprep.subr.mxu0 0.0
  %2761 = vmatpush1.msra.mxu0 0.0
  %2762 = vmatprep.subr.mxu0 0.0
  %2763 = vmatpush1.msra.mxu0 0.0
  %2764 = vmatprep.subr.mxu0 0.0
  %2765 = vmatpush1.msra.mxu0 0.0
  %2766 = vmatprep.subr.mxu0 0.0
  %2767 = vmatpush1.msra.mxu0 0.0
  %2768 = vmatprep.subr.mxu0 0.0
  %2769 = vmatpush1.msra.mxu0 0.0
  %2770 = vmatprep.subr.mxu0 0.0
  %2771 = vmatpush1.msra.mxu0 0.0
  %2772 = vmatprep.subr.mxu0 0.0
  %2773 = vmatpush1.msra.mxu0 0.0
  %2774 = vmatprep.subr.mxu0 0.0
  %2775 = vmatpush1.msra.mxu0 0.0
  %2776 = vmatprep.subr.mxu0 0.0
  %2777 = vmatpush1.msra.mxu0 0.0
  %2778 = vmatprep.subr.mxu0 0.0
  %2779 = vmatpush1.msra.mxu0 0.0
  %2780 = vmatprep.subr.mxu0 0.0
  %2781 = vmatpush1.msra.mxu0 0.0
  %2782 = vmatprep.subr.mxu0 0.0
  %2783 = vmatpush1.msra.mxu0 0.0
  %2784 = vmatprep.subr.mxu0 0.0
  %2785 = vmatpush1.msra.mxu0 0.0
  %2786 = vmatprep.subr.mxu0 0.0
  %2787 = vmatpush1.msra.mxu0 0.0
  %2788 = vmatprep.mubr.f32.mxu0 0.0
  %2789 = vmatmul.mubr.f32.gmra.mrb[0].mxu0 %v2722
  %v2790 = vpop.f32.mrb[0].mxu0
  %v2791 = vadd.f32 0.0, %v2790
  %v2792 = vpop.f32.mrb[0].mxu0
  %v2793 = vadd.f32 0.0, %v2792
  %2794 = vdwg.mxu0
  %2795 = vmatprep.subr.mxu0 %v2713
  %2796 = vmatpush1.msra.mxu0 %v2716
  %2797 = vmatprep.subr.mxu0 0.0
  %2798 = vmatpush1.msra.mxu0 0.0
  %2799 = vmatprep.subr.mxu0 0.0
  %2800 = vmatpush1.msra.mxu0 0.0
  %2801 = vmatprep.subr.mxu0 0.0
  %2802 = vmatpush1.msra.mxu0 0.0
  %2803 = vmatprep.subr.mxu0 0.0
  %2804 = vmatpush1.msra.mxu0 0.0
  %2805 = vmatprep.subr.mxu0 0.0
  %2806 = vmatpush1.msra.mxu0 0.0
  %2807 = vmatprep.subr.mxu0 0.0
  %2808 = vmatpush1.msra.mxu0 0.0
  %2809 = vmatprep.subr.mxu0 0.0
  %2810 = vmatpush1.msra.mxu0 0.0
  %2811 = vmatprep.subr.mxu0 0.0
  %2812 = vmatpush1.msra.mxu0 0.0
  %2813 = vmatprep.subr.mxu0 0.0
  %2814 = vmatpush1.msra.mxu0 0.0
  %2815 = vmatprep.subr.mxu0 0.0
  %2816 = vmatpush1.msra.mxu0 0.0
  %2817 = vmatprep.subr.mxu0 0.0
  %2818 = vmatpush1.msra.mxu0 0.0
  %2819 = vmatprep.subr.mxu0 0.0
  %2820 = vmatpush1.msra.mxu0 0.0
  %2821 = vmatprep.subr.mxu0 0.0
  %2822 = vmatpush1.msra.mxu0 0.0
  %2823 = vmatprep.subr.mxu0 0.0
  %2824 = vmatpush1.msra.mxu0 0.0
  %2825 = vmatprep.subr.mxu0 0.0
  %2826 = vmatpush1.msra.mxu0 0.0
  %2827 = vmatprep.subr.mxu0 0.0
  %2828 = vmatpush1.msra.mxu0 0.0
  %2829 = vmatprep.subr.mxu0 0.0
  %2830 = vmatpush1.msra.mxu0 0.0
  %2831 = vmatprep.subr.mxu0 0.0
  %2832 = vmatpush1.msra.mxu0 0.0
  %2833 = vmatprep.subr.mxu0 0.0
  %2834 = vmatpush1.msra.mxu0 0.0
  %2835 = vmatprep.subr.mxu0 0.0
  %2836 = vmatpush1.msra.mxu0 0.0
  %2837 = vmatprep.subr.mxu0 0.0
  %2838 = vmatpush1.msra.mxu0 0.0
  %2839 = vmatprep.subr.mxu0 0.0
  %2840 = vmatpush1.msra.mxu0 0.0
  %2841 = vmatprep.subr.mxu0 0.0
  %2842 = vmatpush1.msra.mxu0 0.0
  %2843 = vmatprep.subr.mxu0 0.0
  %2844 = vmatpush1.msra.mxu0 0.0
  %2845 = vmatprep.subr.mxu0 0.0
  %2846 = vmatpush1.msra.mxu0 0.0
  %2847 = vmatprep.subr.mxu0 0.0
  %2848 = vmatpush1.msra.mxu0 0.0
  %2849 = vmatprep.subr.mxu0 0.0
  %2850 = vmatpush1.msra.mxu0 0.0
  %2851 = vmatprep.subr.mxu0 0.0
  %2852 = vmatpush1.msra.mxu0 0.0
  %2853 = vmatprep.subr.mxu0 0.0
  %2854 = vmatpush1.msra.mxu0 0.0
  %2855 = vmatprep.subr.mxu0 0.0
  %2856 = vmatpush1.msra.mxu0 0.0
  %2857 = vmatprep.subr.mxu0 0.0
  %2858 = vmatpush1.msra.mxu0 0.0
  %2859 = vmatprep.mubr.f32.mxu0 0.0
  %2860 = vmatmul.mubr.f32.gmra.mrb[0].mxu0 %v2722
  %v2861 = vpop.f32.mrb[0].mxu0
  %v2862 = vadd.f32 0.0, %v2861
  %v2863 = vpop.f32.mrb[0].mxu0
  %v2864 = vadd.f32 0.0, %v2863
  %2865 = vdwg.mxu0
  %v2866 = vadd.f32 %v2700, %v2791
  %v2867 = vadd.f32 %v2701, %v2793
  %v2868 = vadd.f32 %v2702, %v2862
  %v2869 = vadd.f32 %v2703, %v2864
  %s2870 = scalar_lea.vmem %s3, 64
  %v2871 = vld [vmem:[%s2870] sm:$0xff]
  %2872 = vrot.lane.b32.xlu0 %v1557, 94
  %v2873 = vpop.permute.xlu0 %2872
  %2874 = vrot.lane.b32.xlu0 %v1558, 94
  %v2875 = vpop.permute.xlu0 %2874
  %2876 = vrot.lane.b32.xlu0 %v1559, 94
  %v2877 = vpop.permute.xlu0 %2876
  %2878 = vrot.lane.b32.xlu0 %v1560, 94
  %v2879 = vpop.permute.xlu0 %2878
  %v2880 = vsel %vm1386, %v2873, %v2875
  %v2881 = vsel %vm1386, %v2875, %v2877
  %v2882 = vsel %vm1386, %v2877, %v2879
  %v2888 = vsel %vm1583, %v2871, 0
  %2890 = vmatprep.subr.mxu0 %v2881
  %2891 = vmatpush1.msra.mxu0 %v2880
  %2892 = vmatprep.subr.mxu0 0.0
  %2893 = vmatpush1.msra.mxu0 0.0
  %2894 = vmatprep.subr.mxu0 0.0
  %2895 = vmatpush1.msra.mxu0 0.0
  %2896 = vmatprep.subr.mxu0 0.0
  %2897 = vmatpush1.msra.mxu0 0.0
  %2898 = vmatprep.subr.mxu0 0.0
  %2899 = vmatpush1.msra.mxu0 0.0
  %2900 = vmatprep.subr.mxu0 0.0
  %2901 = vmatpush1.msra.mxu0 0.0
  %2902 = vmatprep.subr.mxu0 0.0
  %2903 = vmatpush1.msra.mxu0 0.0
  %2904 = vmatprep.subr.mxu0 0.0
  %2905 = vmatpush1.msra.mxu0 0.0
  %2906 = vmatprep.subr.mxu0 0.0
  %2907 = vmatpush1.msra.mxu0 0.0
  %2908 = vmatprep.subr.mxu0 0.0
  %2909 = vmatpush1.msra.mxu0 0.0
  %2910 = vmatprep.subr.mxu0 0.0
  %2911 = vmatpush1.msra.mxu0 0.0
  %2912 = vmatprep.subr.mxu0 0.0
  %2913 = vmatpush1.msra.mxu0 0.0
  %2914 = vmatprep.subr.mxu0 0.0
  %2915 = vmatpush1.msra.mxu0 0.0
  %2916 = vmatprep.subr.mxu0 0.0
  %2917 = vmatpush1.msra.mxu0 0.0
  %2918 = vmatprep.subr.mxu0 0.0
  %2919 = vmatpush1.msra.mxu0 0.0
  %2920 = vmatprep.subr.mxu0 0.0
  %2921 = vmatpush1.msra.mxu0 0.0
  %2922 = vmatprep.subr.mxu0 0.0
  %2923 = vmatpush1.msra.mxu0 0.0
  %2924 = vmatprep.subr.mxu0 0.0
  %2925 = vmatpush1.msra.mxu0 0.0
  %2926 = vmatprep.subr.mxu0 0.0
  %2927 = vmatpush1.msra.mxu0 0.0
  %2928 = vmatprep.subr.mxu0 0.0
  %2929 = vmatpush1.msra.mxu0 0.0
  %2930 = vmatprep.subr.mxu0 0.0
  %2931 = vmatpush1.msra.mxu0 0.0
  %2932 = vmatprep.subr.mxu0 0.0
  %2933 = vmatpush1.msra.mxu0 0.0
  %2934 = vmatprep.subr.mxu0 0.0
  %2935 = vmatpush1.msra.mxu0 0.0
  %2936 = vmatprep.subr.mxu0 0.0
  %2937 = vmatpush1.msra.mxu0 0.0
  %2938 = vmatprep.subr.mxu0 0.0
  %2939 = vmatpush1.msra.mxu0 0.0
  %2940 = vmatprep.subr.mxu0 0.0
  %2941 = vmatpush1.msra.mxu0 0.0
  %2942 = vmatprep.subr.mxu0 0.0
  %2943 = vmatpush1.msra.mxu0 0.0
  %2944 = vmatprep.subr.mxu0 0.0
  %2945 = vmatpush1.msra.mxu0 0.0
  %2946 = vmatprep.subr.mxu0 0.0
  %2947 = vmatpush1.msra.mxu0 0.0
  %2948 = vmatprep.subr.mxu0 0.0
  %2949 = vmatpush1.msra.mxu0 0.0
  %2950 = vmatprep.subr.mxu0 0.0
  %2951 = vmatpush1.msra.mxu0 0.0
  %2952 = vmatprep.subr.mxu0 0.0
  %2953 = vmatpush1.msra.mxu0 0.0
  %2954 = vmatprep.mubr.f32.mxu0 0.0
  %2955 = vmatmul.mubr.f32.gmra.mrb[0].mxu0 %v2888
  %v2956 = vpop.f32.mrb[0].mxu0
  %v2957 = vadd.f32 0.0, %v2956
  %v2958 = vpop.f32.mrb[0].mxu0
  %v2959 = vadd.f32 0.0, %v2958
  %2960 = vdwg.mxu0
  %2961 = vmatprep.subr.mxu0 %v2879
  %2962 = vmatpush1.msra.mxu0 %v2882
  %2963 = vmatprep.subr.mxu0 0.0
  %2964 = vmatpush1.msra.mxu0 0.0
  %2965 = vmatprep.subr.mxu0 0.0
  %2966 = vmatpush1.msra.mxu0 0.0
  %2967 = vmatprep.subr.mxu0 0.0
  %2968 = vmatpush1.msra.mxu0 0.0
  %2969 = vmatprep.subr.mxu0 0.0
  %2970 = vmatpush1.msra.mxu0 0.0
  %2971 = vmatprep.subr.mxu0 0.0
  %2972 = vmatpush1.msra.mxu0 0.0
  %2973 = vmatprep.subr.mxu0 0.0
  %2974 = vmatpush1.msra.mxu0 0.0
  %2975 = vmatprep.subr.mxu0 0.0
  %2976 = vmatpush1.msra.mxu0 0.0
  %2977 = vmatprep.subr.mxu0 0.0
  %2978 = vmatpush1.msra.mxu0 0.0
  %2979 = vmatprep.subr.mxu0 0.0
  %2980 = vmatpush1.msra.mxu0 0.0
  %2981 = vmatprep.subr.mxu0 0.0
  %2982 = vmatpush1.msra.mxu0 0.0
  %2983 = vmatprep.subr.mxu0 0.0
  %2984 = vmatpush1.msra.mxu0 0.0
  %2985 = vmatprep.subr.mxu0 0.0
  %2986 = vmatpush1.msra.mxu0 0.0
  %2987 = vmatprep.subr.mxu0 0.0
  %2988 = vmatpush1.msra.mxu0 0.0
  %2989 = vmatprep.subr.mxu0 0.0
  %2990 = vmatpush1.msra.mxu0 0.0
  %2991 = vmatprep.subr.mxu0 0.0
  %2992 = vmatpush1.msra.mxu0 0.0
  %2993 = vmatprep.subr.mxu0 0.0
  %2994 = vmatpush1.msra.mxu0 0.0
  %2995 = vmatprep.subr.mxu0 0.0
  %2996 = vmatpush1.msra.mxu0 0.0
  %2997 = vmatprep.subr.mxu0 0.0
  %2998 = vmatpush1.msra.mxu0 0.0
  %2999 = vmatprep.subr.mxu0 0.0
  %3000 = vmatpush1.msra.mxu0 0.0
  %3001 = vmatprep.subr.mxu0 0.0
  %3002 = vmatpush1.msra.mxu0 0.0
  %3003 = vmatprep.subr.mxu0 0.0
  %3004 = vmatpush1.msra.mxu0 0.0
  %3005 = vmatprep.subr.mxu0 0.0
  %3006 = vmatpush1.msra.mxu0 0.0
  %3007 = vmatprep.subr.mxu0 0.0
  %3008 = vmatpush1.msra.mxu0 0.0
  %3009 = vmatprep.subr.mxu0 0.0
  %3010 = vmatpush1.msra.mxu0 0.0
  %3011 = vmatprep.subr.mxu0 0.0
  %3012 = vmatpush1.msra.mxu0 0.0
  %3013 = vmatprep.subr.mxu0 0.0
  %3014 = vmatpush1.msra.mxu0 0.0
  %3015 = vmatprep.subr.mxu0 0.0
  %3016 = vmatpush1.msra.mxu0 0.0
  %3017 = vmatprep.subr.mxu0 0.0
  %3018 = vmatpush1.msra.mxu0 0.0
  %3019 = vmatprep.subr.mxu0 0.0
  %3020 = vmatpush1.msra.mxu0 0.0
  %3021 = vmatprep.subr.mxu0 0.0
  %3022 = vmatpush1.msra.mxu0 0.0
  %3023 = vmatprep.subr.mxu0 0.0
  %3024 = vmatpush1.msra.mxu0 0.0
  %3025 = vmatprep.mubr.f32.mxu0 0.0
  %3026 = vmatmul.mubr.f32.gmra.mrb[0].mxu0 %v2888
  %v3027 = vpop.f32.mrb[0].mxu0
  %v3028 = vadd.f32 0.0, %v3027
  %v3029 = vpop.f32.mrb[0].mxu0
  %v3030 = vadd.f32 0.0, %v3029
  %3031 = vdwg.mxu0
  %v3032 = vadd.f32 %v2866, %v2957
  %v3033 = vadd.f32 %v2867, %v2959
  %v3034 = vadd.f32 %v2868, %v3028
  %v3035 = vadd.f32 %v2869, %v3030
  %v3036 = vld [vmem:[%s4] sm:$0xff]
  %3038 = vset.pattern.permute.xlu0 0
  %3039 = vperm.xlu0 %3038, %v3036
  %v3040 = vpop.permute.xlu0 %3039
  %v3042 = vadd.f32 %v3032, %v3040
  %v3043 = vadd.f32 %v3033, %v3040
  %v3044 = vadd.f32 %v3034, %v3040
  %v3045 = vadd.f32 %v3035, %v3040
  %v3046 = vmax.f32 %v3042, 0.0
  %v3047 = vmax.f32 %v3043, 0.0
  %v3048 = vmax.f32 %v3044, 0.0
  %v3049 = vmax.f32 %v3045, 0.0
  %3050 = vst [vmem:[%s5] sm:$0xff] 0.0
  %vm3051 = vcmask 523264
  %3052 = vst.msk [vmem:[%s5 + $0x8] sm:$0xff] %vm3051, 0.0
  %3053 = vst [vmem:[%s5 + $0x10] sm:$0xff] 0.0
  %3054 = vst.msk [vmem:[%s5 + $0x18] sm:$0xff] %vm3051, 0.0
  %3055 = vst [vmem:[%s5] sm:$0xff] %v3046
  %vm3056 = vcmask 490496
  %3057 = vst.msk [vmem:[%s5 + $0x8] sm:$0xff] %vm3056, %v3047
  %s3058 = scalar_lea.vmem %s5, 16
  %3059 = vst [vmem:[%s3058] sm:$0xff] %v3048
  %3060 = vst.msk [vmem:[%s3058 + $0x8] sm:$0xff] %vm3056, %v3049
  // Predicated region
  $region22: #{conv_block_forward.1} parent=0 // pred_check
    _
  $region23: #{conv_block_forward.1} parent=0 // pred_check_branch
    %3062 = sbr.rel (0) target = $region25
  $region24: #{conv_block_forward.1} parent=0 // pred_region
    _
  $region25: #{conv_block_forward.1} parent=0 // pred_fallthru
    _
  // Predicated region
  $region26: #{conv_block_forward.1} parent=0 // pred_check
    _
  $region27: #{conv_block_forward.1} parent=0 // pred_check_branch
    %3064 = sbr.rel (0) target = $region29
  $region28: #{conv_block_forward.1} parent=0 // pred_region
    _
  $region29: #{conv_block_forward.1} parent=0 // pred_fallthru
    _

</llo_original>
